<compile_context>
chip_gen: v6e
topology: v6e:2x2x1
jax: 0.10.0
libtpu: 0.0.40
codegen_flags: <defaults>
</compile_context>

<pallas_src>
import functools

import jax
import jax.numpy as jnp
import numpy as np
from jax.experimental import pallas as pl
from jax.experimental.pallas import tpu as pltpu

KSIZE = 7     # spatial-attention kernel size (CBAM default)
PAD = 3       # padding for kernel_size == 7


def _cbam_kernel(x_ref, fcw_ref, fcb_ref, wvec_ref, o_ref, pad_ref,
                 *, H, W, pad_side):
    HW = H * W
    x = x_ref[...].astype(jnp.float32)              # (bt, C, HW)
    bt = x.shape[0]

    # ---------------- Channel attention ----------------
    pooled = jnp.sum(x, axis=2) * (1.0 / HW)        # (bt, C) global avg pool
    y = jnp.dot(pooled, fcw_ref[...],
                preferred_element_type=jnp.float32) + fcb_ref[...]   # (bt, C)
    ca = jax.nn.sigmoid(y)
    xc = x * ca[:, :, None]                         # (bt, C, HW) lane-dense gate

    # ---------------- Spatial attention ----------------
    mean_c = jnp.mean(xc, axis=1)                   # (bt, HW) mean over channels
    max_c = jnp.max(xc, axis=1)                     # (bt, HW) max over channels

    # Flat, vertically zero-padded 2-channel feature buffer.  Only the border
    # slabs are (re)zeroed; the interior is one lane-dense store per channel.
    zeros_side = jnp.zeros((bt, 2, pad_side), jnp.float32)
    pad_ref[:, :, 0:pad_side] = zeros_side
    pad_ref[:, :, pad_side + HW:2 * pad_side + HW] = zeros_side
    pad_ref[:, 0, pad_side:pad_side + HW] = mean_c
    pad_ref[:, 1, pad_side:pad_side + HW] = max_c

    # 7x7 conv (2 in-ch -> 1 out-ch, no bias) as 98 shifted in-register slices
    # of the flat buffer.  Horizontal (W) edge validity is pre-folded into the
    # per-tap weight rows; vertical edge reads land in the zero slabs.
    acc = jnp.zeros((bt, HW), jnp.float32)
    for ic in range(2):
        fch = pad_ref[:, ic, :]                     # (bt, pad_len) aligned load
        for kh in range(KSIZE):
            dh = kh - PAD
            for kw in range(KSIZE):
                dw = kw - PAD
                s = pad_side + dh * W + dw
                tap = fch[:, s:s + HW]              # (bt, HW) static lane shift
                t = ic * KSIZE * KSIZE + kh * KSIZE + kw
                acc = acc + tap * wvec_ref[t:t + 1, :]   # (bt,HW) * (1,HW)

    sa = jax.nn.sigmoid(acc)                        # (bt, HW)
    o_ref[...] = (xc * sa[:, None, :]).astype(o_ref.dtype)


def cbam_pallas(x, fc_w, fc_b, conv_w, *, vmem_budget_bytes=12 * 1024 * 1024):
    """CBAM forward. x: (N, C, H, W); fc_w: (C, C); fc_b: (C,); conv_w: (1, 2, 7, 7)."""
    N, C, H, W = x.shape
    HW = H * W
    x_flat = x.reshape(N, C, HW)                    # free reshape (row-major)

    # Channel-FC params: transposed so the kernel does (bt, C) @ (C, C).
    fcw_t = jnp.asarray(fc_w, jnp.float32).T        # (C, C)
    fcb = jnp.asarray(fc_b, jnp.float32).reshape(1, C)

    # Pre-masked per-tap conv weights:
    #   wvec[t, h*W + w] = conv_w[0, ic, kh, kw] * [0 <= w + (kw-3) < W],
    #   t = ic*49 + kh*7 + kw.
    w_flat = jnp.asarray(conv_w, jnp.float32)[0].reshape(2 * KSIZE * KSIZE)
    col = jnp.arange(W)
    kw_off = jnp.arange(KSIZE) - PAD
    shifted = col[None, :] + kw_off[:, None]                       # (7, W)
    valid = ((shifted >= 0) & (shifted < W)).astype(jnp.float32)   # (7, W)
    valid_row = jnp.tile(valid, (1, H))                            # (7, HW)
    wvec = w_flat[:, None] * jnp.tile(valid_row, (2 * KSIZE, 1))   # (98, HW)

    # Flat padded-buffer geometry: zero slabs must cover the max tap shift
    # (3*W + 3); round to 128 lanes so the interior store stays aligned.
    pad_side = ((3 * W + 3 + 127) // 128) * 128
    pad_len = HW + 2 * pad_side

    # Batch elements per grid step: fill a conservative VMEM budget
    # (double-buffered in/out blocks + live values + scratch).
    ex_bytes = C * HW * 4
    per_ex = 6 * ex_bytes + 2 * pad_len * 4
    bt = int(max(1, min(N, vmem_budget_bytes // per_ex)))
    num_blocks = pl.cdiv(N, bt)

    fixed_bytes = 2 * (wvec.size * 4 + C * C * 4 + C * 4)
    vmem_limit = int(min(max(2 * (bt * per_ex + fixed_bytes), 32 * 1024 * 1024),
                         48 * 1024 * 1024))

    kernel = functools.partial(_cbam_kernel, H=H, W=W, pad_side=pad_side)

    out_flat = pl.pallas_call(
        kernel,
        out_shape=jax.ShapeDtypeStruct((N, C, HW), x.dtype),
        grid=(num_blocks,),
        in_specs=[
            pl.BlockSpec((bt, C, HW), lambda n: (n, 0, 0)),            # x (flat)
            pl.BlockSpec((C, C), lambda n: (0, 0)),                    # fc weight^T
            pl.BlockSpec((1, C), lambda n: (0, 0)),                    # fc bias
            pl.BlockSpec((2 * KSIZE * KSIZE, HW), lambda n: (0, 0)),   # masked taps
        ],
        out_specs=pl.BlockSpec((bt, C, HW), lambda n: (n, 0, 0)),
        scratch_shapes=[pltpu.VMEM((bt, 2, pad_len), jnp.float32)],
        compiler_params=pltpu.CompilerParams(
            dimension_semantics=("parallel",),
            vmem_limit_bytes=vmem_limit),
    )(x_flat, fcw_t, fcb, wvec)

    return out_flat.reshape(N, C, H, W)


def cbam_ref(x, fc_w, fc_b, conv_w):
    """Pure-JAX reference matching the PyTorch CBAM forward."""
    pooled = jnp.mean(x, axis=(2, 3), keepdims=True)                 # (N, C, 1, 1)
    y = jnp.einsum('ok,nkhw->nohw', fc_w, pooled,
                   precision=jax.lax.Precision.HIGHEST) + fc_b.reshape(1, -1, 1, 1)
    xc = x * jax.nn.sigmoid(y)
    feat = jnp.concatenate([jnp.mean(xc, axis=1, keepdims=True),
                            jnp.max(xc, axis=1, keepdims=True)], axis=1)
    sa = jax.lax.conv_general_dilated(
        feat, conv_w, (1, 1), [(PAD, PAD), (PAD, PAD)],
        dimension_numbers=('NCHW', 'OIHW', 'NCHW'),
        precision=jax.lax.Precision.HIGHEST)
    return xc * jax.nn.sigmoid(sa)


if __name__ == "__main__":
    N, C, H, W = 2, 4, 16, 16
    key = jax.random.PRNGKey(0)
    k1, k2, k3, k4 = jax.random.split(key, 4)
    # deterministic synthetic parameters (shapes from CBAM.__init__ with c1=C)
    fc_w = jax.random.normal(k1, (C, C), jnp.float32) * 0.3          # 1x1 conv weight
    fc_b = jax.random.normal(k2, (C,), jnp.float32) * 0.1            # 1x1 conv bias
    conv_w = jax.random.normal(k3, (1, 2, KSIZE, KSIZE), jnp.float32) * 0.2  # 7x7 conv
    x = jax.random.normal(k4, (N, C, H, W), jnp.float32)

    out = cbam_pallas(x, fc_w, fc_b, conv_w)
    out = jax.block_until_ready(out)

    ref = cbam_ref(x, fc_w, fc_b, conv_w)
    np.testing.assert_allclose(np.asarray(out), np.asarray(ref), rtol=2e-3, atol=2e-3)
    print("KERNEL_OK")
</pallas_src>

<mosaic_0001>
module attributes {stable_mosaic.version = 11 : i64} {
  func.func @_cbam_kernel(%arg0: i32, %arg1: memref<2x4x256xf32, #tpu.memory_space<vmem>>, %arg2: memref<4x4xf32, #tpu.memory_space<vmem>>, %arg3: memref<1x4xf32, #tpu.memory_space<vmem>>, %arg4: memref<98x256xf32, #tpu.memory_space<vmem>>, %arg5: memref<2x4x256xf32, #tpu.memory_space<vmem>>, %arg6: memref<2x2x512xf32, #tpu.memory_space<vmem>>) attributes {dimension_semantics = [#tpu.dimension_semantics<parallel>], iteration_bounds = array<i64: 1>, scalar_prefetch = 0 : i64, scratch_operands = 1 : i64, tpu.core_type = #tpu.core_type<tc>, window_params = [{transform_indices = @transform_0, window_bounds = array<i64: 2, 4, 256>}, {pipeline_mode = #tpu.pipeline_mode<synchronous>, transform_indices = @transform_1, window_bounds = array<i64: 4, 4>}, {pipeline_mode = #tpu.pipeline_mode<synchronous>, transform_indices = @transform_2, window_bounds = array<i64: 1, 4>}, {pipeline_mode = #tpu.pipeline_mode<synchronous>, transform_indices = @transform_3, window_bounds = array<i64: 98, 256>}, {transform_indices = @transform_4, window_bounds = array<i64: 2, 4, 256>}]} {
    %c0 = arith.constant 0 : index
    %c0_0 = arith.constant 0 : index
    %c0_1 = arith.constant 0 : index
    %0 = vector.load %arg1[%c0, %c0_0, %c0_1] : memref<2x4x256xf32, #tpu.memory_space<vmem>>, vector<2x4x256xf32>
    %cst = arith.constant dense<0.000000e+00> : vector<2x4xf32>
    %1 = vector.multi_reduction <add>, %0, %cst [2] : vector<2x4x256xf32> to vector<2x4xf32>
    %cst_2 = arith.constant 3.906250e-03 : f32
    %2 = vector.broadcast %cst_2 : f32 to vector<2x4xf32>
    %3 = arith.mulf %1, %2 : vector<2x4xf32>
    %c0_3 = arith.constant 0 : index
    %c0_4 = arith.constant 0 : index
    %4 = vector.load %arg2[%c0_3, %c0_4] : memref<4x4xf32, #tpu.memory_space<vmem>>, vector<4x4xf32>
    %cst_5 = arith.constant dense<0.000000e+00> : vector<2x4xf32>
    %5 = tpu.matmul %3, %4, %cst_5 {dimension_numbers = #tpu.dot_dimension_numbers<[1], [0], [0], [1], [0, 0, 1, 1], [], []>} : vector<2x4xf32>, vector<4x4xf32>, vector<2x4xf32> -> vector<2x4xf32>
    %c0_6 = arith.constant 0 : index
    %c0_7 = arith.constant 0 : index
    %6 = vector.load %arg3[%c0_6, %c0_7] : memref<1x4xf32, #tpu.memory_space<vmem>>, vector<1x4xf32>
    %7 = vector.broadcast %6 : vector<1x4xf32> to vector<2x4xf32>
    %8 = arith.addf %5, %7 : vector<2x4xf32>
    %9 = arith.negf %8 : vector<2x4xf32>
    %10 = math.exp %9 : vector<2x4xf32>
    %cst_8 = arith.constant 1.000000e+00 : f32
    %11 = vector.broadcast %cst_8 : f32 to vector<2x4xf32>
    %12 = arith.addf %11, %10 : vector<2x4xf32>
    %13 = arith.divf %11, %12 : vector<2x4xf32>
    %14 = vector.shape_cast %13 : vector<2x4xf32> to vector<2x4x1xf32>
    %15 = vector.broadcast %14 : vector<2x4x1xf32> to vector<2x4x256xf32>
    %16 = arith.mulf %0, %15 : vector<2x4x256xf32>
    %cst_9 = arith.constant dense<0.000000e+00> : vector<2x256xf32>
    %17 = vector.multi_reduction <add>, %16, %cst_9 [1] : vector<2x4x256xf32> to vector<2x256xf32>
    %cst_10 = arith.constant 4.000000e+00 : f32
    %18 = vector.broadcast %cst_10 : f32 to vector<2x256xf32>
    %19 = arith.divf %17, %18 : vector<2x256xf32>
    %cst_11 = arith.constant dense<0xFF800000> : vector<2x256xf32>
    %20 = vector.multi_reduction <maximumf>, %16, %cst_11 [1] : vector<2x4x256xf32> to vector<2x256xf32>
    %cst_12 = arith.constant 0.000000e+00 : f32
    %21 = vector.broadcast %cst_12 : f32 to vector<2x2x128xf32>
    %c0_13 = arith.constant 0 : index
    %c0_14 = arith.constant 0 : index
    %c0_15 = arith.constant 0 : index
    %22 = vector.load %arg6[%c0_13, %c0_14, %c0_15] : memref<2x2x512xf32, #tpu.memory_space<vmem>>, vector<2x2x128xf32>
    tpu.vector_store %arg6[%c0_13, %c0_14, %c0_15], %21 {strides = array<i32>} : memref<2x2x512xf32, #tpu.memory_space<vmem>>, vector<2x2x128xf32>,
    %c0_16 = arith.constant 0 : index
    %c0_17 = arith.constant 0 : index
    %c384 = arith.constant 384 : index
    %23 = vector.load %arg6[%c0_16, %c0_17, %c384] : memref<2x2x512xf32, #tpu.memory_space<vmem>>, vector<2x2x128xf32>
    tpu.vector_store %arg6[%c0_16, %c0_17, %c384], %21 {strides = array<i32>} : memref<2x2x512xf32, #tpu.memory_space<vmem>>, vector<2x2x128xf32>,
    %c0_18 = arith.constant 0 : index
    %c0_19 = arith.constant 0 : index
    %c128 = arith.constant 128 : index
    %24 = vector.load %arg6[%c0_18, %c0_19, %c128] : memref<2x2x512xf32, #tpu.memory_space<vmem>>, vector<2x1x256xf32>
    %25 = vector.shape_cast %24 : vector<2x1x256xf32> to vector<2x256xf32>
    %26 = vector.shape_cast %19 : vector<2x256xf32> to vector<2x1x256xf32>
    tpu.vector_store %arg6[%c0_18, %c0_19, %c128], %26 {strides = array<i32>} : memref<2x2x512xf32, #tpu.memory_space<vmem>>, vector<2x1x256xf32>,
    %c0_20 = arith.constant 0 : index
    %c1 = arith.constant 1 : index
    %c128_21 = arith.constant 128 : index
    %27 = vector.load %arg6[%c0_20, %c1, %c128_21] : memref<2x2x512xf32, #tpu.memory_space<vmem>>, vector<2x1x256xf32>
    %28 = vector.shape_cast %27 : vector<2x1x256xf32> to vector<2x256xf32>
    %29 = vector.shape_cast %20 : vector<2x256xf32> to vector<2x1x256xf32>
    tpu.vector_store %arg6[%c0_20, %c1, %c128_21], %29 {strides = array<i32>} : memref<2x2x512xf32, #tpu.memory_space<vmem>>, vector<2x1x256xf32>,
    %cst_22 = arith.constant 0.000000e+00 : f32
    %30 = vector.broadcast %cst_22 : f32 to vector<2x256xf32>
    %c0_23 = arith.constant 0 : index
    %c0_24 = arith.constant 0 : index
    %c0_25 = arith.constant 0 : index
    %31 = vector.load %arg6[%c0_23, %c0_24, %c0_25] : memref<2x2x512xf32, #tpu.memory_space<vmem>>, vector<2x1x512xf32>
    %32 = vector.shape_cast %31 : vector<2x1x512xf32> to vector<2x512xf32>
    %33 = vector.extract_strided_slice %32 {offsets = [0, 77], sizes = [2, 256], strides = [1, 1]} : vector<2x512xf32> to vector<2x256xf32>
    %c0_26 = arith.constant 0 : index
    %c0_27 = arith.constant 0 : index
    %34 = vector.load %arg4[%c0_26, %c0_27] : memref<98x256xf32, #tpu.memory_space<vmem>>, vector<1x256xf32>
    %35 = vector.broadcast %34 : vector<1x256xf32> to vector<2x256xf32>
    %36 = arith.mulf %33, %35 : vector<2x256xf32>
    %37 = arith.addf %30, %36 : vector<2x256xf32>
    %38 = vector.extract_strided_slice %32 {offsets = [0, 78], sizes = [2, 256], strides = [1, 1]} : vector<2x512xf32> to vector<2x256xf32>
    %c1_28 = arith.constant 1 : index
    %c0_29 = arith.constant 0 : index
    %39 = vector.load %arg4[%c1_28, %c0_29] : memref<98x256xf32, #tpu.memory_space<vmem>>, vector<1x256xf32>
    %40 = vector.broadcast %39 : vector<1x256xf32> to vector<2x256xf32>
    %41 = arith.mulf %38, %40 : vector<2x256xf32>
    %42 = arith.addf %37, %41 : vector<2x256xf32>
    %43 = vector.extract_strided_slice %32 {offsets = [0, 79], sizes = [2, 256], strides = [1, 1]} : vector<2x512xf32> to vector<2x256xf32>
    %c2 = arith.constant 2 : index
    %c0_30 = arith.constant 0 : index
    %44 = vector.load %arg4[%c2, %c0_30] : memref<98x256xf32, #tpu.memory_space<vmem>>, vector<1x256xf32>
    %45 = vector.broadcast %44 : vector<1x256xf32> to vector<2x256xf32>
    %46 = arith.mulf %43, %45 : vector<2x256xf32>
    %47 = arith.addf %42, %46 : vector<2x256xf32>
    %48 = vector.extract_strided_slice %32 {offsets = [0, 80], sizes = [2, 256], strides = [1, 1]} : vector<2x512xf32> to vector<2x256xf32>
    %c3 = arith.constant 3 : index
    %c0_31 = arith.constant 0 : index
    %49 = vector.load %arg4[%c3, %c0_31] : memref<98x256xf32, #tpu.memory_space<vmem>>, vector<1x256xf32>
    %50 = vector.broadcast %49 : vector<1x256xf32> to vector<2x256xf32>
    %51 = arith.mulf %48, %50 : vector<2x256xf32>
    %52 = arith.addf %47, %51 : vector<2x256xf32>
    %53 = vector.extract_strided_slice %32 {offsets = [0, 81], sizes = [2, 256], strides = [1, 1]} : vector<2x512xf32> to vector<2x256xf32>
    %c4 = arith.constant 4 : index
    %c0_32 = arith.constant 0 : index
    %54 = vector.load %arg4[%c4, %c0_32] : memref<98x256xf32, #tpu.memory_space<vmem>>, vector<1x256xf32>
    %55 = vector.broadcast %54 : vector<1x256xf32> to vector<2x256xf32>
    %56 = arith.mulf %53, %55 : vector<2x256xf32>
    %57 = arith.addf %52, %56 : vector<2x256xf32>
    %58 = vector.extract_strided_slice %32 {offsets = [0, 82], sizes = [2, 256], strides = [1, 1]} : vector<2x512xf32> to vector<2x256xf32>
    %c5 = arith.constant 5 : index
    %c0_33 = arith.constant 0 : index
    %59 = vector.load %arg4[%c5, %c0_33] : memref<98x256xf32, #tpu.memory_space<vmem>>, vector<1x256xf32>
    %60 = vector.broadcast %59 : vector<1x256xf32> to vector<2x256xf32>
    %61 = arith.mulf %58, %60 : vector<2x256xf32>
    %62 = arith.addf %57, %61 : vector<2x256xf32>
    %63 = vector.extract_strided_slice %32 {offsets = [0, 83], sizes = [2, 256], strides = [1, 1]} : vector<2x512xf32> to vector<2x256xf32>
    %c6 = arith.constant 6 : index
    %c0_34 = arith.constant 0 : index
    %64 = vector.load %arg4[%c6, %c0_34] : memref<98x256xf32, #tpu.memory_space<vmem>>, vector<1x256xf32>
    %65 = vector.broadcast %64 : vector<1x256xf32> to vector<2x256xf32>
    %66 = arith.mulf %63, %65 : vector<2x256xf32>
    %67 = arith.addf %62, %66 : vector<2x256xf32>
    %68 = vector.extract_strided_slice %32 {offsets = [0, 93], sizes = [2, 256], strides = [1, 1]} : vector<2x512xf32> to vector<2x256xf32>
    %c7 = arith.constant 7 : index
    %c0_35 = arith.constant 0 : index
    %69 = vector.load %arg4[%c7, %c0_35] : memref<98x256xf32, #tpu.memory_space<vmem>>, vector<1x256xf32>
    %70 = vector.broadcast %69 : vector<1x256xf32> to vector<2x256xf32>
    %71 = arith.mulf %68, %70 : vector<2x256xf32>
    %72 = arith.addf %67, %71 : vector<2x256xf32>
    %73 = vector.extract_strided_slice %32 {offsets = [0, 94], sizes = [2, 256], strides = [1, 1]} : vector<2x512xf32> to vector<2x256xf32>
    %c8 = arith.constant 8 : index
    %c0_36 = arith.constant 0 : index
    %74 = vector.load %arg4[%c8, %c0_36] : memref<98x256xf32, #tpu.memory_space<vmem>>, vector<1x256xf32>
    %75 = vector.broadcast %74 : vector<1x256xf32> to vector<2x256xf32>
    %76 = arith.mulf %73, %75 : vector<2x256xf32>
    %77 = arith.addf %72, %76 : vector<2x256xf32>
    %78 = vector.extract_strided_slice %32 {offsets = [0, 95], sizes = [2, 256], strides = [1, 1]} : vector<2x512xf32> to vector<2x256xf32>
    %c9 = arith.constant 9 : index
    %c0_37 = arith.constant 0 : index
    %79 = vector.load %arg4[%c9, %c0_37] : memref<98x256xf32, #tpu.memory_space<vmem>>, vector<1x256xf32>
    %80 = vector.broadcast %79 : vector<1x256xf32> to vector<2x256xf32>
    %81 = arith.mulf %78, %80 : vector<2x256xf32>
    %82 = arith.addf %77, %81 : vector<2x256xf32>
    %83 = vector.extract_strided_slice %32 {offsets = [0, 96], sizes = [2, 256], strides = [1, 1]} : vector<2x512xf32> to vector<2x256xf32>
    %c10 = arith.constant 10 : index
    %c0_38 = arith.constant 0 : index
    %84 = vector.load %arg4[%c10, %c0_38] : memref<98x256xf32, #tpu.memory_space<vmem>>, vector<1x256xf32>
    %85 = vector.broadcast %84 : vector<1x256xf32> to vector<2x256xf32>
    %86 = arith.mulf %83, %85 : vector<2x256xf32>
    %87 = arith.addf %82, %86 : vector<2x256xf32>
    %88 = vector.extract_strided_slice %32 {offsets = [0, 97], sizes = [2, 256], strides = [1, 1]} : vector<2x512xf32> to vector<2x256xf32>
    %c11 = arith.constant 11 : index
    %c0_39 = arith.constant 0 : index
    %89 = vector.load %arg4[%c11, %c0_39] : memref<98x256xf32, #tpu.memory_space<vmem>>, vector<1x256xf32>
    %90 = vector.broadcast %89 : vector<1x256xf32> to vector<2x256xf32>
    %91 = arith.mulf %88, %90 : vector<2x256xf32>
    %92 = arith.addf %87, %91 : vector<2x256xf32>
    %93 = vector.extract_strided_slice %32 {offsets = [0, 98], sizes = [2, 256], strides = [1, 1]} : vector<2x512xf32> to vector<2x256xf32>
    %c12 = arith.constant 12 : index
    %c0_40 = arith.constant 0 : index
    %94 = vector.load %arg4[%c12, %c0_40] : memref<98x256xf32, #tpu.memory_space<vmem>>, vector<1x256xf32>
    %95 = vector.broadcast %94 : vector<1x256xf32> to vector<2x256xf32>
    %96 = arith.mulf %93, %95 : vector<2x256xf32>
    %97 = arith.addf %92, %96 : vector<2x256xf32>
    %98 = vector.extract_strided_slice %32 {offsets = [0, 99], sizes = [2, 256], strides = [1, 1]} : vector<2x512xf32> to vector<2x256xf32>
    %c13 = arith.constant 13 : index
    %c0_41 = arith.constant 0 : index
    %99 = vector.load %arg4[%c13, %c0_41] : memref<98x256xf32, #tpu.memory_space<vmem>>, vector<1x256xf32>
    %100 = vector.broadcast %99 : vector<1x256xf32> to vector<2x256xf32>
    %101 = arith.mulf %98, %100 : vector<2x256xf32>
    %102 = arith.addf %97, %101 : vector<2x256xf32>
    %103 = vector.extract_strided_slice %32 {offsets = [0, 109], sizes = [2, 256], strides = [1, 1]} : vector<2x512xf32> to vector<2x256xf32>
    %c14 = arith.constant 14 : index
    %c0_42 = arith.constant 0 : index
    %104 = vector.load %arg4[%c14, %c0_42] : memref<98x256xf32, #tpu.memory_space<vmem>>, vector<1x256xf32>
    %105 = vector.broadcast %104 : vector<1x256xf32> to vector<2x256xf32>
    %106 = arith.mulf %103, %105 : vector<2x256xf32>
    %107 = arith.addf %102, %106 : vector<2x256xf32>
    %108 = vector.extract_strided_slice %32 {offsets = [0, 110], sizes = [2, 256], strides = [1, 1]} : vector<2x512xf32> to vector<2x256xf32>
    %c15 = arith.constant 15 : index
    %c0_43 = arith.constant 0 : index
    %109 = vector.load %arg4[%c15, %c0_43] : memref<98x256xf32, #tpu.memory_space<vmem>>, vector<1x256xf32>
    %110 = vector.broadcast %109 : vector<1x256xf32> to vector<2x256xf32>
    %111 = arith.mulf %108, %110 : vector<2x256xf32>
    %112 = arith.addf %107, %111 : vector<2x256xf32>
    %113 = vector.extract_strided_slice %32 {offsets = [0, 111], sizes = [2, 256], strides = [1, 1]} : vector<2x512xf32> to vector<2x256xf32>
    %c16 = arith.constant 16 : index
    %c0_44 = arith.constant 0 : index
    %114 = vector.load %arg4[%c16, %c0_44] : memref<98x256xf32, #tpu.memory_space<vmem>>, vector<1x256xf32>
    %115 = vector.broadcast %114 : vector<1x256xf32> to vector<2x256xf32>
    %116 = arith.mulf %113, %115 : vector<2x256xf32>
    %117 = arith.addf %112, %116 : vector<2x256xf32>
    %118 = vector.extract_strided_slice %32 {offsets = [0, 112], sizes = [2, 256], strides = [1, 1]} : vector<2x512xf32> to vector<2x256xf32>
    %c17 = arith.constant 17 : index
    %c0_45 = arith.constant 0 : index
    %119 = vector.load %arg4[%c17, %c0_45] : memref<98x256xf32, #tpu.memory_space<vmem>>, vector<1x256xf32>
    %120 = vector.broadcast %119 : vector<1x256xf32> to vector<2x256xf32>
    %121 = arith.mulf %118, %120 : vector<2x256xf32>
    %122 = arith.addf %117, %121 : vector<2x256xf32>
    %123 = vector.extract_strided_slice %32 {offsets = [0, 113], sizes = [2, 256], strides = [1, 1]} : vector<2x512xf32> to vector<2x256xf32>
    %c18 = arith.constant 18 : index
    %c0_46 = arith.constant 0 : index
    %124 = vector.load %arg4[%c18, %c0_46] : memref<98x256xf32, #tpu.memory_space<vmem>>, vector<1x256xf32>
    %125 = vector.broadcast %124 : vector<1x256xf32> to vector<2x256xf32>
    %126 = arith.mulf %123, %125 : vector<2x256xf32>
    %127 = arith.addf %122, %126 : vector<2x256xf32>
    %128 = vector.extract_strided_slice %32 {offsets = [0, 114], sizes = [2, 256], strides = [1, 1]} : vector<2x512xf32> to vector<2x256xf32>
    %c19 = arith.constant 19 : index
    %c0_47 = arith.constant 0 : index
    %129 = vector.load %arg4[%c19, %c0_47] : memref<98x256xf32, #tpu.memory_space<vmem>>, vector<1x256xf32>
    %130 = vector.broadcast %129 : vector<1x256xf32> to vector<2x256xf32>
    %131 = arith.mulf %128, %130 : vector<2x256xf32>
    %132 = arith.addf %127, %131 : vector<2x256xf32>
    %133 = vector.extract_strided_slice %32 {offsets = [0, 115], sizes = [2, 256], strides = [1, 1]} : vector<2x512xf32> to vector<2x256xf32>
    %c20 = arith.constant 20 : index
    %c0_48 = arith.constant 0 : index
    %134 = vector.load %arg4[%c20, %c0_48] : memref<98x256xf32, #tpu.memory_space<vmem>>, vector<1x256xf32>
    %135 = vector.broadcast %134 : vector<1x256xf32> to vector<2x256xf32>
    %136 = arith.mulf %133, %135 : vector<2x256xf32>
    %137 = arith.addf %132, %136 : vector<2x256xf32>
    %138 = vector.extract_strided_slice %32 {offsets = [0, 125], sizes = [2, 256], strides = [1, 1]} : vector<2x512xf32> to vector<2x256xf32>
    %c21 = arith.constant 21 : index
    %c0_49 = arith.constant 0 : index
    %139 = vector.load %arg4[%c21, %c0_49] : memref<98x256xf32, #tpu.memory_space<vmem>>, vector<1x256xf32>
    %140 = vector.broadcast %139 : vector<1x256xf32> to vector<2x256xf32>
    %141 = arith.mulf %138, %140 : vector<2x256xf32>
    %142 = arith.addf %137, %141 : vector<2x256xf32>
    %143 = vector.extract_strided_slice %32 {offsets = [0, 126], sizes = [2, 256], strides = [1, 1]} : vector<2x512xf32> to vector<2x256xf32>
    %c22 = arith.constant 22 : index
    %c0_50 = arith.constant 0 : index
    %144 = vector.load %arg4[%c22, %c0_50] : memref<98x256xf32, #tpu.memory_space<vmem>>, vector<1x256xf32>
    %145 = vector.broadcast %144 : vector<1x256xf32> to vector<2x256xf32>
    %146 = arith.mulf %143, %145 : vector<2x256xf32>
    %147 = arith.addf %142, %146 : vector<2x256xf32>
    %148 = vector.extract_strided_slice %32 {offsets = [0, 127], sizes = [2, 256], strides = [1, 1]} : vector<2x512xf32> to vector<2x256xf32>
    %c23 = arith.constant 23 : index
    %c0_51 = arith.constant 0 : index
    %149 = vector.load %arg4[%c23, %c0_51] : memref<98x256xf32, #tpu.memory_space<vmem>>, vector<1x256xf32>
    %150 = vector.broadcast %149 : vector<1x256xf32> to vector<2x256xf32>
    %151 = arith.mulf %148, %150 : vector<2x256xf32>
    %152 = arith.addf %147, %151 : vector<2x256xf32>
    %153 = vector.extract_strided_slice %32 {offsets = [0, 128], sizes = [2, 256], strides = [1, 1]} : vector<2x512xf32> to vector<2x256xf32>
    %c24 = arith.constant 24 : index
    %c0_52 = arith.constant 0 : index
    %154 = vector.load %arg4[%c24, %c0_52] : memref<98x256xf32, #tpu.memory_space<vmem>>, vector<1x256xf32>
    %155 = vector.broadcast %154 : vector<1x256xf32> to vector<2x256xf32>
    %156 = arith.mulf %153, %155 : vector<2x256xf32>
    %157 = arith.addf %152, %156 : vector<2x256xf32>
    %158 = vector.extract_strided_slice %32 {offsets = [0, 129], sizes = [2, 256], strides = [1, 1]} : vector<2x512xf32> to vector<2x256xf32>
    %c25 = arith.constant 25 : index
    %c0_53 = arith.constant 0 : index
    %159 = vector.load %arg4[%c25, %c0_53] : memref<98x256xf32, #tpu.memory_space<vmem>>, vector<1x256xf32>
    %160 = vector.broadcast %159 : vector<1x256xf32> to vector<2x256xf32>
    %161 = arith.mulf %158, %160 : vector<2x256xf32>
    %162 = arith.addf %157, %161 : vector<2x256xf32>
    %163 = vector.extract_strided_slice %32 {offsets = [0, 130], sizes = [2, 256], strides = [1, 1]} : vector<2x512xf32> to vector<2x256xf32>
    %c26 = arith.constant 26 : index
    %c0_54 = arith.constant 0 : index
    %164 = vector.load %arg4[%c26, %c0_54] : memref<98x256xf32, #tpu.memory_space<vmem>>, vector<1x256xf32>
    %165 = vector.broadcast %164 : vector<1x256xf32> to vector<2x256xf32>
    %166 = arith.mulf %163, %165 : vector<2x256xf32>
    %167 = arith.addf %162, %166 : vector<2x256xf32>
    %168 = vector.extract_strided_slice %32 {offsets = [0, 131], sizes = [2, 256], strides = [1, 1]} : vector<2x512xf32> to vector<2x256xf32>
    %c27 = arith.constant 27 : index
    %c0_55 = arith.constant 0 : index
    %169 = vector.load %arg4[%c27, %c0_55] : memref<98x256xf32, #tpu.memory_space<vmem>>, vector<1x256xf32>
    %170 = vector.broadcast %169 : vector<1x256xf32> to vector<2x256xf32>
    %171 = arith.mulf %168, %170 : vector<2x256xf32>
    %172 = arith.addf %167, %171 : vector<2x256xf32>
    %173 = vector.extract_strided_slice %32 {offsets = [0, 141], sizes = [2, 256], strides = [1, 1]} : vector<2x512xf32> to vector<2x256xf32>
    %c28 = arith.constant 28 : index
    %c0_56 = arith.constant 0 : index
    %174 = vector.load %arg4[%c28, %c0_56] : memref<98x256xf32, #tpu.memory_space<vmem>>, vector<1x256xf32>
    %175 = vector.broadcast %174 : vector<1x256xf32> to vector<2x256xf32>
    %176 = arith.mulf %173, %175 : vector<2x256xf32>
    %177 = arith.addf %172, %176 : vector<2x256xf32>
    %178 = vector.extract_strided_slice %32 {offsets = [0, 142], sizes = [2, 256], strides = [1, 1]} : vector<2x512xf32> to vector<2x256xf32>
    %c29 = arith.constant 29 : index
    %c0_57 = arith.constant 0 : index
    %179 = vector.load %arg4[%c29, %c0_57] : memref<98x256xf32, #tpu.memory_space<vmem>>, vector<1x256xf32>
    %180 = vector.broadcast %179 : vector<1x256xf32> to vector<2x256xf32>
    %181 = arith.mulf %178, %180 : vector<2x256xf32>
    %182 = arith.addf %177, %181 : vector<2x256xf32>
    %183 = vector.extract_strided_slice %32 {offsets = [0, 143], sizes = [2, 256], strides = [1, 1]} : vector<2x512xf32> to vector<2x256xf32>
    %c30 = arith.constant 30 : index
    %c0_58 = arith.constant 0 : index
    %184 = vector.load %arg4[%c30, %c0_58] : memref<98x256xf32, #tpu.memory_space<vmem>>, vector<1x256xf32>
    %185 = vector.broadcast %184 : vector<1x256xf32> to vector<2x256xf32>
    %186 = arith.mulf %183, %185 : vector<2x256xf32>
    %187 = arith.addf %182, %186 : vector<2x256xf32>
    %188 = vector.extract_strided_slice %32 {offsets = [0, 144], sizes = [2, 256], strides = [1, 1]} : vector<2x512xf32> to vector<2x256xf32>
    %c31 = arith.constant 31 : index
    %c0_59 = arith.constant 0 : index
    %189 = vector.load %arg4[%c31, %c0_59] : memref<98x256xf32, #tpu.memory_space<vmem>>, vector<1x256xf32>
    %190 = vector.broadcast %189 : vector<1x256xf32> to vector<2x256xf32>
    %191 = arith.mulf %188, %190 : vector<2x256xf32>
    %192 = arith.addf %187, %191 : vector<2x256xf32>
    %193 = vector.extract_strided_slice %32 {offsets = [0, 145], sizes = [2, 256], strides = [1, 1]} : vector<2x512xf32> to vector<2x256xf32>
    %c32 = arith.constant 32 : index
    %c0_60 = arith.constant 0 : index
    %194 = vector.load %arg4[%c32, %c0_60] : memref<98x256xf32, #tpu.memory_space<vmem>>, vector<1x256xf32>
    %195 = vector.broadcast %194 : vector<1x256xf32> to vector<2x256xf32>
    %196 = arith.mulf %193, %195 : vector<2x256xf32>
    %197 = arith.addf %192, %196 : vector<2x256xf32>
    %198 = vector.extract_strided_slice %32 {offsets = [0, 146], sizes = [2, 256], strides = [1, 1]} : vector<2x512xf32> to vector<2x256xf32>
    %c33 = arith.constant 33 : index
    %c0_61 = arith.constant 0 : index
    %199 = vector.load %arg4[%c33, %c0_61] : memref<98x256xf32, #tpu.memory_space<vmem>>, vector<1x256xf32>
    %200 = vector.broadcast %199 : vector<1x256xf32> to vector<2x256xf32>
    %201 = arith.mulf %198, %200 : vector<2x256xf32>
    %202 = arith.addf %197, %201 : vector<2x256xf32>
    %203 = vector.extract_strided_slice %32 {offsets = [0, 147], sizes = [2, 256], strides = [1, 1]} : vector<2x512xf32> to vector<2x256xf32>
    %c34 = arith.constant 34 : index
    %c0_62 = arith.constant 0 : index
    %204 = vector.load %arg4[%c34, %c0_62] : memref<98x256xf32, #tpu.memory_space<vmem>>, vector<1x256xf32>
    %205 = vector.broadcast %204 : vector<1x256xf32> to vector<2x256xf32>
    %206 = arith.mulf %203, %205 : vector<2x256xf32>
    %207 = arith.addf %202, %206 : vector<2x256xf32>
    %208 = vector.extract_strided_slice %32 {offsets = [0, 157], sizes = [2, 256], strides = [1, 1]} : vector<2x512xf32> to vector<2x256xf32>
    %c35 = arith.constant 35 : index
    %c0_63 = arith.constant 0 : index
    %209 = vector.load %arg4[%c35, %c0_63] : memref<98x256xf32, #tpu.memory_space<vmem>>, vector<1x256xf32>
    %210 = vector.broadcast %209 : vector<1x256xf32> to vector<2x256xf32>
    %211 = arith.mulf %208, %210 : vector<2x256xf32>
    %212 = arith.addf %207, %211 : vector<2x256xf32>
    %213 = vector.extract_strided_slice %32 {offsets = [0, 158], sizes = [2, 256], strides = [1, 1]} : vector<2x512xf32> to vector<2x256xf32>
    %c36 = arith.constant 36 : index
    %c0_64 = arith.constant 0 : index
    %214 = vector.load %arg4[%c36, %c0_64] : memref<98x256xf32, #tpu.memory_space<vmem>>, vector<1x256xf32>
    %215 = vector.broadcast %214 : vector<1x256xf32> to vector<2x256xf32>
    %216 = arith.mulf %213, %215 : vector<2x256xf32>
    %217 = arith.addf %212, %216 : vector<2x256xf32>
    %218 = vector.extract_strided_slice %32 {offsets = [0, 159], sizes = [2, 256], strides = [1, 1]} : vector<2x512xf32> to vector<2x256xf32>
    %c37 = arith.constant 37 : index
    %c0_65 = arith.constant 0 : index
    %219 = vector.load %arg4[%c37, %c0_65] : memref<98x256xf32, #tpu.memory_space<vmem>>, vector<1x256xf32>
    %220 = vector.broadcast %219 : vector<1x256xf32> to vector<2x256xf32>
    %221 = arith.mulf %218, %220 : vector<2x256xf32>
    %222 = arith.addf %217, %221 : vector<2x256xf32>
    %223 = vector.extract_strided_slice %32 {offsets = [0, 160], sizes = [2, 256], strides = [1, 1]} : vector<2x512xf32> to vector<2x256xf32>
    %c38 = arith.constant 38 : index
    %c0_66 = arith.constant 0 : index
    %224 = vector.load %arg4[%c38, %c0_66] : memref<98x256xf32, #tpu.memory_space<vmem>>, vector<1x256xf32>
    %225 = vector.broadcast %224 : vector<1x256xf32> to vector<2x256xf32>
    %226 = arith.mulf %223, %225 : vector<2x256xf32>
    %227 = arith.addf %222, %226 : vector<2x256xf32>
    %228 = vector.extract_strided_slice %32 {offsets = [0, 161], sizes = [2, 256], strides = [1, 1]} : vector<2x512xf32> to vector<2x256xf32>
    %c39 = arith.constant 39 : index
    %c0_67 = arith.constant 0 : index
    %229 = vector.load %arg4[%c39, %c0_67] : memref<98x256xf32, #tpu.memory_space<vmem>>, vector<1x256xf32>
    %230 = vector.broadcast %229 : vector<1x256xf32> to vector<2x256xf32>
    %231 = arith.mulf %228, %230 : vector<2x256xf32>
    %232 = arith.addf %227, %231 : vector<2x256xf32>
    %233 = vector.extract_strided_slice %32 {offsets = [0, 162], sizes = [2, 256], strides = [1, 1]} : vector<2x512xf32> to vector<2x256xf32>
    %c40 = arith.constant 40 : index
    %c0_68 = arith.constant 0 : index
    %234 = vector.load %arg4[%c40, %c0_68] : memref<98x256xf32, #tpu.memory_space<vmem>>, vector<1x256xf32>
    %235 = vector.broadcast %234 : vector<1x256xf32> to vector<2x256xf32>
    %236 = arith.mulf %233, %235 : vector<2x256xf32>
    %237 = arith.addf %232, %236 : vector<2x256xf32>
    %238 = vector.extract_strided_slice %32 {offsets = [0, 163], sizes = [2, 256], strides = [1, 1]} : vector<2x512xf32> to vector<2x256xf32>
    %c41 = arith.constant 41 : index
    %c0_69 = arith.constant 0 : index
    %239 = vector.load %arg4[%c41, %c0_69] : memref<98x256xf32, #tpu.memory_space<vmem>>, vector<1x256xf32>
    %240 = vector.broadcast %239 : vector<1x256xf32> to vector<2x256xf32>
    %241 = arith.mulf %238, %240 : vector<2x256xf32>
    %242 = arith.addf %237, %241 : vector<2x256xf32>
    %243 = vector.extract_strided_slice %32 {offsets = [0, 173], sizes = [2, 256], strides = [1, 1]} : vector<2x512xf32> to vector<2x256xf32>
    %c42 = arith.constant 42 : index
    %c0_70 = arith.constant 0 : index
    %244 = vector.load %arg4[%c42, %c0_70] : memref<98x256xf32, #tpu.memory_space<vmem>>, vector<1x256xf32>
    %245 = vector.broadcast %244 : vector<1x256xf32> to vector<2x256xf32>
    %246 = arith.mulf %243, %245 : vector<2x256xf32>
    %247 = arith.addf %242, %246 : vector<2x256xf32>
    %248 = vector.extract_strided_slice %32 {offsets = [0, 174], sizes = [2, 256], strides = [1, 1]} : vector<2x512xf32> to vector<2x256xf32>
    %c43 = arith.constant 43 : index
    %c0_71 = arith.constant 0 : index
    %249 = vector.load %arg4[%c43, %c0_71] : memref<98x256xf32, #tpu.memory_space<vmem>>, vector<1x256xf32>
    %250 = vector.broadcast %249 : vector<1x256xf32> to vector<2x256xf32>
    %251 = arith.mulf %248, %250 : vector<2x256xf32>
    %252 = arith.addf %247, %251 : vector<2x256xf32>
    %253 = vector.extract_strided_slice %32 {offsets = [0, 175], sizes = [2, 256], strides = [1, 1]} : vector<2x512xf32> to vector<2x256xf32>
    %c44 = arith.constant 44 : index
    %c0_72 = arith.constant 0 : index
    %254 = vector.load %arg4[%c44, %c0_72] : memref<98x256xf32, #tpu.memory_space<vmem>>, vector<1x256xf32>
    %255 = vector.broadcast %254 : vector<1x256xf32> to vector<2x256xf32>
    %256 = arith.mulf %253, %255 : vector<2x256xf32>
    %257 = arith.addf %252, %256 : vector<2x256xf32>
    %258 = vector.extract_strided_slice %32 {offsets = [0, 176], sizes = [2, 256], strides = [1, 1]} : vector<2x512xf32> to vector<2x256xf32>
    %c45 = arith.constant 45 : index
    %c0_73 = arith.constant 0 : index
    %259 = vector.load %arg4[%c45, %c0_73] : memref<98x256xf32, #tpu.memory_space<vmem>>, vector<1x256xf32>
    %260 = vector.broadcast %259 : vector<1x256xf32> to vector<2x256xf32>
    %261 = arith.mulf %258, %260 : vector<2x256xf32>
    %262 = arith.addf %257, %261 : vector<2x256xf32>
    %263 = vector.extract_strided_slice %32 {offsets = [0, 177], sizes = [2, 256], strides = [1, 1]} : vector<2x512xf32> to vector<2x256xf32>
    %c46 = arith.constant 46 : index
    %c0_74 = arith.constant 0 : index
    %264 = vector.load %arg4[%c46, %c0_74] : memref<98x256xf32, #tpu.memory_space<vmem>>, vector<1x256xf32>
    %265 = vector.broadcast %264 : vector<1x256xf32> to vector<2x256xf32>
    %266 = arith.mulf %263, %265 : vector<2x256xf32>
    %267 = arith.addf %262, %266 : vector<2x256xf32>
    %268 = vector.extract_strided_slice %32 {offsets = [0, 178], sizes = [2, 256], strides = [1, 1]} : vector<2x512xf32> to vector<2x256xf32>
    %c47 = arith.constant 47 : index
    %c0_75 = arith.constant 0 : index
    %269 = vector.load %arg4[%c47, %c0_75] : memref<98x256xf32, #tpu.memory_space<vmem>>, vector<1x256xf32>
    %270 = vector.broadcast %269 : vector<1x256xf32> to vector<2x256xf32>
    %271 = arith.mulf %268, %270 : vector<2x256xf32>
    %272 = arith.addf %267, %271 : vector<2x256xf32>
    %273 = vector.extract_strided_slice %32 {offsets = [0, 179], sizes = [2, 256], strides = [1, 1]} : vector<2x512xf32> to vector<2x256xf32>
    %c48 = arith.constant 48 : index
    %c0_76 = arith.constant 0 : index
    %274 = vector.load %arg4[%c48, %c0_76] : memref<98x256xf32, #tpu.memory_space<vmem>>, vector<1x256xf32>
    %275 = vector.broadcast %274 : vector<1x256xf32> to vector<2x256xf32>
    %276 = arith.mulf %273, %275 : vector<2x256xf32>
    %277 = arith.addf %272, %276 : vector<2x256xf32>
    %c0_77 = arith.constant 0 : index
    %c1_78 = arith.constant 1 : index
    %c0_79 = arith.constant 0 : index
    %278 = vector.load %arg6[%c0_77, %c1_78, %c0_79] : memref<2x2x512xf32, #tpu.memory_space<vmem>>, vector<2x1x512xf32>
    %279 = vector.shape_cast %278 : vector<2x1x512xf32> to vector<2x512xf32>
    %280 = vector.extract_strided_slice %279 {offsets = [0, 77], sizes = [2, 256], strides = [1, 1]} : vector<2x512xf32> to vector<2x256xf32>
    %c49 = arith.constant 49 : index
    %c0_80 = arith.constant 0 : index
    %281 = vector.load %arg4[%c49, %c0_80] : memref<98x256xf32, #tpu.memory_space<vmem>>, vector<1x256xf32>
    %282 = vector.broadcast %281 : vector<1x256xf32> to vector<2x256xf32>
    %283 = arith.mulf %280, %282 : vector<2x256xf32>
    %284 = arith.addf %277, %283 : vector<2x256xf32>
    %285 = vector.extract_strided_slice %279 {offsets = [0, 78], sizes = [2, 256], strides = [1, 1]} : vector<2x512xf32> to vector<2x256xf32>
    %c50 = arith.constant 50 : index
    %c0_81 = arith.constant 0 : index
    %286 = vector.load %arg4[%c50, %c0_81] : memref<98x256xf32, #tpu.memory_space<vmem>>, vector<1x256xf32>
    %287 = vector.broadcast %286 : vector<1x256xf32> to vector<2x256xf32>
    %288 = arith.mulf %285, %287 : vector<2x256xf32>
    %289 = arith.addf %284, %288 : vector<2x256xf32>
    %290 = vector.extract_strided_slice %279 {offsets = [0, 79], sizes = [2, 256], strides = [1, 1]} : vector<2x512xf32> to vector<2x256xf32>
    %c51 = arith.constant 51 : index
    %c0_82 = arith.constant 0 : index
    %291 = vector.load %arg4[%c51, %c0_82] : memref<98x256xf32, #tpu.memory_space<vmem>>, vector<1x256xf32>
    %292 = vector.broadcast %291 : vector<1x256xf32> to vector<2x256xf32>
    %293 = arith.mulf %290, %292 : vector<2x256xf32>
    %294 = arith.addf %289, %293 : vector<2x256xf32>
    %295 = vector.extract_strided_slice %279 {offsets = [0, 80], sizes = [2, 256], strides = [1, 1]} : vector<2x512xf32> to vector<2x256xf32>
    %c52 = arith.constant 52 : index
    %c0_83 = arith.constant 0 : index
    %296 = vector.load %arg4[%c52, %c0_83] : memref<98x256xf32, #tpu.memory_space<vmem>>, vector<1x256xf32>
    %297 = vector.broadcast %296 : vector<1x256xf32> to vector<2x256xf32>
    %298 = arith.mulf %295, %297 : vector<2x256xf32>
    %299 = arith.addf %294, %298 : vector<2x256xf32>
    %300 = vector.extract_strided_slice %279 {offsets = [0, 81], sizes = [2, 256], strides = [1, 1]} : vector<2x512xf32> to vector<2x256xf32>
    %c53 = arith.constant 53 : index
    %c0_84 = arith.constant 0 : index
    %301 = vector.load %arg4[%c53, %c0_84] : memref<98x256xf32, #tpu.memory_space<vmem>>, vector<1x256xf32>
    %302 = vector.broadcast %301 : vector<1x256xf32> to vector<2x256xf32>
    %303 = arith.mulf %300, %302 : vector<2x256xf32>
    %304 = arith.addf %299, %303 : vector<2x256xf32>
    %305 = vector.extract_strided_slice %279 {offsets = [0, 82], sizes = [2, 256], strides = [1, 1]} : vector<2x512xf32> to vector<2x256xf32>
    %c54 = arith.constant 54 : index
    %c0_85 = arith.constant 0 : index
    %306 = vector.load %arg4[%c54, %c0_85] : memref<98x256xf32, #tpu.memory_space<vmem>>, vector<1x256xf32>
    %307 = vector.broadcast %306 : vector<1x256xf32> to vector<2x256xf32>
    %308 = arith.mulf %305, %307 : vector<2x256xf32>
    %309 = arith.addf %304, %308 : vector<2x256xf32>
    %310 = vector.extract_strided_slice %279 {offsets = [0, 83], sizes = [2, 256], strides = [1, 1]} : vector<2x512xf32> to vector<2x256xf32>
    %c55 = arith.constant 55 : index
    %c0_86 = arith.constant 0 : index
    %311 = vector.load %arg4[%c55, %c0_86] : memref<98x256xf32, #tpu.memory_space<vmem>>, vector<1x256xf32>
    %312 = vector.broadcast %311 : vector<1x256xf32> to vector<2x256xf32>
    %313 = arith.mulf %310, %312 : vector<2x256xf32>
    %314 = arith.addf %309, %313 : vector<2x256xf32>
    %315 = vector.extract_strided_slice %279 {offsets = [0, 93], sizes = [2, 256], strides = [1, 1]} : vector<2x512xf32> to vector<2x256xf32>
    %c56 = arith.constant 56 : index
    %c0_87 = arith.constant 0 : index
    %316 = vector.load %arg4[%c56, %c0_87] : memref<98x256xf32, #tpu.memory_space<vmem>>, vector<1x256xf32>
    %317 = vector.broadcast %316 : vector<1x256xf32> to vector<2x256xf32>
    %318 = arith.mulf %315, %317 : vector<2x256xf32>
    %319 = arith.addf %314, %318 : vector<2x256xf32>
    %320 = vector.extract_strided_slice %279 {offsets = [0, 94], sizes = [2, 256], strides = [1, 1]} : vector<2x512xf32> to vector<2x256xf32>
    %c57 = arith.constant 57 : index
    %c0_88 = arith.constant 0 : index
    %321 = vector.load %arg4[%c57, %c0_88] : memref<98x256xf32, #tpu.memory_space<vmem>>, vector<1x256xf32>
    %322 = vector.broadcast %321 : vector<1x256xf32> to vector<2x256xf32>
    %323 = arith.mulf %320, %322 : vector<2x256xf32>
    %324 = arith.addf %319, %323 : vector<2x256xf32>
    %325 = vector.extract_strided_slice %279 {offsets = [0, 95], sizes = [2, 256], strides = [1, 1]} : vector<2x512xf32> to vector<2x256xf32>
    %c58 = arith.constant 58 : index
    %c0_89 = arith.constant 0 : index
    %326 = vector.load %arg4[%c58, %c0_89] : memref<98x256xf32, #tpu.memory_space<vmem>>, vector<1x256xf32>
    %327 = vector.broadcast %326 : vector<1x256xf32> to vector<2x256xf32>
    %328 = arith.mulf %325, %327 : vector<2x256xf32>
    %329 = arith.addf %324, %328 : vector<2x256xf32>
    %330 = vector.extract_strided_slice %279 {offsets = [0, 96], sizes = [2, 256], strides = [1, 1]} : vector<2x512xf32> to vector<2x256xf32>
    %c59 = arith.constant 59 : index
    %c0_90 = arith.constant 0 : index
    %331 = vector.load %arg4[%c59, %c0_90] : memref<98x256xf32, #tpu.memory_space<vmem>>, vector<1x256xf32>
    %332 = vector.broadcast %331 : vector<1x256xf32> to vector<2x256xf32>
    %333 = arith.mulf %330, %332 : vector<2x256xf32>
    %334 = arith.addf %329, %333 : vector<2x256xf32>
    %335 = vector.extract_strided_slice %279 {offsets = [0, 97], sizes = [2, 256], strides = [1, 1]} : vector<2x512xf32> to vector<2x256xf32>
    %c60 = arith.constant 60 : index
    %c0_91 = arith.constant 0 : index
    %336 = vector.load %arg4[%c60, %c0_91] : memref<98x256xf32, #tpu.memory_space<vmem>>, vector<1x256xf32>
    %337 = vector.broadcast %336 : vector<1x256xf32> to vector<2x256xf32>
    %338 = arith.mulf %335, %337 : vector<2x256xf32>
    %339 = arith.addf %334, %338 : vector<2x256xf32>
    %340 = vector.extract_strided_slice %279 {offsets = [0, 98], sizes = [2, 256], strides = [1, 1]} : vector<2x512xf32> to vector<2x256xf32>
    %c61 = arith.constant 61 : index
    %c0_92 = arith.constant 0 : index
    %341 = vector.load %arg4[%c61, %c0_92] : memref<98x256xf32, #tpu.memory_space<vmem>>, vector<1x256xf32>
    %342 = vector.broadcast %341 : vector<1x256xf32> to vector<2x256xf32>
    %343 = arith.mulf %340, %342 : vector<2x256xf32>
    %344 = arith.addf %339, %343 : vector<2x256xf32>
    %345 = vector.extract_strided_slice %279 {offsets = [0, 99], sizes = [2, 256], strides = [1, 1]} : vector<2x512xf32> to vector<2x256xf32>
    %c62 = arith.constant 62 : index
    %c0_93 = arith.constant 0 : index
    %346 = vector.load %arg4[%c62, %c0_93] : memref<98x256xf32, #tpu.memory_space<vmem>>, vector<1x256xf32>
    %347 = vector.broadcast %346 : vector<1x256xf32> to vector<2x256xf32>
    %348 = arith.mulf %345, %347 : vector<2x256xf32>
    %349 = arith.addf %344, %348 : vector<2x256xf32>
    %350 = vector.extract_strided_slice %279 {offsets = [0, 109], sizes = [2, 256], strides = [1, 1]} : vector<2x512xf32> to vector<2x256xf32>
    %c63 = arith.constant 63 : index
    %c0_94 = arith.constant 0 : index
    %351 = vector.load %arg4[%c63, %c0_94] : memref<98x256xf32, #tpu.memory_space<vmem>>, vector<1x256xf32>
    %352 = vector.broadcast %351 : vector<1x256xf32> to vector<2x256xf32>
    %353 = arith.mulf %350, %352 : vector<2x256xf32>
    %354 = arith.addf %349, %353 : vector<2x256xf32>
    %355 = vector.extract_strided_slice %279 {offsets = [0, 110], sizes = [2, 256], strides = [1, 1]} : vector<2x512xf32> to vector<2x256xf32>
    %c64 = arith.constant 64 : index
    %c0_95 = arith.constant 0 : index
    %356 = vector.load %arg4[%c64, %c0_95] : memref<98x256xf32, #tpu.memory_space<vmem>>, vector<1x256xf32>
    %357 = vector.broadcast %356 : vector<1x256xf32> to vector<2x256xf32>
    %358 = arith.mulf %355, %357 : vector<2x256xf32>
    %359 = arith.addf %354, %358 : vector<2x256xf32>
    %360 = vector.extract_strided_slice %279 {offsets = [0, 111], sizes = [2, 256], strides = [1, 1]} : vector<2x512xf32> to vector<2x256xf32>
    %c65 = arith.constant 65 : index
    %c0_96 = arith.constant 0 : index
    %361 = vector.load %arg4[%c65, %c0_96] : memref<98x256xf32, #tpu.memory_space<vmem>>, vector<1x256xf32>
    %362 = vector.broadcast %361 : vector<1x256xf32> to vector<2x256xf32>
    %363 = arith.mulf %360, %362 : vector<2x256xf32>
    %364 = arith.addf %359, %363 : vector<2x256xf32>
    %365 = vector.extract_strided_slice %279 {offsets = [0, 112], sizes = [2, 256], strides = [1, 1]} : vector<2x512xf32> to vector<2x256xf32>
    %c66 = arith.constant 66 : index
    %c0_97 = arith.constant 0 : index
    %366 = vector.load %arg4[%c66, %c0_97] : memref<98x256xf32, #tpu.memory_space<vmem>>, vector<1x256xf32>
    %367 = vector.broadcast %366 : vector<1x256xf32> to vector<2x256xf32>
    %368 = arith.mulf %365, %367 : vector<2x256xf32>
    %369 = arith.addf %364, %368 : vector<2x256xf32>
    %370 = vector.extract_strided_slice %279 {offsets = [0, 113], sizes = [2, 256], strides = [1, 1]} : vector<2x512xf32> to vector<2x256xf32>
    %c67 = arith.constant 67 : index
    %c0_98 = arith.constant 0 : index
    %371 = vector.load %arg4[%c67, %c0_98] : memref<98x256xf32, #tpu.memory_space<vmem>>, vector<1x256xf32>
    %372 = vector.broadcast %371 : vector<1x256xf32> to vector<2x256xf32>
    %373 = arith.mulf %370, %372 : vector<2x256xf32>
    %374 = arith.addf %369, %373 : vector<2x256xf32>
    %375 = vector.extract_strided_slice %279 {offsets = [0, 114], sizes = [2, 256], strides = [1, 1]} : vector<2x512xf32> to vector<2x256xf32>
    %c68 = arith.constant 68 : index
    %c0_99 = arith.constant 0 : index
    %376 = vector.load %arg4[%c68, %c0_99] : memref<98x256xf32, #tpu.memory_space<vmem>>, vector<1x256xf32>
    %377 = vector.broadcast %376 : vector<1x256xf32> to vector<2x256xf32>
    %378 = arith.mulf %375, %377 : vector<2x256xf32>
    %379 = arith.addf %374, %378 : vector<2x256xf32>
    %380 = vector.extract_strided_slice %279 {offsets = [0, 115], sizes = [2, 256], strides = [1, 1]} : vector<2x512xf32> to vector<2x256xf32>
    %c69 = arith.constant 69 : index
    %c0_100 = arith.constant 0 : index
    %381 = vector.load %arg4[%c69, %c0_100] : memref<98x256xf32, #tpu.memory_space<vmem>>, vector<1x256xf32>
    %382 = vector.broadcast %381 : vector<1x256xf32> to vector<2x256xf32>
    %383 = arith.mulf %380, %382 : vector<2x256xf32>
    %384 = arith.addf %379, %383 : vector<2x256xf32>
    %385 = vector.extract_strided_slice %279 {offsets = [0, 125], sizes = [2, 256], strides = [1, 1]} : vector<2x512xf32> to vector<2x256xf32>
    %c70 = arith.constant 70 : index
    %c0_101 = arith.constant 0 : index
    %386 = vector.load %arg4[%c70, %c0_101] : memref<98x256xf32, #tpu.memory_space<vmem>>, vector<1x256xf32>
    %387 = vector.broadcast %386 : vector<1x256xf32> to vector<2x256xf32>
    %388 = arith.mulf %385, %387 : vector<2x256xf32>
    %389 = arith.addf %384, %388 : vector<2x256xf32>
    %390 = vector.extract_strided_slice %279 {offsets = [0, 126], sizes = [2, 256], strides = [1, 1]} : vector<2x512xf32> to vector<2x256xf32>
    %c71 = arith.constant 71 : index
    %c0_102 = arith.constant 0 : index
    %391 = vector.load %arg4[%c71, %c0_102] : memref<98x256xf32, #tpu.memory_space<vmem>>, vector<1x256xf32>
    %392 = vector.broadcast %391 : vector<1x256xf32> to vector<2x256xf32>
    %393 = arith.mulf %390, %392 : vector<2x256xf32>
    %394 = arith.addf %389, %393 : vector<2x256xf32>
    %395 = vector.extract_strided_slice %279 {offsets = [0, 127], sizes = [2, 256], strides = [1, 1]} : vector<2x512xf32> to vector<2x256xf32>
    %c72 = arith.constant 72 : index
    %c0_103 = arith.constant 0 : index
    %396 = vector.load %arg4[%c72, %c0_103] : memref<98x256xf32, #tpu.memory_space<vmem>>, vector<1x256xf32>
    %397 = vector.broadcast %396 : vector<1x256xf32> to vector<2x256xf32>
    %398 = arith.mulf %395, %397 : vector<2x256xf32>
    %399 = arith.addf %394, %398 : vector<2x256xf32>
    %400 = vector.extract_strided_slice %279 {offsets = [0, 128], sizes = [2, 256], strides = [1, 1]} : vector<2x512xf32> to vector<2x256xf32>
    %c73 = arith.constant 73 : index
    %c0_104 = arith.constant 0 : index
    %401 = vector.load %arg4[%c73, %c0_104] : memref<98x256xf32, #tpu.memory_space<vmem>>, vector<1x256xf32>
    %402 = vector.broadcast %401 : vector<1x256xf32> to vector<2x256xf32>
    %403 = arith.mulf %400, %402 : vector<2x256xf32>
    %404 = arith.addf %399, %403 : vector<2x256xf32>
    %405 = vector.extract_strided_slice %279 {offsets = [0, 129], sizes = [2, 256], strides = [1, 1]} : vector<2x512xf32> to vector<2x256xf32>
    %c74 = arith.constant 74 : index
    %c0_105 = arith.constant 0 : index
    %406 = vector.load %arg4[%c74, %c0_105] : memref<98x256xf32, #tpu.memory_space<vmem>>, vector<1x256xf32>
    %407 = vector.broadcast %406 : vector<1x256xf32> to vector<2x256xf32>
    %408 = arith.mulf %405, %407 : vector<2x256xf32>
    %409 = arith.addf %404, %408 : vector<2x256xf32>
    %410 = vector.extract_strided_slice %279 {offsets = [0, 130], sizes = [2, 256], strides = [1, 1]} : vector<2x512xf32> to vector<2x256xf32>
    %c75 = arith.constant 75 : index
    %c0_106 = arith.constant 0 : index
    %411 = vector.load %arg4[%c75, %c0_106] : memref<98x256xf32, #tpu.memory_space<vmem>>, vector<1x256xf32>
    %412 = vector.broadcast %411 : vector<1x256xf32> to vector<2x256xf32>
    %413 = arith.mulf %410, %412 : vector<2x256xf32>
    %414 = arith.addf %409, %413 : vector<2x256xf32>
    %415 = vector.extract_strided_slice %279 {offsets = [0, 131], sizes = [2, 256], strides = [1, 1]} : vector<2x512xf32> to vector<2x256xf32>
    %c76 = arith.constant 76 : index
    %c0_107 = arith.constant 0 : index
    %416 = vector.load %arg4[%c76, %c0_107] : memref<98x256xf32, #tpu.memory_space<vmem>>, vector<1x256xf32>
    %417 = vector.broadcast %416 : vector<1x256xf32> to vector<2x256xf32>
    %418 = arith.mulf %415, %417 : vector<2x256xf32>
    %419 = arith.addf %414, %418 : vector<2x256xf32>
    %420 = vector.extract_strided_slice %279 {offsets = [0, 141], sizes = [2, 256], strides = [1, 1]} : vector<2x512xf32> to vector<2x256xf32>
    %c77 = arith.constant 77 : index
    %c0_108 = arith.constant 0 : index
    %421 = vector.load %arg4[%c77, %c0_108] : memref<98x256xf32, #tpu.memory_space<vmem>>, vector<1x256xf32>
    %422 = vector.broadcast %421 : vector<1x256xf32> to vector<2x256xf32>
    %423 = arith.mulf %420, %422 : vector<2x256xf32>
    %424 = arith.addf %419, %423 : vector<2x256xf32>
    %425 = vector.extract_strided_slice %279 {offsets = [0, 142], sizes = [2, 256], strides = [1, 1]} : vector<2x512xf32> to vector<2x256xf32>
    %c78 = arith.constant 78 : index
    %c0_109 = arith.constant 0 : index
    %426 = vector.load %arg4[%c78, %c0_109] : memref<98x256xf32, #tpu.memory_space<vmem>>, vector<1x256xf32>
    %427 = vector.broadcast %426 : vector<1x256xf32> to vector<2x256xf32>
    %428 = arith.mulf %425, %427 : vector<2x256xf32>
    %429 = arith.addf %424, %428 : vector<2x256xf32>
    %430 = vector.extract_strided_slice %279 {offsets = [0, 143], sizes = [2, 256], strides = [1, 1]} : vector<2x512xf32> to vector<2x256xf32>
    %c79 = arith.constant 79 : index
    %c0_110 = arith.constant 0 : index
    %431 = vector.load %arg4[%c79, %c0_110] : memref<98x256xf32, #tpu.memory_space<vmem>>, vector<1x256xf32>
    %432 = vector.broadcast %431 : vector<1x256xf32> to vector<2x256xf32>
    %433 = arith.mulf %430, %432 : vector<2x256xf32>
    %434 = arith.addf %429, %433 : vector<2x256xf32>
    %435 = vector.extract_strided_slice %279 {offsets = [0, 144], sizes = [2, 256], strides = [1, 1]} : vector<2x512xf32> to vector<2x256xf32>
    %c80 = arith.constant 80 : index
    %c0_111 = arith.constant 0 : index
    %436 = vector.load %arg4[%c80, %c0_111] : memref<98x256xf32, #tpu.memory_space<vmem>>, vector<1x256xf32>
    %437 = vector.broadcast %436 : vector<1x256xf32> to vector<2x256xf32>
    %438 = arith.mulf %435, %437 : vector<2x256xf32>
    %439 = arith.addf %434, %438 : vector<2x256xf32>
    %440 = vector.extract_strided_slice %279 {offsets = [0, 145], sizes = [2, 256], strides = [1, 1]} : vector<2x512xf32> to vector<2x256xf32>
    %c81 = arith.constant 81 : index
    %c0_112 = arith.constant 0 : index
    %441 = vector.load %arg4[%c81, %c0_112] : memref<98x256xf32, #tpu.memory_space<vmem>>, vector<1x256xf32>
    %442 = vector.broadcast %441 : vector<1x256xf32> to vector<2x256xf32>
    %443 = arith.mulf %440, %442 : vector<2x256xf32>
    %444 = arith.addf %439, %443 : vector<2x256xf32>
    %445 = vector.extract_strided_slice %279 {offsets = [0, 146], sizes = [2, 256], strides = [1, 1]} : vector<2x512xf32> to vector<2x256xf32>
    %c82 = arith.constant 82 : index
    %c0_113 = arith.constant 0 : index
    %446 = vector.load %arg4[%c82, %c0_113] : memref<98x256xf32, #tpu.memory_space<vmem>>, vector<1x256xf32>
    %447 = vector.broadcast %446 : vector<1x256xf32> to vector<2x256xf32>
    %448 = arith.mulf %445, %447 : vector<2x256xf32>
    %449 = arith.addf %444, %448 : vector<2x256xf32>
    %450 = vector.extract_strided_slice %279 {offsets = [0, 147], sizes = [2, 256], strides = [1, 1]} : vector<2x512xf32> to vector<2x256xf32>
    %c83 = arith.constant 83 : index
    %c0_114 = arith.constant 0 : index
    %451 = vector.load %arg4[%c83, %c0_114] : memref<98x256xf32, #tpu.memory_space<vmem>>, vector<1x256xf32>
    %452 = vector.broadcast %451 : vector<1x256xf32> to vector<2x256xf32>
    %453 = arith.mulf %450, %452 : vector<2x256xf32>
    %454 = arith.addf %449, %453 : vector<2x256xf32>
    %455 = vector.extract_strided_slice %279 {offsets = [0, 157], sizes = [2, 256], strides = [1, 1]} : vector<2x512xf32> to vector<2x256xf32>
    %c84 = arith.constant 84 : index
    %c0_115 = arith.constant 0 : index
    %456 = vector.load %arg4[%c84, %c0_115] : memref<98x256xf32, #tpu.memory_space<vmem>>, vector<1x256xf32>
    %457 = vector.broadcast %456 : vector<1x256xf32> to vector<2x256xf32>
    %458 = arith.mulf %455, %457 : vector<2x256xf32>
    %459 = arith.addf %454, %458 : vector<2x256xf32>
    %460 = vector.extract_strided_slice %279 {offsets = [0, 158], sizes = [2, 256], strides = [1, 1]} : vector<2x512xf32> to vector<2x256xf32>
    %c85 = arith.constant 85 : index
    %c0_116 = arith.constant 0 : index
    %461 = vector.load %arg4[%c85, %c0_116] : memref<98x256xf32, #tpu.memory_space<vmem>>, vector<1x256xf32>
    %462 = vector.broadcast %461 : vector<1x256xf32> to vector<2x256xf32>
    %463 = arith.mulf %460, %462 : vector<2x256xf32>
    %464 = arith.addf %459, %463 : vector<2x256xf32>
    %465 = vector.extract_strided_slice %279 {offsets = [0, 159], sizes = [2, 256], strides = [1, 1]} : vector<2x512xf32> to vector<2x256xf32>
    %c86 = arith.constant 86 : index
    %c0_117 = arith.constant 0 : index
    %466 = vector.load %arg4[%c86, %c0_117] : memref<98x256xf32, #tpu.memory_space<vmem>>, vector<1x256xf32>
    %467 = vector.broadcast %466 : vector<1x256xf32> to vector<2x256xf32>
    %468 = arith.mulf %465, %467 : vector<2x256xf32>
    %469 = arith.addf %464, %468 : vector<2x256xf32>
    %470 = vector.extract_strided_slice %279 {offsets = [0, 160], sizes = [2, 256], strides = [1, 1]} : vector<2x512xf32> to vector<2x256xf32>
    %c87 = arith.constant 87 : index
    %c0_118 = arith.constant 0 : index
    %471 = vector.load %arg4[%c87, %c0_118] : memref<98x256xf32, #tpu.memory_space<vmem>>, vector<1x256xf32>
    %472 = vector.broadcast %471 : vector<1x256xf32> to vector<2x256xf32>
    %473 = arith.mulf %470, %472 : vector<2x256xf32>
    %474 = arith.addf %469, %473 : vector<2x256xf32>
    %475 = vector.extract_strided_slice %279 {offsets = [0, 161], sizes = [2, 256], strides = [1, 1]} : vector<2x512xf32> to vector<2x256xf32>
    %c88 = arith.constant 88 : index
    %c0_119 = arith.constant 0 : index
    %476 = vector.load %arg4[%c88, %c0_119] : memref<98x256xf32, #tpu.memory_space<vmem>>, vector<1x256xf32>
    %477 = vector.broadcast %476 : vector<1x256xf32> to vector<2x256xf32>
    %478 = arith.mulf %475, %477 : vector<2x256xf32>
    %479 = arith.addf %474, %478 : vector<2x256xf32>
    %480 = vector.extract_strided_slice %279 {offsets = [0, 162], sizes = [2, 256], strides = [1, 1]} : vector<2x512xf32> to vector<2x256xf32>
    %c89 = arith.constant 89 : index
    %c0_120 = arith.constant 0 : index
    %481 = vector.load %arg4[%c89, %c0_120] : memref<98x256xf32, #tpu.memory_space<vmem>>, vector<1x256xf32>
    %482 = vector.broadcast %481 : vector<1x256xf32> to vector<2x256xf32>
    %483 = arith.mulf %480, %482 : vector<2x256xf32>
    %484 = arith.addf %479, %483 : vector<2x256xf32>
    %485 = vector.extract_strided_slice %279 {offsets = [0, 163], sizes = [2, 256], strides = [1, 1]} : vector<2x512xf32> to vector<2x256xf32>
    %c90 = arith.constant 90 : index
    %c0_121 = arith.constant 0 : index
    %486 = vector.load %arg4[%c90, %c0_121] : memref<98x256xf32, #tpu.memory_space<vmem>>, vector<1x256xf32>
    %487 = vector.broadcast %486 : vector<1x256xf32> to vector<2x256xf32>
    %488 = arith.mulf %485, %487 : vector<2x256xf32>
    %489 = arith.addf %484, %488 : vector<2x256xf32>
    %490 = vector.extract_strided_slice %279 {offsets = [0, 173], sizes = [2, 256], strides = [1, 1]} : vector<2x512xf32> to vector<2x256xf32>
    %c91 = arith.constant 91 : index
    %c0_122 = arith.constant 0 : index
    %491 = vector.load %arg4[%c91, %c0_122] : memref<98x256xf32, #tpu.memory_space<vmem>>, vector<1x256xf32>
    %492 = vector.broadcast %491 : vector<1x256xf32> to vector<2x256xf32>
    %493 = arith.mulf %490, %492 : vector<2x256xf32>
    %494 = arith.addf %489, %493 : vector<2x256xf32>
    %495 = vector.extract_strided_slice %279 {offsets = [0, 174], sizes = [2, 256], strides = [1, 1]} : vector<2x512xf32> to vector<2x256xf32>
    %c92 = arith.constant 92 : index
    %c0_123 = arith.constant 0 : index
    %496 = vector.load %arg4[%c92, %c0_123] : memref<98x256xf32, #tpu.memory_space<vmem>>, vector<1x256xf32>
    %497 = vector.broadcast %496 : vector<1x256xf32> to vector<2x256xf32>
    %498 = arith.mulf %495, %497 : vector<2x256xf32>
    %499 = arith.addf %494, %498 : vector<2x256xf32>
    %500 = vector.extract_strided_slice %279 {offsets = [0, 175], sizes = [2, 256], strides = [1, 1]} : vector<2x512xf32> to vector<2x256xf32>
    %c93 = arith.constant 93 : index
    %c0_124 = arith.constant 0 : index
    %501 = vector.load %arg4[%c93, %c0_124] : memref<98x256xf32, #tpu.memory_space<vmem>>, vector<1x256xf32>
    %502 = vector.broadcast %501 : vector<1x256xf32> to vector<2x256xf32>
    %503 = arith.mulf %500, %502 : vector<2x256xf32>
    %504 = arith.addf %499, %503 : vector<2x256xf32>
    %505 = vector.extract_strided_slice %279 {offsets = [0, 176], sizes = [2, 256], strides = [1, 1]} : vector<2x512xf32> to vector<2x256xf32>
    %c94 = arith.constant 94 : index
    %c0_125 = arith.constant 0 : index
    %506 = vector.load %arg4[%c94, %c0_125] : memref<98x256xf32, #tpu.memory_space<vmem>>, vector<1x256xf32>
    %507 = vector.broadcast %506 : vector<1x256xf32> to vector<2x256xf32>
    %508 = arith.mulf %505, %507 : vector<2x256xf32>
    %509 = arith.addf %504, %508 : vector<2x256xf32>
    %510 = vector.extract_strided_slice %279 {offsets = [0, 177], sizes = [2, 256], strides = [1, 1]} : vector<2x512xf32> to vector<2x256xf32>
    %c95 = arith.constant 95 : index
    %c0_126 = arith.constant 0 : index
    %511 = vector.load %arg4[%c95, %c0_126] : memref<98x256xf32, #tpu.memory_space<vmem>>, vector<1x256xf32>
    %512 = vector.broadcast %511 : vector<1x256xf32> to vector<2x256xf32>
    %513 = arith.mulf %510, %512 : vector<2x256xf32>
    %514 = arith.addf %509, %513 : vector<2x256xf32>
    %515 = vector.extract_strided_slice %279 {offsets = [0, 178], sizes = [2, 256], strides = [1, 1]} : vector<2x512xf32> to vector<2x256xf32>
    %c96 = arith.constant 96 : index
    %c0_127 = arith.constant 0 : index
    %516 = vector.load %arg4[%c96, %c0_127] : memref<98x256xf32, #tpu.memory_space<vmem>>, vector<1x256xf32>
    %517 = vector.broadcast %516 : vector<1x256xf32> to vector<2x256xf32>
    %518 = arith.mulf %515, %517 : vector<2x256xf32>
    %519 = arith.addf %514, %518 : vector<2x256xf32>
    %520 = vector.extract_strided_slice %279 {offsets = [0, 179], sizes = [2, 256], strides = [1, 1]} : vector<2x512xf32> to vector<2x256xf32>
    %c97 = arith.constant 97 : index
    %c0_128 = arith.constant 0 : index
    %521 = vector.load %arg4[%c97, %c0_128] : memref<98x256xf32, #tpu.memory_space<vmem>>, vector<1x256xf32>
    %522 = vector.broadcast %521 : vector<1x256xf32> to vector<2x256xf32>
    %523 = arith.mulf %520, %522 : vector<2x256xf32>
    %524 = arith.addf %519, %523 : vector<2x256xf32>
    %525 = arith.negf %524 : vector<2x256xf32>
    %526 = math.exp %525 : vector<2x256xf32>
    %cst_129 = arith.constant 1.000000e+00 : f32
    %527 = vector.broadcast %cst_129 : f32 to vector<2x256xf32>
    %528 = arith.addf %527, %526 : vector<2x256xf32>
    %529 = arith.divf %527, %528 : vector<2x256xf32>
    %530 = vector.shape_cast %529 : vector<2x256xf32> to vector<2x1x256xf32>
    %531 = vector.broadcast %530 : vector<2x1x256xf32> to vector<2x4x256xf32>
    %532 = arith.mulf %16, %531 : vector<2x4x256xf32>
    %c0_130 = arith.constant 0 : index
    %c0_131 = arith.constant 0 : index
    %c0_132 = arith.constant 0 : index
    %533 = vector.load %arg5[%c0_130, %c0_131, %c0_132] : memref<2x4x256xf32, #tpu.memory_space<vmem>>, vector<2x4x256xf32>
    tpu.vector_store %arg5[%c0_130, %c0_131, %c0_132], %532 {strides = array<i32>} : memref<2x4x256xf32, #tpu.memory_space<vmem>>, vector<2x4x256xf32>,
    return
  }
  func.func @transform_0(%arg0: i32) -> (i32, i32, i32) {
    %c0_i32 = arith.constant 0 : i32
    %c0_i32_0 = arith.constant 0 : i32
    %c0_i32_1 = arith.constant 0 : i32
    return %arg0, %c0_i32, %c0_i32_0 : i32, i32, i32
  }
  func.func @transform_1(%arg0: i32) -> (i32, i32) {
    %c0_i32 = arith.constant 0 : i32
    %c0_i32_0 = arith.constant 0 : i32
    %c0_i32_1 = arith.constant 0 : i32
    return %c0_i32, %c0_i32_0 : i32, i32
  }
  func.func @transform_2(%arg0: i32) -> (i32, i32) {
    %c0_i32 = arith.constant 0 : i32
    %c0_i32_0 = arith.constant 0 : i32
    %c0_i32_1 = arith.constant 0 : i32
    return %c0_i32, %c0_i32_0 : i32, i32
  }
  func.func @transform_3(%arg0: i32) -> (i32, i32) {
    %c0_i32 = arith.constant 0 : i32
    %c0_i32_0 = arith.constant 0 : i32
    %c0_i32_1 = arith.constant 0 : i32
    return %c0_i32, %c0_i32_0 : i32, i32
  }
  func.func @transform_4(%arg0: i32) -> (i32, i32, i32) {
    %c0_i32 = arith.constant 0 : i32
    %c0_i32_0 = arith.constant 0 : i32
    %c0_i32_1 = arith.constant 0 : i32
    return %arg0, %c0_i32, %c0_i32_0 : i32, i32, i32
  }
}

</mosaic_0001>

<llo_original>
// kernel: tpu_custom_call.1
$region0: #{tpu_custom_call.1}
  #allocation0 [shape = 'u32[]', space=smem, size = 0x4, offset = 0x4, fixed_abs, tag = 'smem constant byte address 0x4 - core index']
  #allocation1 [shape = 'u32[144,128]{1,0:T(1,128)}', space=vmem, size = 0x12000, scoped, tag = 'internal scratch']
  #allocation2 [shape = 'f32[2,2,512]{2,1,0:T(2,128)}', space=vmem, size = 0x2000, scoped, tag = 'scratch operand']
  %s0 = inlined_call_operand.hbm [shape: f32[2,4,256], index: 0, kind: input, shape index: {}]
  %s1 = inlined_call_operand.hbm [shape: f32[4,4], index: 1, kind: input, shape index: {}]
  %s2 = inlined_call_operand.vmem [shape: f32[1,4], index: 2, kind: input, shape index: {}]
  %s3 = inlined_call_operand.hbm [shape: f32[98,256], index: 3, kind: input, shape index: {}]
  %s4 = inlined_call_operand.hbm [shape: f32[2,4,256], index: 4, kind: output, shape index: {}]
  %s5 = sld [smem:[#allocation0]]
  $region38: #{tpu_custom_call.1} parent=0
    _
  %s7 = ssub.s32 1, %s5
  %s8 = scalar_select 0, %s7, %s5
  $region1: #{tpu_custom_call.1} parent=0
    #allocation3 [shape = 'u8[8192]{0}', space=vmem, size = 0x2000, scoped, tag = 'input window, operand 0, single buffered']
    #allocation4 [shape = 's32[1]{0}', space=sflag, size = 0x4, scoped, tag = 'scoped memory for tpu_custom_call.1']
    #allocation5 [shape = 's32[1]{0}', space=sflag, size = 0x4, scoped, tag = 'scoped memory for tpu_custom_call.1']
    #allocation6 [shape = 'u8[2048]{0}', space=vmem, size = 0x800, scoped, tag = 'input window, operand 1, single buffered']
    #allocation7 [shape = 's32[1]{0}', space=sflag, size = 0x4, scoped, tag = 'scoped memory for tpu_custom_call.1']
    #allocation8 [shape = 'u8[106496]{0}', space=vmem, size = 0x1a000, scoped, tag = 'input window, operand 3, single buffered']
    #allocation9 [shape = 'u8[8192]{0}', space=vmem, size = 0x2000, scoped, tag = 'output window, operand 0, single buffered']
    %9 = vsyncpa [#allocation4], 0
    %10 = vsyncpa [#allocation7], 0
    %11 = vsyncpa [#allocation5], 0
    // Predicated region
    $region2: #{tpu_custom_call.1} parent=1 // pred_check
      _
    $region3: #{tpu_custom_call.1} parent=1 // pred_check_branch
      %13 = sbr.rel (0) target = $region5
    $region4: #{tpu_custom_call.1} parent=1 // pred_region
      %s15 = ssub.s32 256, 256
      %16 = vsyncadd [#allocation4], %s15
      %s17 = sshll.u32 [#allocation3], 4
      %s18 = int_to_ptr.vmem [resolvable:$true] %s17
      %23 = dma.hbm_to_vmem [thread:$0]  %s0, 256, %s18, [#allocation4], 128, 128, 8
    $region5: #{tpu_custom_call.1} parent=1 // pred_fallthru
      _
    // Predicated region
    $region6: #{tpu_custom_call.1} parent=1 // pred_check
      _
    $region7: #{tpu_custom_call.1} parent=1 // pred_check_branch
      %25 = sbr.rel (0) target = $region9
    $region8: #{tpu_custom_call.1} parent=1 // pred_region
      %s27 = ssub.s32 64, 64
      %28 = vsyncadd [#allocation7], %s27
      %s30 = sshll.u32 [#allocation6], 4
      %s31 = int_to_ptr.vmem [resolvable:$true] %s30
      %33 = dma.hbm_to_vmem [thread:$0]  %s1, 64, %s31, [#allocation7]
    $region9: #{tpu_custom_call.1} parent=1 // pred_fallthru
      _
    // Predicated region
    $region10: #{tpu_custom_call.1} parent=1 // pred_check
      _
    $region11: #{tpu_custom_call.1} parent=1 // pred_check_branch
      %35 = sbr.rel (0) target = $region13
    $region12: #{tpu_custom_call.1} parent=1 // pred_region
      _
    $region13: #{tpu_custom_call.1} parent=1 // pred_fallthru
      _
    // Predicated region
    $region14: #{tpu_custom_call.1} parent=1 // pred_check
      _
    $region15: #{tpu_custom_call.1} parent=1 // pred_check_branch
      %37 = sbr.rel (0) target = $region17
    $region16: #{tpu_custom_call.1} parent=1 // pred_region
      %s39 = ssub.s32 3328, 3328
      %40 = vsyncadd [#allocation7], %s39
      %s41 = sshll.u32 [#allocation8], 4
      %s42 = int_to_ptr.vmem [resolvable:$true] %s41
      %47 = dma.hbm_to_vmem [thread:$0]  %s3, 3328, %s42, [#allocation7], 256, 256, 16
    $region17: #{tpu_custom_call.1} parent=1 // pred_fallthru
      _
    // Predicated region
    $region18: #{tpu_custom_call.1} parent=1 // pred_check
      _
    $region19: #{tpu_custom_call.1} parent=1 // pred_check_branch
      %49 = sbr.rel (0) target = $region21
    $region20: #{tpu_custom_call.1} parent=1 // pred_region
      %50 = dma.done [#allocation4], 256
    $region21: #{tpu_custom_call.1} parent=1 // pred_fallthru
      _
    // Predicated region
    $region22: #{tpu_custom_call.1} parent=1 // pred_check
      _
    $region23: #{tpu_custom_call.1} parent=1 // pred_check_branch
      %52 = sbr.rel (0) target = $region25
    $region24: #{tpu_custom_call.1} parent=1 // pred_region
      %53 = dma.done [#allocation7], 64
    $region25: #{tpu_custom_call.1} parent=1 // pred_fallthru
      _
    // Predicated region
    $region26: #{tpu_custom_call.1} parent=1 // pred_check
      _
    $region27: #{tpu_custom_call.1} parent=1 // pred_check_branch
      %55 = sbr.rel (0) target = $region29
    $region28: #{tpu_custom_call.1} parent=1 // pred_region
      %56 = dma.done [#allocation7], 3328
    $region29: #{tpu_custom_call.1} parent=1 // pred_fallthru
      _
    %v57 = vld [vmem:[#allocation3] sm:$0xff]
    %v58 = vld [vmem:[#allocation3 + $0x8] sm:$0xff]
    %v61 = vcombine.high %v57, %v57
    %v62 = vcombine.high %v58, %v58
    %vm65 = vcmask 1043456
    %v66 = vsel %vm65, %v57, 0.0
    %v67 = vsel %vm65, %v61, 0.0
    %v68 = vadd.f32 %v66, %v67
    %69 = vadd.xlane.f32.xlu0 %v68
    %v70 = vpop.xlane.xlu0 %69
    %v71 = vsel %vm65, %v58, 0.0
    %v72 = vsel %vm65, %v62, 0.0
    %v73 = vadd.f32 %v71, %v72
    %74 = vadd.xlane.f32.xlu0 %v73
    %v75 = vpop.xlane.xlu0 %74
    %v76 = vmul.f32 %v70, 0.00390625
    %v77 = vmul.f32 %v75, 0.00390625
    %v78 = vld [vmem:[#allocation6] sm:$0xf]
    %v79 = vld [vmem:[%s2] sm:$0x1]
    %v81 = vlaneseq
    %v82 = vshrl.u32 %v81, 7
    %v83 = vsub.s32 0, %v82
    %v84 = vrot.slane %v79, %v83
    %v88 = vlaneseq
    %v89 = vand.u32 %v88, 127
    %v90 = vlaneseq
    %v91 = vshrl.u32 %v90, 7
    %v92 = vsub.s32 %v89, %v91
    %v93 = vrot.slane %v76, %v92
    %v94 = vlaneseq
    %v95 = vshrl.u32 %v94, 7
    %v96 = vsub.s32 %v89, %v95
    %v97 = vrot.slane %v77, %v96
    %vm98 = vcmask 1041409
    %v99 = vsel %vm98, %v97, %v93
    %vm100 = vcmask 31744
    %v101 = vsel %vm100, %v99, 0
    %v104 = vsel %vm65, %v78, 0
    %106 = vmatprep.subr.mxu0 0.0
    %107 = vmatpush1.msra.mxu0 0.0
    %108 = vmatprep.subr.mxu0 0.0
    %109 = vmatpush1.msra.mxu0 0.0
    %110 = vmatprep.subr.mxu0 0.0
    %111 = vmatpush1.msra.mxu0 0.0
    %112 = vmatprep.subr.mxu0 0.0
    %113 = vmatpush1.msra.mxu0 0.0
    %114 = vmatprep.subr.mxu0 0.0
    %115 = vmatpush1.msra.mxu0 0.0
    %116 = vmatprep.subr.mxu0 0.0
    %117 = vmatpush1.msra.mxu0 0.0
    %118 = vmatprep.subr.mxu0 0.0
    %119 = vmatpush1.msra.mxu0 0.0
    %120 = vmatprep.subr.mxu0 0.0
    %121 = vmatpush1.msra.mxu0 0.0
    %122 = vmatprep.subr.mxu0 0.0
    %123 = vmatpush1.msra.mxu0 0.0
    %124 = vmatprep.subr.mxu0 0.0
    %125 = vmatpush1.msra.mxu0 0.0
    %126 = vmatprep.subr.mxu0 0.0
    %127 = vmatpush1.msra.mxu0 0.0
    %128 = vmatprep.subr.mxu0 0.0
    %129 = vmatpush1.msra.mxu0 0.0
    %130 = vmatprep.subr.mxu0 0.0
    %131 = vmatpush1.msra.mxu0 0.0
    %132 = vmatprep.subr.mxu0 0.0
    %133 = vmatpush1.msra.mxu0 0.0
    %134 = vmatprep.subr.mxu0 0.0
    %135 = vmatpush1.msra.mxu0 0.0
    %136 = vmatprep.subr.mxu0 0.0
    %137 = vmatpush1.msra.mxu0 %v104
    %138 = vmatprep.subr.mxu0 0.0
    %139 = vmatpush2.msra.mxu0 0.0
    %140 = vmatprep.subr.mxu0 0.0
    %141 = vmatpush2.msra.mxu0 0.0
    %142 = vmatprep.subr.mxu0 0.0
    %143 = vmatpush2.msra.mxu0 0.0
    %144 = vmatprep.subr.mxu0 0.0
    %145 = vmatpush2.msra.mxu0 0.0
    %146 = vmatprep.subr.mxu0 0.0
    %147 = vmatpush2.msra.mxu0 0.0
    %148 = vmatprep.subr.mxu0 0.0
    %149 = vmatpush2.msra.mxu0 0.0
    %150 = vmatprep.subr.mxu0 0.0
    %151 = vmatpush2.msra.mxu0 0.0
    %152 = vmatprep.subr.mxu0 0.0
    %153 = vmatpush2.msra.mxu0 0.0
    %154 = vmatprep.subr.mxu0 0.0
    %155 = vmatpush2.msra.mxu0 0.0
    %156 = vmatprep.subr.mxu0 0.0
    %157 = vmatpush2.msra.mxu0 0.0
    %158 = vmatprep.subr.mxu0 0.0
    %159 = vmatpush2.msra.mxu0 0.0
    %160 = vmatprep.subr.mxu0 0.0
    %161 = vmatpush2.msra.mxu0 0.0
    %162 = vmatprep.subr.mxu0 0.0
    %163 = vmatpush2.msra.mxu0 0.0
    %164 = vmatprep.subr.mxu0 0.0
    %165 = vmatpush2.msra.mxu0 0.0
    %166 = vmatprep.subr.mxu0 0.0
    %167 = vmatpush2.msra.mxu0 0.0
    %168 = vmatprep.subr.mxu0 0.0
    %169 = vmatpush2.msra.mxu0 0.0
    %170 = vmatprep.mubr.f32.mxu0 0.0
    %171 = vmatmul.mubr.f32.gmra.mxu0 %v101
    %v172 = vpop.f32.mrf.mxu0
    %v173 = vadd.f32 %v84, %v172
    %v174 = vpop.f32.mrf.mxu0
    %175 = vdwg.mxu0
    %v176 = vxor.u32 %v173, 2147483648
    %v177 = vmul.f32 %v176, 1.442695
    %v178 = vpow.pop %v177
    %v179 = vadd.f32 %v178, 1.0
    %v180 = vrcp.pop %v179
    %v181 = vmul.f32 1.0, %v180
    %v182 = vlaneseq
    %v183 = vshrl.u32 %v182, 7
    %v184 = vsub.s32 0, %v183
    %v185 = vrot.slane %v181, %v184
    %187 = vbcast.lane.b32.xlu0 %v185, 256
    %v188 = vpop.permute.xlu0 %187
    %v189 = vlaneseq
    %v190 = vshrl.u32 %v189, 7
    %v191 = vsub.s32 1, %v190
    %v192 = vrot.slane %v181, %v191
    %194 = vbcast.lane.b32.xlu0 %v192, 256
    %v195 = vpop.permute.xlu0 %194
    %v199 = vunpack.c.l.s4 839922192
    %v200 = vunpack.c.0.s8 %v199
    %v201 = vlaneseq
    %v202 = vshrl.u32 %v201, 7
    %v203 = vsub.s32 %v200, %v202
    %v204 = vrot.slane %v188, %v203
    %v206 = vunpack.c.l.s4 839922192
    %v207 = vunpack.c.0.s8 %v206
    %v208 = vlaneseq
    %v209 = vshrl.u32 %v208, 7
    %v210 = vsub.s32 %v207, %v209
    %v211 = vrot.slane %v195, %v210
    %v214 = vmul.f32 %v57, %v204
    %v215 = vmul.f32 %v58, %v211
    %v218 = vcombine.high %v214, %v214
    %v219 = vcombine.high %v215, %v215
    %v222 = vsel %vm65, %v214, 0.0
    %v223 = vrot.slane %v222, 4
    %v224 = vadd.f32 %v222, %v223
    %v225 = vrot.slane %v224, 2
    %v226 = vadd.f32 %v224, %v225
    %v227 = vrot.slane %v226, 1
    %v228 = vadd.f32 %v226, %v227
    %v229 = vsel %vm65, %v218, 0.0
    %v230 = vrot.slane %v229, 4
    %v231 = vadd.f32 %v229, %v230
    %v232 = vrot.slane %v231, 2
    %v233 = vadd.f32 %v231, %v232
    %v234 = vrot.slane %v233, 1
    %v235 = vadd.f32 %v233, %v234
    %v236 = vsel %vm65, %v215, 0.0
    %v237 = vrot.slane %v236, 4
    %v238 = vadd.f32 %v236, %v237
    %v239 = vrot.slane %v238, 2
    %v240 = vadd.f32 %v238, %v239
    %v241 = vrot.slane %v240, 1
    %v242 = vadd.f32 %v240, %v241
    %v243 = vsel %vm65, %v219, 0.0
    %v244 = vrot.slane %v243, 4
    %v245 = vadd.f32 %v243, %v244
    %v246 = vrot.slane %v245, 2
    %v247 = vadd.f32 %v245, %v246
    %v248 = vrot.slane %v247, 1
    %v249 = vadd.f32 %v247, %v248
    %v250 = vrcp.pop 4.0
    %v251 = vmul.f32 %v228, %v250
    %v252 = vmul.f32 %v235, %v250
    %v253 = vmul.f32 %v242, %v250
    %v254 = vmul.f32 %v249, %v250
    %v255 = vsel %vm65, %v214, -inf
    %v256 = vrot.slane %v255, 4
    %v257 = vmax.f32 %v255, %v256
    %v258 = vrot.slane %v257, 2
    %v259 = vmax.f32 %v257, %v258
    %v260 = vrot.slane %v259, 1
    %v261 = vmax.f32 %v259, %v260
    %v262 = vsel %vm65, %v218, -inf
    %v263 = vrot.slane %v262, 4
    %v264 = vmax.f32 %v262, %v263
    %v265 = vrot.slane %v264, 2
    %v266 = vmax.f32 %v264, %v265
    %v267 = vrot.slane %v266, 1
    %v268 = vmax.f32 %v266, %v267
    %v269 = vsel %vm65, %v215, -inf
    %v270 = vrot.slane %v269, 4
    %v271 = vmax.f32 %v269, %v270
    %v272 = vrot.slane %v271, 2
    %v273 = vmax.f32 %v271, %v272
    %v274 = vrot.slane %v273, 1
    %v275 = vmax.f32 %v273, %v274
    %v276 = vsel %vm65, %v219, -inf
    %v277 = vrot.slane %v276, 4
    %v278 = vmax.f32 %v276, %v277
    %v279 = vrot.slane %v278, 2
    %v280 = vmax.f32 %v278, %v279
    %v281 = vrot.slane %v280, 1
    %v282 = vmax.f32 %v280, %v281
    %283 = vst [vmem:[#allocation2] sm:$0x3] 0.0
    %284 = vst [vmem:[#allocation2 + $0x8] sm:$0x3] 0.0
    %285 = vst [vmem:[#allocation2 + $0x6] sm:$0x3] 0.0
    %286 = vst [vmem:[#allocation2 + $0xe] sm:$0x3] 0.0
    %v291 = vcombine.low %v251, %v252
    %v293 = vunpack.c.l.s4 1966171168
    %v294 = vunpack.c.0.s8 %v293
    %v295 = vlaneseq
    %v296 = vshrl.u32 %v295, 7
    %v297 = vsub.s32 %v294, %v296
    %v298 = vrot.slane %v291, %v297
    %v300 = vunpack.c.l.s4 1966171168
    %v301 = vunpack.c.0.s8 %v300
    %v302 = vlaneseq
    %v303 = vshrl.u32 %v302, 7
    %v304 = vsub.s32 %v301, %v303
    %v305 = vrot.slane %v298, %v304
    %v306 = vcombine.low %v253, %v254
    %v308 = vunpack.c.l.s4 1966171168
    %v309 = vunpack.c.0.s8 %v308
    %v310 = vlaneseq
    %v311 = vshrl.u32 %v310, 7
    %v312 = vsub.s32 %v309, %v311
    %v313 = vrot.slane %v306, %v312
    %v315 = vunpack.c.l.s4 1966171168
    %v316 = vunpack.c.0.s8 %v315
    %v317 = vlaneseq
    %v318 = vshrl.u32 %v317, 7
    %v319 = vsub.s32 %v316, %v318
    %v320 = vrot.slane %v313, %v319
    %v323 = vlaneseq
    %vm324 = vcmp.ge.s32.totalorder %v323, 0
    %vm325 = vcmp.lt.s32.totalorder %v323, 256
    %vm326 = vmand %vm324, %vm325
    %s327 = scalar_lea.vmem [#allocation2], 2
    %328 = vst.msk [vmem:[%s327] ss:$2 sm:$0x3] %vm326, %v305
    %s329 = scalar_lea.vmem [#allocation2], 10
    %330 = vst.msk [vmem:[%s329] ss:$2 sm:$0x3] %vm326, %v320
    %v335 = vcombine.low %v261, %v268
    %v337 = vunpack.c.l.s4 1966171168
    %v338 = vunpack.c.0.s8 %v337
    %v339 = vlaneseq
    %v340 = vshrl.u32 %v339, 7
    %v341 = vsub.s32 %v338, %v340
    %v342 = vrot.slane %v335, %v341
    %v344 = vunpack.c.l.s4 1966171168
    %v345 = vunpack.c.0.s8 %v344
    %v346 = vlaneseq
    %v347 = vshrl.u32 %v346, 7
    %v348 = vsub.s32 %v345, %v347
    %v349 = vrot.slane %v342, %v348
    %v350 = vcombine.low %v275, %v282
    %v352 = vunpack.c.l.s4 1966171168
    %v353 = vunpack.c.0.s8 %v352
    %v354 = vlaneseq
    %v355 = vshrl.u32 %v354, 7
    %v356 = vsub.s32 %v353, %v355
    %v357 = vrot.slane %v350, %v356
    %v359 = vunpack.c.l.s4 1966171168
    %v360 = vunpack.c.0.s8 %v359
    %v361 = vlaneseq
    %v362 = vshrl.u32 %v361, 7
    %v363 = vsub.s32 %v360, %v362
    %v364 = vrot.slane %v357, %v363
    %s367 = scalar_lea.vmem [#allocation2], 3
    %368 = vst.msk [vmem:[%s367] ss:$2 sm:$0x3] %vm326, %v349
    %s369 = scalar_lea.vmem [#allocation2], 11
    %370 = vst.msk [vmem:[%s369] ss:$2 sm:$0x3] %vm326, %v364
    %v371 = vld [vmem:[#allocation2] ss:$2 sm:$0xf]
    %s372 = scalar_lea.vmem [#allocation2], 8
    %v373 = vld [vmem:[%s372] ss:$2 sm:$0xf]
    %v374 = vld [vmem:[#allocation8] ss:$8 sm:$0x3]
    %v376 = vlaneseq
    %v377 = vshrl.u32 %v376, 7
    %v378 = vsub.s32 0, %v377
    %v379 = vrot.slane %v374, %v378
    %v380 = vlaneseq
    %v381 = vshrl.u32 %v380, 7
    %v382 = vsub.s32 1, %v381
    %v383 = vrot.slane %v374, %v382
    %v384 = vcombine.low %v379, %v383
    %v386 = vunpack.c.l.s4 1966171168
    %v387 = vunpack.c.0.s8 %v386
    %v388 = vlaneseq
    %v389 = vshrl.u32 %v388, 7
    %v390 = vsub.s32 %v387, %v389
    %v391 = vrot.slane %v384, %v390
    %v392 = vcombine.high %v391, %v391
    %v394 = vunpack.c.l.s4 1966171168
    %v395 = vunpack.c.0.s8 %v394
    %v396 = vlaneseq
    %v397 = vshrl.u32 %v396, 7
    %v398 = vsub.s32 %v395, %v397
    %v399 = vrot.slane %v391, %v398
    %v401 = vunpack.c.l.s4 1966171168
    %v402 = vunpack.c.0.s8 %v401
    %v403 = vlaneseq
    %v404 = vshrl.u32 %v403, 7
    %v405 = vsub.s32 %v402, %v404
    %v406 = vrot.slane %v392, %v405
    %407 = vrot.lane.b32.xlu0 %v399, 77
    %v408 = vpop.permute.xlu0 %407
    %409 = vrot.lane.b32.xlu0 %v406, 77
    %v410 = vpop.permute.xlu0 %409
    %v411 = vrot.slane %v408, 7
    %v412 = vrot.slane %v410, 7
    %vm413 = vcmask 629760
    %v414 = vsel %vm413, %v411, %v408
    %v415 = vsel %vm413, %v412, %v410
    %v418 = vmul.f32 %v371, %v414
    %v419 = vmul.f32 %v373, %v415
    %v420 = vadd.f32 %v418, 0.0
    %v421 = vadd.f32 %v419, 0.0
    %s422 = scalar_lea.vmem [#allocation8], 1
    %v423 = vld [vmem:[%s422] ss:$8 sm:$0x3]
    %v425 = vlaneseq
    %v426 = vshrl.u32 %v425, 7
    %v427 = vsub.s32 0, %v426
    %v428 = vrot.slane %v423, %v427
    %v429 = vlaneseq
    %v430 = vshrl.u32 %v429, 7
    %v431 = vsub.s32 1, %v430
    %v432 = vrot.slane %v423, %v431
    %v433 = vcombine.low %v428, %v432
    %v435 = vunpack.c.l.s4 1966171168
    %v436 = vunpack.c.0.s8 %v435
    %v437 = vlaneseq
    %v438 = vshrl.u32 %v437, 7
    %v439 = vsub.s32 %v436, %v438
    %v440 = vrot.slane %v433, %v439
    %v441 = vcombine.high %v440, %v440
    %v443 = vunpack.c.l.s4 1966171168
    %v444 = vunpack.c.0.s8 %v443
    %v445 = vlaneseq
    %v446 = vshrl.u32 %v445, 7
    %v447 = vsub.s32 %v444, %v446
    %v448 = vrot.slane %v440, %v447
    %v450 = vunpack.c.l.s4 1966171168
    %v451 = vunpack.c.0.s8 %v450
    %v452 = vlaneseq
    %v453 = vshrl.u32 %v452, 7
    %v454 = vsub.s32 %v451, %v453
    %v455 = vrot.slane %v441, %v454
    %456 = vrot.lane.b32.xlu0 %v448, 78
    %v457 = vpop.permute.xlu0 %456
    %458 = vrot.lane.b32.xlu0 %v455, 78
    %v459 = vpop.permute.xlu0 %458
    %v460 = vrot.slane %v457, 7
    %v461 = vrot.slane %v459, 7
    %vm462 = vcmask 637952
    %v463 = vsel %vm462, %v460, %v457
    %v464 = vsel %vm462, %v461, %v459
    %v467 = vmul.f32 %v371, %v463
    %v468 = vmul.f32 %v373, %v464
    %471 = vrot.lane.b32.xlu0 %v467, 127
    %v472 = vpop.permute.xlu0 %471
    %473 = vrot.lane.b32.xlu0 %v468, 127
    %v474 = vpop.permute.xlu0 %473
    %v475 = vrot.slane %v472, 1
    %v476 = vrot.slane %v474, 1
    %vm477 = vcmask 1039360
    %v478 = vsel %vm477, %v472, %v475
    %v479 = vsel %vm477, %v474, %v476
    %v482 = vadd.f32 %v420, %v478
    %v483 = vadd.f32 %v421, %v479
    %s484 = scalar_lea.vmem [#allocation8], 2
    %v485 = vld [vmem:[%s484] ss:$8 sm:$0x3]
    %v487 = vlaneseq
    %v488 = vshrl.u32 %v487, 7
    %v489 = vsub.s32 0, %v488
    %v490 = vrot.slane %v485, %v489
    %v491 = vlaneseq
    %v492 = vshrl.u32 %v491, 7
    %v493 = vsub.s32 1, %v492
    %v494 = vrot.slane %v485, %v493
    %v495 = vcombine.low %v490, %v494
    %v497 = vunpack.c.l.s4 1966171168
    %v498 = vunpack.c.0.s8 %v497
    %v499 = vlaneseq
    %v500 = vshrl.u32 %v499, 7
    %v501 = vsub.s32 %v498, %v500
    %v502 = vrot.slane %v495, %v501
    %v503 = vcombine.high %v502, %v502
    %v505 = vunpack.c.l.s4 1966171168
    %v506 = vunpack.c.0.s8 %v505
    %v507 = vlaneseq
    %v508 = vshrl.u32 %v507, 7
    %v509 = vsub.s32 %v506, %v508
    %v510 = vrot.slane %v502, %v509
    %v512 = vunpack.c.l.s4 1966171168
    %v513 = vunpack.c.0.s8 %v512
    %v514 = vlaneseq
    %v515 = vshrl.u32 %v514, 7
    %v516 = vsub.s32 %v513, %v515
    %v517 = vrot.slane %v503, %v516
    %518 = vrot.lane.b32.xlu0 %v510, 79
    %v519 = vpop.permute.xlu0 %518
    %520 = vrot.lane.b32.xlu0 %v517, 79
    %v521 = vpop.permute.xlu0 %520
    %v522 = vrot.slane %v519, 7
    %v523 = vrot.slane %v521, 7
    %vm524 = vcmask 646144
    %v525 = vsel %vm524, %v522, %v519
    %v526 = vsel %vm524, %v523, %v521
    %v529 = vmul.f32 %v371, %v525
    %v530 = vmul.f32 %v373, %v526
    %533 = vrot.lane.b32.xlu0 %v529, 126
    %v534 = vpop.permute.xlu0 %533
    %535 = vrot.lane.b32.xlu0 %v530, 126
    %v536 = vpop.permute.xlu0 %535
    %v537 = vrot.slane %v534, 1
    %v538 = vrot.slane %v536, 1
    %vm539 = vcmask 1031168
    %v540 = vsel %vm539, %v534, %v537
    %v541 = vsel %vm539, %v536, %v538
    %v544 = vadd.f32 %v482, %v540
    %v545 = vadd.f32 %v483, %v541
    %s546 = scalar_lea.vmem [#allocation8], 3
    %v547 = vld [vmem:[%s546] ss:$8 sm:$0x3]
    %v549 = vlaneseq
    %v550 = vshrl.u32 %v549, 7
    %v551 = vsub.s32 0, %v550
    %v552 = vrot.slane %v547, %v551
    %v553 = vlaneseq
    %v554 = vshrl.u32 %v553, 7
    %v555 = vsub.s32 1, %v554
    %v556 = vrot.slane %v547, %v555
    %v557 = vcombine.low %v552, %v556
    %v559 = vunpack.c.l.s4 1966171168
    %v560 = vunpack.c.0.s8 %v559
    %v561 = vlaneseq
    %v562 = vshrl.u32 %v561, 7
    %v563 = vsub.s32 %v560, %v562
    %v564 = vrot.slane %v557, %v563
    %v565 = vcombine.high %v564, %v564
    %v567 = vunpack.c.l.s4 1966171168
    %v568 = vunpack.c.0.s8 %v567
    %v569 = vlaneseq
    %v570 = vshrl.u32 %v569, 7
    %v571 = vsub.s32 %v568, %v570
    %v572 = vrot.slane %v564, %v571
    %v574 = vunpack.c.l.s4 1966171168
    %v575 = vunpack.c.0.s8 %v574
    %v576 = vlaneseq
    %v577 = vshrl.u32 %v576, 7
    %v578 = vsub.s32 %v575, %v577
    %v579 = vrot.slane %v565, %v578
    %580 = vrot.lane.b32.xlu0 %v572, 80
    %v581 = vpop.permute.xlu0 %580
    %582 = vrot.lane.b32.xlu0 %v579, 80
    %v583 = vpop.permute.xlu0 %582
    %v584 = vrot.slane %v581, 7
    %v585 = vrot.slane %v583, 7
    %vm586 = vcmask 654336
    %v587 = vsel %vm586, %v584, %v581
    %v588 = vsel %vm586, %v585, %v583
    %v591 = vmul.f32 %v371, %v587
    %v592 = vmul.f32 %v373, %v588
    %595 = vrot.lane.b32.xlu0 %v591, 125
    %v596 = vpop.permute.xlu0 %595
    %597 = vrot.lane.b32.xlu0 %v592, 125
    %v598 = vpop.permute.xlu0 %597
    %v599 = vrot.slane %v596, 1
    %v600 = vrot.slane %v598, 1
    %vm601 = vcmask 1022976
    %v602 = vsel %vm601, %v596, %v599
    %v603 = vsel %vm601, %v598, %v600
    %v606 = vadd.f32 %v544, %v602
    %v607 = vadd.f32 %v545, %v603
    %s608 = scalar_lea.vmem [#allocation8], 4
    %v609 = vld [vmem:[%s608] ss:$8 sm:$0x3]
    %v611 = vlaneseq
    %v612 = vshrl.u32 %v611, 7
    %v613 = vsub.s32 0, %v612
    %v614 = vrot.slane %v609, %v613
    %v615 = vlaneseq
    %v616 = vshrl.u32 %v615, 7
    %v617 = vsub.s32 1, %v616
    %v618 = vrot.slane %v609, %v617
    %v619 = vcombine.low %v614, %v618
    %v621 = vunpack.c.l.s4 1966171168
    %v622 = vunpack.c.0.s8 %v621
    %v623 = vlaneseq
    %v624 = vshrl.u32 %v623, 7
    %v625 = vsub.s32 %v622, %v624
    %v626 = vrot.slane %v619, %v625
    %v627 = vcombine.high %v626, %v626
    %v629 = vunpack.c.l.s4 1966171168
    %v630 = vunpack.c.0.s8 %v629
    %v631 = vlaneseq
    %v632 = vshrl.u32 %v631, 7
    %v633 = vsub.s32 %v630, %v632
    %v634 = vrot.slane %v626, %v633
    %v636 = vunpack.c.l.s4 1966171168
    %v637 = vunpack.c.0.s8 %v636
    %v638 = vlaneseq
    %v639 = vshrl.u32 %v638, 7
    %v640 = vsub.s32 %v637, %v639
    %v641 = vrot.slane %v627, %v640
    %642 = vrot.lane.b32.xlu0 %v634, 81
    %v643 = vpop.permute.xlu0 %642
    %644 = vrot.lane.b32.xlu0 %v641, 81
    %v645 = vpop.permute.xlu0 %644
    %v646 = vrot.slane %v643, 7
    %v647 = vrot.slane %v645, 7
    %vm648 = vcmask 662528
    %v649 = vsel %vm648, %v646, %v643
    %v650 = vsel %vm648, %v647, %v645
    %v653 = vmul.f32 %v371, %v649
    %v654 = vmul.f32 %v373, %v650
    %657 = vrot.lane.b32.xlu0 %v653, 124
    %v658 = vpop.permute.xlu0 %657
    %659 = vrot.lane.b32.xlu0 %v654, 124
    %v660 = vpop.permute.xlu0 %659
    %v661 = vrot.slane %v658, 1
    %v662 = vrot.slane %v660, 1
    %vm663 = vcmask 1014784
    %v664 = vsel %vm663, %v658, %v661
    %v665 = vsel %vm663, %v660, %v662
    %v668 = vadd.f32 %v606, %v664
    %v669 = vadd.f32 %v607, %v665
    %s670 = scalar_lea.vmem [#allocation8], 5
    %v671 = vld [vmem:[%s670] ss:$8 sm:$0x3]
    %v673 = vlaneseq
    %v674 = vshrl.u32 %v673, 7
    %v675 = vsub.s32 0, %v674
    %v676 = vrot.slane %v671, %v675
    %v677 = vlaneseq
    %v678 = vshrl.u32 %v677, 7
    %v679 = vsub.s32 1, %v678
    %v680 = vrot.slane %v671, %v679
    %v681 = vcombine.low %v676, %v680
    %v683 = vunpack.c.l.s4 1966171168
    %v684 = vunpack.c.0.s8 %v683
    %v685 = vlaneseq
    %v686 = vshrl.u32 %v685, 7
    %v687 = vsub.s32 %v684, %v686
    %v688 = vrot.slane %v681, %v687
    %v689 = vcombine.high %v688, %v688
    %v691 = vunpack.c.l.s4 1966171168
    %v692 = vunpack.c.0.s8 %v691
    %v693 = vlaneseq
    %v694 = vshrl.u32 %v693, 7
    %v695 = vsub.s32 %v692, %v694
    %v696 = vrot.slane %v688, %v695
    %v698 = vunpack.c.l.s4 1966171168
    %v699 = vunpack.c.0.s8 %v698
    %v700 = vlaneseq
    %v701 = vshrl.u32 %v700, 7
    %v702 = vsub.s32 %v699, %v701
    %v703 = vrot.slane %v689, %v702
    %704 = vrot.lane.b32.xlu0 %v696, 82
    %v705 = vpop.permute.xlu0 %704
    %706 = vrot.lane.b32.xlu0 %v703, 82
    %v707 = vpop.permute.xlu0 %706
    %v708 = vrot.slane %v705, 7
    %v709 = vrot.slane %v707, 7
    %vm710 = vcmask 670720
    %v711 = vsel %vm710, %v708, %v705
    %v712 = vsel %vm710, %v709, %v707
    %v715 = vmul.f32 %v371, %v711
    %v716 = vmul.f32 %v373, %v712
    %719 = vrot.lane.b32.xlu0 %v715, 123
    %v720 = vpop.permute.xlu0 %719
    %721 = vrot.lane.b32.xlu0 %v716, 123
    %v722 = vpop.permute.xlu0 %721
    %v723 = vrot.slane %v720, 1
    %v724 = vrot.slane %v722, 1
    %vm725 = vcmask 1006592
    %v726 = vsel %vm725, %v720, %v723
    %v727 = vsel %vm725, %v722, %v724
    %v730 = vadd.f32 %v668, %v726
    %v731 = vadd.f32 %v669, %v727
    %s732 = scalar_lea.vmem [#allocation8], 6
    %v733 = vld [vmem:[%s732] ss:$8 sm:$0x3]
    %v735 = vlaneseq
    %v736 = vshrl.u32 %v735, 7
    %v737 = vsub.s32 0, %v736
    %v738 = vrot.slane %v733, %v737
    %v739 = vlaneseq
    %v740 = vshrl.u32 %v739, 7
    %v741 = vsub.s32 1, %v740
    %v742 = vrot.slane %v733, %v741
    %v743 = vcombine.low %v738, %v742
    %v745 = vunpack.c.l.s4 1966171168
    %v746 = vunpack.c.0.s8 %v745
    %v747 = vlaneseq
    %v748 = vshrl.u32 %v747, 7
    %v749 = vsub.s32 %v746, %v748
    %v750 = vrot.slane %v743, %v749
    %v751 = vcombine.high %v750, %v750
    %v753 = vunpack.c.l.s4 1966171168
    %v754 = vunpack.c.0.s8 %v753
    %v755 = vlaneseq
    %v756 = vshrl.u32 %v755, 7
    %v757 = vsub.s32 %v754, %v756
    %v758 = vrot.slane %v750, %v757
    %v760 = vunpack.c.l.s4 1966171168
    %v761 = vunpack.c.0.s8 %v760
    %v762 = vlaneseq
    %v763 = vshrl.u32 %v762, 7
    %v764 = vsub.s32 %v761, %v763
    %v765 = vrot.slane %v751, %v764
    %766 = vrot.lane.b32.xlu0 %v758, 83
    %v767 = vpop.permute.xlu0 %766
    %768 = vrot.lane.b32.xlu0 %v765, 83
    %v769 = vpop.permute.xlu0 %768
    %v770 = vrot.slane %v767, 7
    %v771 = vrot.slane %v769, 7
    %vm772 = vcmask 678912
    %v773 = vsel %vm772, %v770, %v767
    %v774 = vsel %vm772, %v771, %v769
    %v777 = vmul.f32 %v371, %v773
    %v778 = vmul.f32 %v373, %v774
    %781 = vrot.lane.b32.xlu0 %v777, 122
    %v782 = vpop.permute.xlu0 %781
    %783 = vrot.lane.b32.xlu0 %v778, 122
    %v784 = vpop.permute.xlu0 %783
    %v785 = vrot.slane %v782, 1
    %v786 = vrot.slane %v784, 1
    %vm787 = vcmask 998400
    %v788 = vsel %vm787, %v782, %v785
    %v789 = vsel %vm787, %v784, %v786
    %v792 = vadd.f32 %v730, %v788
    %v793 = vadd.f32 %v731, %v789
    %s794 = scalar_lea.vmem [#allocation8], 7
    %v795 = vld [vmem:[%s794] ss:$8 sm:$0x3]
    %v797 = vlaneseq
    %v798 = vshrl.u32 %v797, 7
    %v799 = vsub.s32 0, %v798
    %v800 = vrot.slane %v795, %v799
    %v801 = vlaneseq
    %v802 = vshrl.u32 %v801, 7
    %v803 = vsub.s32 1, %v802
    %v804 = vrot.slane %v795, %v803
    %v805 = vcombine.low %v800, %v804
    %v807 = vunpack.c.l.s4 1966171168
    %v808 = vunpack.c.0.s8 %v807
    %v809 = vlaneseq
    %v810 = vshrl.u32 %v809, 7
    %v811 = vsub.s32 %v808, %v810
    %v812 = vrot.slane %v805, %v811
    %v813 = vcombine.high %v812, %v812
    %v815 = vunpack.c.l.s4 1966171168
    %v816 = vunpack.c.0.s8 %v815
    %v817 = vlaneseq
    %v818 = vshrl.u32 %v817, 7
    %v819 = vsub.s32 %v816, %v818
    %v820 = vrot.slane %v812, %v819
    %v822 = vunpack.c.l.s4 1966171168
    %v823 = vunpack.c.0.s8 %v822
    %v824 = vlaneseq
    %v825 = vshrl.u32 %v824, 7
    %v826 = vsub.s32 %v823, %v825
    %v827 = vrot.slane %v813, %v826
    %828 = vrot.lane.b32.xlu0 %v820, 93
    %v829 = vpop.permute.xlu0 %828
    %830 = vrot.lane.b32.xlu0 %v827, 93
    %v831 = vpop.permute.xlu0 %830
    %v832 = vrot.slane %v829, 7
    %v833 = vrot.slane %v831, 7
    %vm834 = vcmask 760832
    %v835 = vsel %vm834, %v832, %v829
    %v836 = vsel %vm834, %v833, %v831
    %v839 = vmul.f32 %v371, %v835
    %v840 = vmul.f32 %v373, %v836
    %843 = vrot.lane.b32.xlu0 %v839, 112
    %v844 = vpop.permute.xlu0 %843
    %845 = vrot.lane.b32.xlu0 %v840, 112
    %v846 = vpop.permute.xlu0 %845
    %v847 = vrot.slane %v844, 1
    %v848 = vrot.slane %v846, 1
    %vm849 = vcmask 916480
    %v850 = vsel %vm849, %v844, %v847
    %v851 = vsel %vm849, %v846, %v848
    %v854 = vadd.f32 %v792, %v850
    %v855 = vadd.f32 %v793, %v851
    %s856 = scalar_lea.vmem [#allocation8], 16
    %v857 = vld [vmem:[%s856] ss:$8 sm:$0x3]
    %v859 = vlaneseq
    %v860 = vshrl.u32 %v859, 7
    %v861 = vsub.s32 0, %v860
    %v862 = vrot.slane %v857, %v861
    %v863 = vlaneseq
    %v864 = vshrl.u32 %v863, 7
    %v865 = vsub.s32 1, %v864
    %v866 = vrot.slane %v857, %v865
    %v867 = vcombine.low %v862, %v866
    %v869 = vunpack.c.l.s4 1966171168
    %v870 = vunpack.c.0.s8 %v869
    %v871 = vlaneseq
    %v872 = vshrl.u32 %v871, 7
    %v873 = vsub.s32 %v870, %v872
    %v874 = vrot.slane %v867, %v873
    %v875 = vcombine.high %v874, %v874
    %v877 = vunpack.c.l.s4 1966171168
    %v878 = vunpack.c.0.s8 %v877
    %v879 = vlaneseq
    %v880 = vshrl.u32 %v879, 7
    %v881 = vsub.s32 %v878, %v880
    %v882 = vrot.slane %v874, %v881
    %v884 = vunpack.c.l.s4 1966171168
    %v885 = vunpack.c.0.s8 %v884
    %v886 = vlaneseq
    %v887 = vshrl.u32 %v886, 7
    %v888 = vsub.s32 %v885, %v887
    %v889 = vrot.slane %v875, %v888
    %890 = vrot.lane.b32.xlu0 %v882, 94
    %v891 = vpop.permute.xlu0 %890
    %892 = vrot.lane.b32.xlu0 %v889, 94
    %v893 = vpop.permute.xlu0 %892
    %v894 = vrot.slane %v891, 7
    %v895 = vrot.slane %v893, 7
    %vm896 = vcmask 769024
    %v897 = vsel %vm896, %v894, %v891
    %v898 = vsel %vm896, %v895, %v893
    %v901 = vmul.f32 %v371, %v897
    %v902 = vmul.f32 %v373, %v898
    %905 = vrot.lane.b32.xlu0 %v901, 111
    %v906 = vpop.permute.xlu0 %905
    %907 = vrot.lane.b32.xlu0 %v902, 111
    %v908 = vpop.permute.xlu0 %907
    %v909 = vrot.slane %v906, 1
    %v910 = vrot.slane %v908, 1
    %vm911 = vcmask 908288
    %v912 = vsel %vm911, %v906, %v909
    %v913 = vsel %vm911, %v908, %v910
    %v916 = vadd.f32 %v854, %v912
    %v917 = vadd.f32 %v855, %v913
    %s918 = scalar_lea.vmem [#allocation8], 17
    %v919 = vld [vmem:[%s918] ss:$8 sm:$0x3]
    %v921 = vlaneseq
    %v922 = vshrl.u32 %v921, 7
    %v923 = vsub.s32 0, %v922
    %v924 = vrot.slane %v919, %v923
    %v925 = vlaneseq
    %v926 = vshrl.u32 %v925, 7
    %v927 = vsub.s32 1, %v926
    %v928 = vrot.slane %v919, %v927
    %v929 = vcombine.low %v924, %v928
    %v931 = vunpack.c.l.s4 1966171168
    %v932 = vunpack.c.0.s8 %v931
    %v933 = vlaneseq
    %v934 = vshrl.u32 %v933, 7
    %v935 = vsub.s32 %v932, %v934
    %v936 = vrot.slane %v929, %v935
    %v937 = vcombine.high %v936, %v936
    %v939 = vunpack.c.l.s4 1966171168
    %v940 = vunpack.c.0.s8 %v939
    %v941 = vlaneseq
    %v942 = vshrl.u32 %v941, 7
    %v943 = vsub.s32 %v940, %v942
    %v944 = vrot.slane %v936, %v943
    %v946 = vunpack.c.l.s4 1966171168
    %v947 = vunpack.c.0.s8 %v946
    %v948 = vlaneseq
    %v949 = vshrl.u32 %v948, 7
    %v950 = vsub.s32 %v947, %v949
    %v951 = vrot.slane %v937, %v950
    %952 = vrot.lane.b32.xlu0 %v944, 95
    %v953 = vpop.permute.xlu0 %952
    %954 = vrot.lane.b32.xlu0 %v951, 95
    %v955 = vpop.permute.xlu0 %954
    %v956 = vrot.slane %v953, 7
    %v957 = vrot.slane %v955, 7
    %vm958 = vcmask 777216
    %v959 = vsel %vm958, %v956, %v953
    %v960 = vsel %vm958, %v957, %v955
    %v963 = vmul.f32 %v371, %v959
    %v964 = vmul.f32 %v373, %v960
    %967 = vrot.lane.b32.xlu0 %v963, 110
    %v968 = vpop.permute.xlu0 %967
    %969 = vrot.lane.b32.xlu0 %v964, 110
    %v970 = vpop.permute.xlu0 %969
    %v971 = vrot.slane %v968, 1
    %v972 = vrot.slane %v970, 1
    %vm973 = vcmask 900096
    %v974 = vsel %vm973, %v968, %v971
    %v975 = vsel %vm973, %v970, %v972
    %v978 = vadd.f32 %v916, %v974
    %v979 = vadd.f32 %v917, %v975
    %s980 = scalar_lea.vmem [#allocation8], 18
    %v981 = vld [vmem:[%s980] ss:$8 sm:$0x3]
    %v983 = vlaneseq
    %v984 = vshrl.u32 %v983, 7
    %v985 = vsub.s32 0, %v984
    %v986 = vrot.slane %v981, %v985
    %v987 = vlaneseq
    %v988 = vshrl.u32 %v987, 7
    %v989 = vsub.s32 1, %v988
    %v990 = vrot.slane %v981, %v989
    %v991 = vcombine.low %v986, %v990
    %v993 = vunpack.c.l.s4 1966171168
    %v994 = vunpack.c.0.s8 %v993
    %v995 = vlaneseq
    %v996 = vshrl.u32 %v995, 7
    %v997 = vsub.s32 %v994, %v996
    %v998 = vrot.slane %v991, %v997
    %v999 = vcombine.high %v998, %v998
    %v1001 = vunpack.c.l.s4 1966171168
    %v1002 = vunpack.c.0.s8 %v1001
    %v1003 = vlaneseq
    %v1004 = vshrl.u32 %v1003, 7
    %v1005 = vsub.s32 %v1002, %v1004
    %v1006 = vrot.slane %v998, %v1005
    %v1008 = vunpack.c.l.s4 1966171168
    %v1009 = vunpack.c.0.s8 %v1008
    %v1010 = vlaneseq
    %v1011 = vshrl.u32 %v1010, 7
    %v1012 = vsub.s32 %v1009, %v1011
    %v1013 = vrot.slane %v999, %v1012
    %1014 = vrot.lane.b32.xlu0 %v1006, 96
    %v1015 = vpop.permute.xlu0 %1014
    %1016 = vrot.lane.b32.xlu0 %v1013, 96
    %v1017 = vpop.permute.xlu0 %1016
    %v1018 = vrot.slane %v1015, 7
    %v1019 = vrot.slane %v1017, 7
    %vm1020 = vcmask 785408
    %v1021 = vsel %vm1020, %v1018, %v1015
    %v1022 = vsel %vm1020, %v1019, %v1017
    %v1025 = vmul.f32 %v371, %v1021
    %v1026 = vmul.f32 %v373, %v1022
    %1029 = vrot.lane.b32.xlu0 %v1025, 109
    %v1030 = vpop.permute.xlu0 %1029
    %1031 = vrot.lane.b32.xlu0 %v1026, 109
    %v1032 = vpop.permute.xlu0 %1031
    %v1033 = vrot.slane %v1030, 1
    %v1034 = vrot.slane %v1032, 1
    %vm1035 = vcmask 891904
    %v1036 = vsel %vm1035, %v1030, %v1033
    %v1037 = vsel %vm1035, %v1032, %v1034
    %v1040 = vadd.f32 %v978, %v1036
    %v1041 = vadd.f32 %v979, %v1037
    %s1042 = scalar_lea.vmem [#allocation8], 19
    %v1043 = vld [vmem:[%s1042] ss:$8 sm:$0x3]
    %v1045 = vlaneseq
    %v1046 = vshrl.u32 %v1045, 7
    %v1047 = vsub.s32 0, %v1046
    %v1048 = vrot.slane %v1043, %v1047
    %v1049 = vlaneseq
    %v1050 = vshrl.u32 %v1049, 7
    %v1051 = vsub.s32 1, %v1050
    %v1052 = vrot.slane %v1043, %v1051
    %v1053 = vcombine.low %v1048, %v1052
    %v1055 = vunpack.c.l.s4 1966171168
    %v1056 = vunpack.c.0.s8 %v1055
    %v1057 = vlaneseq
    %v1058 = vshrl.u32 %v1057, 7
    %v1059 = vsub.s32 %v1056, %v1058
    %v1060 = vrot.slane %v1053, %v1059
    %v1061 = vcombine.high %v1060, %v1060
    %v1063 = vunpack.c.l.s4 1966171168
    %v1064 = vunpack.c.0.s8 %v1063
    %v1065 = vlaneseq
    %v1066 = vshrl.u32 %v1065, 7
    %v1067 = vsub.s32 %v1064, %v1066
    %v1068 = vrot.slane %v1060, %v1067
    %v1070 = vunpack.c.l.s4 1966171168
    %v1071 = vunpack.c.0.s8 %v1070
    %v1072 = vlaneseq
    %v1073 = vshrl.u32 %v1072, 7
    %v1074 = vsub.s32 %v1071, %v1073
    %v1075 = vrot.slane %v1061, %v1074
    %1076 = vrot.lane.b32.xlu0 %v1068, 97
    %v1077 = vpop.permute.xlu0 %1076
    %1078 = vrot.lane.b32.xlu0 %v1075, 97
    %v1079 = vpop.permute.xlu0 %1078
    %v1080 = vrot.slane %v1077, 7
    %v1081 = vrot.slane %v1079, 7
    %vm1082 = vcmask 793600
    %v1083 = vsel %vm1082, %v1080, %v1077
    %v1084 = vsel %vm1082, %v1081, %v1079
    %v1087 = vmul.f32 %v371, %v1083
    %v1088 = vmul.f32 %v373, %v1084
    %1091 = vrot.lane.b32.xlu0 %v1087, 108
    %v1092 = vpop.permute.xlu0 %1091
    %1093 = vrot.lane.b32.xlu0 %v1088, 108
    %v1094 = vpop.permute.xlu0 %1093
    %v1095 = vrot.slane %v1092, 1
    %v1096 = vrot.slane %v1094, 1
    %vm1097 = vcmask 883712
    %v1098 = vsel %vm1097, %v1092, %v1095
    %v1099 = vsel %vm1097, %v1094, %v1096
    %v1102 = vadd.f32 %v1040, %v1098
    %v1103 = vadd.f32 %v1041, %v1099
    %s1104 = scalar_lea.vmem [#allocation8], 20
    %v1105 = vld [vmem:[%s1104] ss:$8 sm:$0x3]
    %v1107 = vlaneseq
    %v1108 = vshrl.u32 %v1107, 7
    %v1109 = vsub.s32 0, %v1108
    %v1110 = vrot.slane %v1105, %v1109
    %v1111 = vlaneseq
    %v1112 = vshrl.u32 %v1111, 7
    %v1113 = vsub.s32 1, %v1112
    %v1114 = vrot.slane %v1105, %v1113
    %v1115 = vcombine.low %v1110, %v1114
    %v1117 = vunpack.c.l.s4 1966171168
    %v1118 = vunpack.c.0.s8 %v1117
    %v1119 = vlaneseq
    %v1120 = vshrl.u32 %v1119, 7
    %v1121 = vsub.s32 %v1118, %v1120
    %v1122 = vrot.slane %v1115, %v1121
    %v1123 = vcombine.high %v1122, %v1122
    %v1125 = vunpack.c.l.s4 1966171168
    %v1126 = vunpack.c.0.s8 %v1125
    %v1127 = vlaneseq
    %v1128 = vshrl.u32 %v1127, 7
    %v1129 = vsub.s32 %v1126, %v1128
    %v1130 = vrot.slane %v1122, %v1129
    %v1132 = vunpack.c.l.s4 1966171168
    %v1133 = vunpack.c.0.s8 %v1132
    %v1134 = vlaneseq
    %v1135 = vshrl.u32 %v1134, 7
    %v1136 = vsub.s32 %v1133, %v1135
    %v1137 = vrot.slane %v1123, %v1136
    %1138 = vrot.lane.b32.xlu0 %v1130, 98
    %v1139 = vpop.permute.xlu0 %1138
    %1140 = vrot.lane.b32.xlu0 %v1137, 98
    %v1141 = vpop.permute.xlu0 %1140
    %v1142 = vrot.slane %v1139, 7
    %v1143 = vrot.slane %v1141, 7
    %vm1144 = vcmask 801792
    %v1145 = vsel %vm1144, %v1142, %v1139
    %v1146 = vsel %vm1144, %v1143, %v1141
    %v1149 = vmul.f32 %v371, %v1145
    %v1150 = vmul.f32 %v373, %v1146
    %1153 = vrot.lane.b32.xlu0 %v1149, 107
    %v1154 = vpop.permute.xlu0 %1153
    %1155 = vrot.lane.b32.xlu0 %v1150, 107
    %v1156 = vpop.permute.xlu0 %1155
    %v1157 = vrot.slane %v1154, 1
    %v1158 = vrot.slane %v1156, 1
    %vm1159 = vcmask 875520
    %v1160 = vsel %vm1159, %v1154, %v1157
    %v1161 = vsel %vm1159, %v1156, %v1158
    %v1164 = vadd.f32 %v1102, %v1160
    %v1165 = vadd.f32 %v1103, %v1161
    %s1166 = scalar_lea.vmem [#allocation8], 21
    %v1167 = vld [vmem:[%s1166] ss:$8 sm:$0x3]
    %v1169 = vlaneseq
    %v1170 = vshrl.u32 %v1169, 7
    %v1171 = vsub.s32 0, %v1170
    %v1172 = vrot.slane %v1167, %v1171
    %v1173 = vlaneseq
    %v1174 = vshrl.u32 %v1173, 7
    %v1175 = vsub.s32 1, %v1174
    %v1176 = vrot.slane %v1167, %v1175
    %v1177 = vcombine.low %v1172, %v1176
    %v1179 = vunpack.c.l.s4 1966171168
    %v1180 = vunpack.c.0.s8 %v1179
    %v1181 = vlaneseq
    %v1182 = vshrl.u32 %v1181, 7
    %v1183 = vsub.s32 %v1180, %v1182
    %v1184 = vrot.slane %v1177, %v1183
    %v1185 = vcombine.high %v1184, %v1184
    %v1187 = vunpack.c.l.s4 1966171168
    %v1188 = vunpack.c.0.s8 %v1187
    %v1189 = vlaneseq
    %v1190 = vshrl.u32 %v1189, 7
    %v1191 = vsub.s32 %v1188, %v1190
    %v1192 = vrot.slane %v1184, %v1191
    %v1194 = vunpack.c.l.s4 1966171168
    %v1195 = vunpack.c.0.s8 %v1194
    %v1196 = vlaneseq
    %v1197 = vshrl.u32 %v1196, 7
    %v1198 = vsub.s32 %v1195, %v1197
    %v1199 = vrot.slane %v1185, %v1198
    %1200 = vrot.lane.b32.xlu0 %v1192, 99
    %v1201 = vpop.permute.xlu0 %1200
    %1202 = vrot.lane.b32.xlu0 %v1199, 99
    %v1203 = vpop.permute.xlu0 %1202
    %v1204 = vrot.slane %v1201, 7
    %v1205 = vrot.slane %v1203, 7
    %vm1206 = vcmask 809984
    %v1207 = vsel %vm1206, %v1204, %v1201
    %v1208 = vsel %vm1206, %v1205, %v1203
    %v1211 = vmul.f32 %v371, %v1207
    %v1212 = vmul.f32 %v373, %v1208
    %1215 = vrot.lane.b32.xlu0 %v1211, 106
    %v1216 = vpop.permute.xlu0 %1215
    %1217 = vrot.lane.b32.xlu0 %v1212, 106
    %v1218 = vpop.permute.xlu0 %1217
    %v1219 = vrot.slane %v1216, 1
    %v1220 = vrot.slane %v1218, 1
    %vm1221 = vcmask 867328
    %v1222 = vsel %vm1221, %v1216, %v1219
    %v1223 = vsel %vm1221, %v1218, %v1220
    %v1226 = vadd.f32 %v1164, %v1222
    %v1227 = vadd.f32 %v1165, %v1223
    %s1228 = scalar_lea.vmem [#allocation8], 22
    %v1229 = vld [vmem:[%s1228] ss:$8 sm:$0x3]
    %v1231 = vlaneseq
    %v1232 = vshrl.u32 %v1231, 7
    %v1233 = vsub.s32 0, %v1232
    %v1234 = vrot.slane %v1229, %v1233
    %v1235 = vlaneseq
    %v1236 = vshrl.u32 %v1235, 7
    %v1237 = vsub.s32 1, %v1236
    %v1238 = vrot.slane %v1229, %v1237
    %v1239 = vcombine.low %v1234, %v1238
    %v1241 = vunpack.c.l.s4 1966171168
    %v1242 = vunpack.c.0.s8 %v1241
    %v1243 = vlaneseq
    %v1244 = vshrl.u32 %v1243, 7
    %v1245 = vsub.s32 %v1242, %v1244
    %v1246 = vrot.slane %v1239, %v1245
    %v1247 = vcombine.high %v1246, %v1246
    %v1249 = vunpack.c.l.s4 1966171168
    %v1250 = vunpack.c.0.s8 %v1249
    %v1251 = vlaneseq
    %v1252 = vshrl.u32 %v1251, 7
    %v1253 = vsub.s32 %v1250, %v1252
    %v1254 = vrot.slane %v1246, %v1253
    %v1256 = vunpack.c.l.s4 1966171168
    %v1257 = vunpack.c.0.s8 %v1256
    %v1258 = vlaneseq
    %v1259 = vshrl.u32 %v1258, 7
    %v1260 = vsub.s32 %v1257, %v1259
    %v1261 = vrot.slane %v1247, %v1260
    %1262 = vrot.lane.b32.xlu0 %v1254, 109
    %v1263 = vpop.permute.xlu0 %1262
    %1264 = vrot.lane.b32.xlu0 %v1261, 109
    %v1265 = vpop.permute.xlu0 %1264
    %v1266 = vrot.slane %v1263, 7
    %v1267 = vrot.slane %v1265, 7
    %v1268 = vsel %vm1035, %v1266, %v1263
    %v1269 = vsel %vm1035, %v1267, %v1265
    %v1272 = vmul.f32 %v371, %v1268
    %v1273 = vmul.f32 %v373, %v1269
    %1276 = vrot.lane.b32.xlu0 %v1272, 96
    %v1277 = vpop.permute.xlu0 %1276
    %1278 = vrot.lane.b32.xlu0 %v1273, 96
    %v1279 = vpop.permute.xlu0 %1278
    %v1280 = vrot.slane %v1277, 1
    %v1281 = vrot.slane %v1279, 1
    %v1282 = vsel %vm1020, %v1277, %v1280
    %v1283 = vsel %vm1020, %v1279, %v1281
    %v1286 = vadd.f32 %v1226, %v1282
    %v1287 = vadd.f32 %v1227, %v1283
    %s1288 = scalar_lea.vmem [#allocation8], 23
    %v1289 = vld [vmem:[%s1288] ss:$8 sm:$0x3]
    %v1291 = vlaneseq
    %v1292 = vshrl.u32 %v1291, 7
    %v1293 = vsub.s32 0, %v1292
    %v1294 = vrot.slane %v1289, %v1293
    %v1295 = vlaneseq
    %v1296 = vshrl.u32 %v1295, 7
    %v1297 = vsub.s32 1, %v1296
    %v1298 = vrot.slane %v1289, %v1297
    %v1299 = vcombine.low %v1294, %v1298
    %v1301 = vunpack.c.l.s4 1966171168
    %v1302 = vunpack.c.0.s8 %v1301
    %v1303 = vlaneseq
    %v1304 = vshrl.u32 %v1303, 7
    %v1305 = vsub.s32 %v1302, %v1304
    %v1306 = vrot.slane %v1299, %v1305
    %v1307 = vcombine.high %v1306, %v1306
    %v1309 = vunpack.c.l.s4 1966171168
    %v1310 = vunpack.c.0.s8 %v1309
    %v1311 = vlaneseq
    %v1312 = vshrl.u32 %v1311, 7
    %v1313 = vsub.s32 %v1310, %v1312
    %v1314 = vrot.slane %v1306, %v1313
    %v1316 = vunpack.c.l.s4 1966171168
    %v1317 = vunpack.c.0.s8 %v1316
    %v1318 = vlaneseq
    %v1319 = vshrl.u32 %v1318, 7
    %v1320 = vsub.s32 %v1317, %v1319
    %v1321 = vrot.slane %v1307, %v1320
    %1322 = vrot.lane.b32.xlu0 %v1314, 110
    %v1323 = vpop.permute.xlu0 %1322
    %1324 = vrot.lane.b32.xlu0 %v1321, 110
    %v1325 = vpop.permute.xlu0 %1324
    %v1326 = vrot.slane %v1323, 7
    %v1327 = vrot.slane %v1325, 7
    %v1328 = vsel %vm973, %v1326, %v1323
    %v1329 = vsel %vm973, %v1327, %v1325
    %v1332 = vmul.f32 %v371, %v1328
    %v1333 = vmul.f32 %v373, %v1329
    %1336 = vrot.lane.b32.xlu0 %v1332, 95
    %v1337 = vpop.permute.xlu0 %1336
    %1338 = vrot.lane.b32.xlu0 %v1333, 95
    %v1339 = vpop.permute.xlu0 %1338
    %v1340 = vrot.slane %v1337, 1
    %v1341 = vrot.slane %v1339, 1
    %v1342 = vsel %vm958, %v1337, %v1340
    %v1343 = vsel %vm958, %v1339, %v1341
    %v1346 = vadd.f32 %v1286, %v1342
    %v1347 = vadd.f32 %v1287, %v1343
    %s1348 = scalar_lea.vmem [#allocation8], 32
    %v1349 = vld [vmem:[%s1348] ss:$8 sm:$0x3]
    %v1351 = vlaneseq
    %v1352 = vshrl.u32 %v1351, 7
    %v1353 = vsub.s32 0, %v1352
    %v1354 = vrot.slane %v1349, %v1353
    %v1355 = vlaneseq
    %v1356 = vshrl.u32 %v1355, 7
    %v1357 = vsub.s32 1, %v1356
    %v1358 = vrot.slane %v1349, %v1357
    %v1359 = vcombine.low %v1354, %v1358
    %v1361 = vunpack.c.l.s4 1966171168
    %v1362 = vunpack.c.0.s8 %v1361
    %v1363 = vlaneseq
    %v1364 = vshrl.u32 %v1363, 7
    %v1365 = vsub.s32 %v1362, %v1364
    %v1366 = vrot.slane %v1359, %v1365
    %v1367 = vcombine.high %v1366, %v1366
    %v1369 = vunpack.c.l.s4 1966171168
    %v1370 = vunpack.c.0.s8 %v1369
    %v1371 = vlaneseq
    %v1372 = vshrl.u32 %v1371, 7
    %v1373 = vsub.s32 %v1370, %v1372
    %v1374 = vrot.slane %v1366, %v1373
    %v1376 = vunpack.c.l.s4 1966171168
    %v1377 = vunpack.c.0.s8 %v1376
    %v1378 = vlaneseq
    %v1379 = vshrl.u32 %v1378, 7
    %v1380 = vsub.s32 %v1377, %v1379
    %v1381 = vrot.slane %v1367, %v1380
    %1382 = vrot.lane.b32.xlu0 %v1374, 111
    %v1383 = vpop.permute.xlu0 %1382
    %1384 = vrot.lane.b32.xlu0 %v1381, 111
    %v1385 = vpop.permute.xlu0 %1384
    %v1386 = vrot.slane %v1383, 7
    %v1387 = vrot.slane %v1385, 7
    %v1388 = vsel %vm911, %v1386, %v1383
    %v1389 = vsel %vm911, %v1387, %v1385
    %v1392 = vmul.f32 %v371, %v1388
    %v1393 = vmul.f32 %v373, %v1389
    %1396 = vrot.lane.b32.xlu0 %v1392, 94
    %v1397 = vpop.permute.xlu0 %1396
    %1398 = vrot.lane.b32.xlu0 %v1393, 94
    %v1399 = vpop.permute.xlu0 %1398
    %v1400 = vrot.slane %v1397, 1
    %v1401 = vrot.slane %v1399, 1
    %v1402 = vsel %vm896, %v1397, %v1400
    %v1403 = vsel %vm896, %v1399, %v1401
    %v1406 = vadd.f32 %v1346, %v1402
    %v1407 = vadd.f32 %v1347, %v1403
    %s1408 = scalar_lea.vmem [#allocation8], 33
    %v1409 = vld [vmem:[%s1408] ss:$8 sm:$0x3]
    %v1411 = vlaneseq
    %v1412 = vshrl.u32 %v1411, 7
    %v1413 = vsub.s32 0, %v1412
    %v1414 = vrot.slane %v1409, %v1413
    %v1415 = vlaneseq
    %v1416 = vshrl.u32 %v1415, 7
    %v1417 = vsub.s32 1, %v1416
    %v1418 = vrot.slane %v1409, %v1417
    %v1419 = vcombine.low %v1414, %v1418
    %v1421 = vunpack.c.l.s4 1966171168
    %v1422 = vunpack.c.0.s8 %v1421
    %v1423 = vlaneseq
    %v1424 = vshrl.u32 %v1423, 7
    %v1425 = vsub.s32 %v1422, %v1424
    %v1426 = vrot.slane %v1419, %v1425
    %v1427 = vcombine.high %v1426, %v1426
    %v1429 = vunpack.c.l.s4 1966171168
    %v1430 = vunpack.c.0.s8 %v1429
    %v1431 = vlaneseq
    %v1432 = vshrl.u32 %v1431, 7
    %v1433 = vsub.s32 %v1430, %v1432
    %v1434 = vrot.slane %v1426, %v1433
    %v1436 = vunpack.c.l.s4 1966171168
    %v1437 = vunpack.c.0.s8 %v1436
    %v1438 = vlaneseq
    %v1439 = vshrl.u32 %v1438, 7
    %v1440 = vsub.s32 %v1437, %v1439
    %v1441 = vrot.slane %v1427, %v1440
    %1442 = vrot.lane.b32.xlu0 %v1434, 112
    %v1443 = vpop.permute.xlu0 %1442
    %1444 = vrot.lane.b32.xlu0 %v1441, 112
    %v1445 = vpop.permute.xlu0 %1444
    %v1446 = vrot.slane %v1443, 7
    %v1447 = vrot.slane %v1445, 7
    %v1448 = vsel %vm849, %v1446, %v1443
    %v1449 = vsel %vm849, %v1447, %v1445
    %v1452 = vmul.f32 %v371, %v1448
    %v1453 = vmul.f32 %v373, %v1449
    %1456 = vrot.lane.b32.xlu0 %v1452, 93
    %v1457 = vpop.permute.xlu0 %1456
    %1458 = vrot.lane.b32.xlu0 %v1453, 93
    %v1459 = vpop.permute.xlu0 %1458
    %v1460 = vrot.slane %v1457, 1
    %v1461 = vrot.slane %v1459, 1
    %v1462 = vsel %vm834, %v1457, %v1460
    %v1463 = vsel %vm834, %v1459, %v1461
    %v1466 = vadd.f32 %v1406, %v1462
    %v1467 = vadd.f32 %v1407, %v1463
    %s1468 = scalar_lea.vmem [#allocation8], 34
    %v1469 = vld [vmem:[%s1468] ss:$8 sm:$0x3]
    %v1471 = vlaneseq
    %v1472 = vshrl.u32 %v1471, 7
    %v1473 = vsub.s32 0, %v1472
    %v1474 = vrot.slane %v1469, %v1473
    %v1475 = vlaneseq
    %v1476 = vshrl.u32 %v1475, 7
    %v1477 = vsub.s32 1, %v1476
    %v1478 = vrot.slane %v1469, %v1477
    %v1479 = vcombine.low %v1474, %v1478
    %v1481 = vunpack.c.l.s4 1966171168
    %v1482 = vunpack.c.0.s8 %v1481
    %v1483 = vlaneseq
    %v1484 = vshrl.u32 %v1483, 7
    %v1485 = vsub.s32 %v1482, %v1484
    %v1486 = vrot.slane %v1479, %v1485
    %v1487 = vcombine.high %v1486, %v1486
    %v1489 = vunpack.c.l.s4 1966171168
    %v1490 = vunpack.c.0.s8 %v1489
    %v1491 = vlaneseq
    %v1492 = vshrl.u32 %v1491, 7
    %v1493 = vsub.s32 %v1490, %v1492
    %v1494 = vrot.slane %v1486, %v1493
    %v1496 = vunpack.c.l.s4 1966171168
    %v1497 = vunpack.c.0.s8 %v1496
    %v1498 = vlaneseq
    %v1499 = vshrl.u32 %v1498, 7
    %v1500 = vsub.s32 %v1497, %v1499
    %v1501 = vrot.slane %v1487, %v1500
    %1502 = vrot.lane.b32.xlu0 %v1494, 113
    %v1503 = vpop.permute.xlu0 %1502
    %1504 = vrot.lane.b32.xlu0 %v1501, 113
    %v1505 = vpop.permute.xlu0 %1504
    %v1506 = vrot.slane %v1503, 7
    %v1507 = vrot.slane %v1505, 7
    %vm1508 = vcmask 924672
    %v1509 = vsel %vm1508, %v1506, %v1503
    %v1510 = vsel %vm1508, %v1507, %v1505
    %v1513 = vmul.f32 %v371, %v1509
    %v1514 = vmul.f32 %v373, %v1510
    %1517 = vrot.lane.b32.xlu0 %v1513, 92
    %v1518 = vpop.permute.xlu0 %1517
    %1519 = vrot.lane.b32.xlu0 %v1514, 92
    %v1520 = vpop.permute.xlu0 %1519
    %v1521 = vrot.slane %v1518, 1
    %v1522 = vrot.slane %v1520, 1
    %vm1523 = vcmask 752640
    %v1524 = vsel %vm1523, %v1518, %v1521
    %v1525 = vsel %vm1523, %v1520, %v1522
    %v1528 = vadd.f32 %v1466, %v1524
    %v1529 = vadd.f32 %v1467, %v1525
    %s1530 = scalar_lea.vmem [#allocation8], 35
    %v1531 = vld [vmem:[%s1530] ss:$8 sm:$0x3]
    %v1533 = vlaneseq
    %v1534 = vshrl.u32 %v1533, 7
    %v1535 = vsub.s32 0, %v1534
    %v1536 = vrot.slane %v1531, %v1535
    %v1537 = vlaneseq
    %v1538 = vshrl.u32 %v1537, 7
    %v1539 = vsub.s32 1, %v1538
    %v1540 = vrot.slane %v1531, %v1539
    %v1541 = vcombine.low %v1536, %v1540
    %v1543 = vunpack.c.l.s4 1966171168
    %v1544 = vunpack.c.0.s8 %v1543
    %v1545 = vlaneseq
    %v1546 = vshrl.u32 %v1545, 7
    %v1547 = vsub.s32 %v1544, %v1546
    %v1548 = vrot.slane %v1541, %v1547
    %v1549 = vcombine.high %v1548, %v1548
    %v1551 = vunpack.c.l.s4 1966171168
    %v1552 = vunpack.c.0.s8 %v1551
    %v1553 = vlaneseq
    %v1554 = vshrl.u32 %v1553, 7
    %v1555 = vsub.s32 %v1552, %v1554
    %v1556 = vrot.slane %v1548, %v1555
    %v1558 = vunpack.c.l.s4 1966171168
    %v1559 = vunpack.c.0.s8 %v1558
    %v1560 = vlaneseq
    %v1561 = vshrl.u32 %v1560, 7
    %v1562 = vsub.s32 %v1559, %v1561
    %v1563 = vrot.slane %v1549, %v1562
    %1564 = vrot.lane.b32.xlu0 %v1556, 114
    %v1565 = vpop.permute.xlu0 %1564
    %1566 = vrot.lane.b32.xlu0 %v1563, 114
    %v1567 = vpop.permute.xlu0 %1566
    %v1568 = vrot.slane %v1565, 7
    %v1569 = vrot.slane %v1567, 7
    %vm1570 = vcmask 932864
    %v1571 = vsel %vm1570, %v1568, %v1565
    %v1572 = vsel %vm1570, %v1569, %v1567
    %v1575 = vmul.f32 %v371, %v1571
    %v1576 = vmul.f32 %v373, %v1572
    %1579 = vrot.lane.b32.xlu0 %v1575, 91
    %v1580 = vpop.permute.xlu0 %1579
    %1581 = vrot.lane.b32.xlu0 %v1576, 91
    %v1582 = vpop.permute.xlu0 %1581
    %v1583 = vrot.slane %v1580, 1
    %v1584 = vrot.slane %v1582, 1
    %vm1585 = vcmask 744448
    %v1586 = vsel %vm1585, %v1580, %v1583
    %v1587 = vsel %vm1585, %v1582, %v1584
    %v1590 = vadd.f32 %v1528, %v1586
    %v1591 = vadd.f32 %v1529, %v1587
    %s1592 = scalar_lea.vmem [#allocation8], 36
    %v1593 = vld [vmem:[%s1592] ss:$8 sm:$0x3]
    %v1595 = vlaneseq
    %v1596 = vshrl.u32 %v1595, 7
    %v1597 = vsub.s32 0, %v1596
    %v1598 = vrot.slane %v1593, %v1597
    %v1599 = vlaneseq
    %v1600 = vshrl.u32 %v1599, 7
    %v1601 = vsub.s32 1, %v1600
    %v1602 = vrot.slane %v1593, %v1601
    %v1603 = vcombine.low %v1598, %v1602
    %v1605 = vunpack.c.l.s4 1966171168
    %v1606 = vunpack.c.0.s8 %v1605
    %v1607 = vlaneseq
    %v1608 = vshrl.u32 %v1607, 7
    %v1609 = vsub.s32 %v1606, %v1608
    %v1610 = vrot.slane %v1603, %v1609
    %v1611 = vcombine.high %v1610, %v1610
    %v1613 = vunpack.c.l.s4 1966171168
    %v1614 = vunpack.c.0.s8 %v1613
    %v1615 = vlaneseq
    %v1616 = vshrl.u32 %v1615, 7
    %v1617 = vsub.s32 %v1614, %v1616
    %v1618 = vrot.slane %v1610, %v1617
    %v1620 = vunpack.c.l.s4 1966171168
    %v1621 = vunpack.c.0.s8 %v1620
    %v1622 = vlaneseq
    %v1623 = vshrl.u32 %v1622, 7
    %v1624 = vsub.s32 %v1621, %v1623
    %v1625 = vrot.slane %v1611, %v1624
    %1626 = vrot.lane.b32.xlu0 %v1618, 115
    %v1627 = vpop.permute.xlu0 %1626
    %1628 = vrot.lane.b32.xlu0 %v1625, 115
    %v1629 = vpop.permute.xlu0 %1628
    %v1630 = vrot.slane %v1627, 7
    %v1631 = vrot.slane %v1629, 7
    %vm1632 = vcmask 941056
    %v1633 = vsel %vm1632, %v1630, %v1627
    %v1634 = vsel %vm1632, %v1631, %v1629
    %v1637 = vmul.f32 %v371, %v1633
    %v1638 = vmul.f32 %v373, %v1634
    %1641 = vrot.lane.b32.xlu0 %v1637, 90
    %v1642 = vpop.permute.xlu0 %1641
    %1643 = vrot.lane.b32.xlu0 %v1638, 90
    %v1644 = vpop.permute.xlu0 %1643
    %v1645 = vrot.slane %v1642, 1
    %v1646 = vrot.slane %v1644, 1
    %vm1647 = vcmask 736256
    %v1648 = vsel %vm1647, %v1642, %v1645
    %v1649 = vsel %vm1647, %v1644, %v1646
    %v1652 = vadd.f32 %v1590, %v1648
    %v1653 = vadd.f32 %v1591, %v1649
    %s1654 = scalar_lea.vmem [#allocation8], 37
    %v1655 = vld [vmem:[%s1654] ss:$8 sm:$0x3]
    %v1657 = vlaneseq
    %v1658 = vshrl.u32 %v1657, 7
    %v1659 = vsub.s32 0, %v1658
    %v1660 = vrot.slane %v1655, %v1659
    %v1661 = vlaneseq
    %v1662 = vshrl.u32 %v1661, 7
    %v1663 = vsub.s32 1, %v1662
    %v1664 = vrot.slane %v1655, %v1663
    %v1665 = vcombine.low %v1660, %v1664
    %v1667 = vunpack.c.l.s4 1966171168
    %v1668 = vunpack.c.0.s8 %v1667
    %v1669 = vlaneseq
    %v1670 = vshrl.u32 %v1669, 7
    %v1671 = vsub.s32 %v1668, %v1670
    %v1672 = vrot.slane %v1665, %v1671
    %v1673 = vcombine.high %v1672, %v1672
    %v1675 = vunpack.c.l.s4 1966171168
    %v1676 = vunpack.c.0.s8 %v1675
    %v1677 = vlaneseq
    %v1678 = vshrl.u32 %v1677, 7
    %v1679 = vsub.s32 %v1676, %v1678
    %v1680 = vrot.slane %v1672, %v1679
    %v1682 = vunpack.c.l.s4 1966171168
    %v1683 = vunpack.c.0.s8 %v1682
    %v1684 = vlaneseq
    %v1685 = vshrl.u32 %v1684, 7
    %v1686 = vsub.s32 %v1683, %v1685
    %v1687 = vrot.slane %v1673, %v1686
    %1688 = vrot.lane.b32.xlu0 %v1680, 125
    %v1689 = vpop.permute.xlu0 %1688
    %1690 = vrot.lane.b32.xlu0 %v1687, 125
    %v1691 = vpop.permute.xlu0 %1690
    %v1692 = vrot.slane %v1689, 7
    %v1693 = vrot.slane %v1691, 7
    %v1694 = vsel %vm601, %v1692, %v1689
    %v1695 = vsel %vm601, %v1693, %v1691
    %v1698 = vmul.f32 %v371, %v1694
    %v1699 = vmul.f32 %v373, %v1695
    %1702 = vrot.lane.b32.xlu0 %v1698, 80
    %v1703 = vpop.permute.xlu0 %1702
    %1704 = vrot.lane.b32.xlu0 %v1699, 80
    %v1705 = vpop.permute.xlu0 %1704
    %v1706 = vrot.slane %v1703, 1
    %v1707 = vrot.slane %v1705, 1
    %v1708 = vsel %vm586, %v1703, %v1706
    %v1709 = vsel %vm586, %v1705, %v1707
    %v1712 = vadd.f32 %v1652, %v1708
    %v1713 = vadd.f32 %v1653, %v1709
    %s1714 = scalar_lea.vmem [#allocation8], 38
    %v1715 = vld [vmem:[%s1714] ss:$8 sm:$0x3]
    %v1717 = vlaneseq
    %v1718 = vshrl.u32 %v1717, 7
    %v1719 = vsub.s32 0, %v1718
    %v1720 = vrot.slane %v1715, %v1719
    %v1721 = vlaneseq
    %v1722 = vshrl.u32 %v1721, 7
    %v1723 = vsub.s32 1, %v1722
    %v1724 = vrot.slane %v1715, %v1723
    %v1725 = vcombine.low %v1720, %v1724
    %v1727 = vunpack.c.l.s4 1966171168
    %v1728 = vunpack.c.0.s8 %v1727
    %v1729 = vlaneseq
    %v1730 = vshrl.u32 %v1729, 7
    %v1731 = vsub.s32 %v1728, %v1730
    %v1732 = vrot.slane %v1725, %v1731
    %v1733 = vcombine.high %v1732, %v1732
    %v1735 = vunpack.c.l.s4 1966171168
    %v1736 = vunpack.c.0.s8 %v1735
    %v1737 = vlaneseq
    %v1738 = vshrl.u32 %v1737, 7
    %v1739 = vsub.s32 %v1736, %v1738
    %v1740 = vrot.slane %v1732, %v1739
    %v1742 = vunpack.c.l.s4 1966171168
    %v1743 = vunpack.c.0.s8 %v1742
    %v1744 = vlaneseq
    %v1745 = vshrl.u32 %v1744, 7
    %v1746 = vsub.s32 %v1743, %v1745
    %v1747 = vrot.slane %v1733, %v1746
    %1748 = vrot.lane.b32.xlu0 %v1740, 126
    %v1749 = vpop.permute.xlu0 %1748
    %1750 = vrot.lane.b32.xlu0 %v1747, 126
    %v1751 = vpop.permute.xlu0 %1750
    %v1752 = vrot.slane %v1749, 7
    %v1753 = vrot.slane %v1751, 7
    %v1754 = vsel %vm539, %v1752, %v1749
    %v1755 = vsel %vm539, %v1753, %v1751
    %v1758 = vmul.f32 %v371, %v1754
    %v1759 = vmul.f32 %v373, %v1755
    %1762 = vrot.lane.b32.xlu0 %v1758, 79
    %v1763 = vpop.permute.xlu0 %1762
    %1764 = vrot.lane.b32.xlu0 %v1759, 79
    %v1765 = vpop.permute.xlu0 %1764
    %v1766 = vrot.slane %v1763, 1
    %v1767 = vrot.slane %v1765, 1
    %v1768 = vsel %vm524, %v1763, %v1766
    %v1769 = vsel %vm524, %v1765, %v1767
    %v1772 = vadd.f32 %v1712, %v1768
    %v1773 = vadd.f32 %v1713, %v1769
    %s1774 = scalar_lea.vmem [#allocation8], 39
    %v1775 = vld [vmem:[%s1774] ss:$8 sm:$0x3]
    %v1777 = vlaneseq
    %v1778 = vshrl.u32 %v1777, 7
    %v1779 = vsub.s32 0, %v1778
    %v1780 = vrot.slane %v1775, %v1779
    %v1781 = vlaneseq
    %v1782 = vshrl.u32 %v1781, 7
    %v1783 = vsub.s32 1, %v1782
    %v1784 = vrot.slane %v1775, %v1783
    %v1785 = vcombine.low %v1780, %v1784
    %v1787 = vunpack.c.l.s4 1966171168
    %v1788 = vunpack.c.0.s8 %v1787
    %v1789 = vlaneseq
    %v1790 = vshrl.u32 %v1789, 7
    %v1791 = vsub.s32 %v1788, %v1790
    %v1792 = vrot.slane %v1785, %v1791
    %v1793 = vcombine.high %v1792, %v1792
    %v1795 = vunpack.c.l.s4 1966171168
    %v1796 = vunpack.c.0.s8 %v1795
    %v1797 = vlaneseq
    %v1798 = vshrl.u32 %v1797, 7
    %v1799 = vsub.s32 %v1796, %v1798
    %v1800 = vrot.slane %v1792, %v1799
    %v1802 = vunpack.c.l.s4 1966171168
    %v1803 = vunpack.c.0.s8 %v1802
    %v1804 = vlaneseq
    %v1805 = vshrl.u32 %v1804, 7
    %v1806 = vsub.s32 %v1803, %v1805
    %v1807 = vrot.slane %v1793, %v1806
    %1808 = vrot.lane.b32.xlu0 %v1800, 127
    %v1809 = vpop.permute.xlu0 %1808
    %1810 = vrot.lane.b32.xlu0 %v1807, 127
    %v1811 = vpop.permute.xlu0 %1810
    %v1812 = vrot.slane %v1809, 7
    %v1813 = vrot.slane %v1811, 7
    %v1814 = vsel %vm477, %v1812, %v1809
    %v1815 = vsel %vm477, %v1813, %v1811
    %v1818 = vmul.f32 %v371, %v1814
    %v1819 = vmul.f32 %v373, %v1815
    %1822 = vrot.lane.b32.xlu0 %v1818, 78
    %v1823 = vpop.permute.xlu0 %1822
    %1824 = vrot.lane.b32.xlu0 %v1819, 78
    %v1825 = vpop.permute.xlu0 %1824
    %v1826 = vrot.slane %v1823, 1
    %v1827 = vrot.slane %v1825, 1
    %v1828 = vsel %vm462, %v1823, %v1826
    %v1829 = vsel %vm462, %v1825, %v1827
    %v1832 = vadd.f32 %v1772, %v1828
    %v1833 = vadd.f32 %v1773, %v1829
    %s1834 = scalar_lea.vmem [#allocation8], 48
    %v1835 = vld [vmem:[%s1834] ss:$8 sm:$0x3]
    %v1837 = vlaneseq
    %v1838 = vshrl.u32 %v1837, 7
    %v1839 = vsub.s32 0, %v1838
    %v1840 = vrot.slane %v1835, %v1839
    %v1841 = vlaneseq
    %v1842 = vshrl.u32 %v1841, 7
    %v1843 = vsub.s32 1, %v1842
    %v1844 = vrot.slane %v1835, %v1843
    %v1847 = vrot.slane %v371, 1
    %v1848 = vrot.slane %v373, 1
    %v1851 = vcombine.low %v1840, %v1844
    %v1853 = vunpack.c.l.s4 1966171168
    %v1854 = vunpack.c.0.s8 %v1853
    %v1855 = vlaneseq
    %v1856 = vshrl.u32 %v1855, 7
    %v1857 = vsub.s32 %v1854, %v1856
    %v1858 = vrot.slane %v1851, %v1857
    %v1859 = vcombine.high %v1858, %v1858
    %v1861 = vunpack.c.l.s4 1966171168
    %v1862 = vunpack.c.0.s8 %v1861
    %v1863 = vlaneseq
    %v1864 = vshrl.u32 %v1863, 7
    %v1865 = vsub.s32 %v1862, %v1864
    %v1866 = vrot.slane %v1858, %v1865
    %v1868 = vunpack.c.l.s4 1966171168
    %v1869 = vunpack.c.0.s8 %v1868
    %v1870 = vlaneseq
    %v1871 = vshrl.u32 %v1870, 7
    %v1872 = vsub.s32 %v1869, %v1871
    %v1873 = vrot.slane %v1859, %v1872
    %v1876 = vmul.f32 %v1847, %v1866
    %v1877 = vmul.f32 %v1848, %v1873
    %1880 = vrot.lane.b32.xlu0 %v1876, 77
    %v1881 = vpop.permute.xlu0 %1880
    %1882 = vrot.lane.b32.xlu0 %v1877, 77
    %v1883 = vpop.permute.xlu0 %1882
    %v1884 = vrot.slane %v1881, 7
    %v1885 = vrot.slane %v1883, 7
    %v1886 = vsel %vm413, %v1884, %v1881
    %v1887 = vsel %vm413, %v1885, %v1883
    %v1890 = vadd.f32 %v1832, %v1886
    %v1891 = vadd.f32 %v1833, %v1887
    %s1892 = scalar_lea.vmem [#allocation8], 49
    %v1893 = vld [vmem:[%s1892] ss:$8 sm:$0x3]
    %v1895 = vlaneseq
    %v1896 = vshrl.u32 %v1895, 7
    %v1897 = vsub.s32 0, %v1896
    %v1898 = vrot.slane %v1893, %v1897
    %v1899 = vlaneseq
    %v1900 = vshrl.u32 %v1899, 7
    %v1901 = vsub.s32 1, %v1900
    %v1902 = vrot.slane %v1893, %v1901
    %1903 = vrot.lane.b32.xlu0 %v371, 127
    %v1904 = vpop.permute.xlu0 %1903
    %1905 = vrot.lane.b32.xlu0 %v373, 127
    %v1906 = vpop.permute.xlu0 %1905
    %v1907 = vrot.slane %v1904, 1
    %v1908 = vrot.slane %v1906, 1
    %v1909 = vrot.slane %v1904, 2
    %v1910 = vrot.slane %v1906, 2
    %v1911 = vsel %vm477, %v1907, %v1909
    %v1912 = vsel %vm477, %v1908, %v1910
    %v1915 = vcombine.low %v1898, %v1902
    %v1917 = vunpack.c.l.s4 1966171168
    %v1918 = vunpack.c.0.s8 %v1917
    %v1919 = vlaneseq
    %v1920 = vshrl.u32 %v1919, 7
    %v1921 = vsub.s32 %v1918, %v1920
    %v1922 = vrot.slane %v1915, %v1921
    %v1923 = vcombine.high %v1922, %v1922
    %v1925 = vunpack.c.l.s4 1966171168
    %v1926 = vunpack.c.0.s8 %v1925
    %v1927 = vlaneseq
    %v1928 = vshrl.u32 %v1927, 7
    %v1929 = vsub.s32 %v1926, %v1928
    %v1930 = vrot.slane %v1922, %v1929
    %v1932 = vunpack.c.l.s4 1966171168
    %v1933 = vunpack.c.0.s8 %v1932
    %v1934 = vlaneseq
    %v1935 = vshrl.u32 %v1934, 7
    %v1936 = vsub.s32 %v1933, %v1935
    %v1937 = vrot.slane %v1923, %v1936
    %v1940 = vmul.f32 %v1911, %v1930
    %v1941 = vmul.f32 %v1912, %v1937
    %1944 = vrot.lane.b32.xlu0 %v1940, 77
    %v1945 = vpop.permute.xlu0 %1944
    %1946 = vrot.lane.b32.xlu0 %v1941, 77
    %v1947 = vpop.permute.xlu0 %1946
    %v1948 = vrot.slane %v1945, 7
    %v1949 = vrot.slane %v1947, 7
    %v1950 = vsel %vm413, %v1948, %v1945
    %v1951 = vsel %vm413, %v1949, %v1947
    %v1954 = vadd.f32 %v1890, %v1950
    %v1955 = vadd.f32 %v1891, %v1951
    %s1956 = scalar_lea.vmem [#allocation8], 50
    %v1957 = vld [vmem:[%s1956] ss:$8 sm:$0x3]
    %v1959 = vlaneseq
    %v1960 = vshrl.u32 %v1959, 7
    %v1961 = vsub.s32 0, %v1960
    %v1962 = vrot.slane %v1957, %v1961
    %v1963 = vlaneseq
    %v1964 = vshrl.u32 %v1963, 7
    %v1965 = vsub.s32 1, %v1964
    %v1966 = vrot.slane %v1957, %v1965
    %1967 = vrot.lane.b32.xlu0 %v371, 126
    %v1968 = vpop.permute.xlu0 %1967
    %1969 = vrot.lane.b32.xlu0 %v373, 126
    %v1970 = vpop.permute.xlu0 %1969
    %v1971 = vrot.slane %v1968, 1
    %v1972 = vrot.slane %v1970, 1
    %v1973 = vrot.slane %v1968, 2
    %v1974 = vrot.slane %v1970, 2
    %v1975 = vsel %vm539, %v1971, %v1973
    %v1976 = vsel %vm539, %v1972, %v1974
    %v1979 = vcombine.low %v1962, %v1966
    %v1981 = vunpack.c.l.s4 1966171168
    %v1982 = vunpack.c.0.s8 %v1981
    %v1983 = vlaneseq
    %v1984 = vshrl.u32 %v1983, 7
    %v1985 = vsub.s32 %v1982, %v1984
    %v1986 = vrot.slane %v1979, %v1985
    %v1987 = vcombine.high %v1986, %v1986
    %v1989 = vunpack.c.l.s4 1966171168
    %v1990 = vunpack.c.0.s8 %v1989
    %v1991 = vlaneseq
    %v1992 = vshrl.u32 %v1991, 7
    %v1993 = vsub.s32 %v1990, %v1992
    %v1994 = vrot.slane %v1986, %v1993
    %v1996 = vunpack.c.l.s4 1966171168
    %v1997 = vunpack.c.0.s8 %v1996
    %v1998 = vlaneseq
    %v1999 = vshrl.u32 %v1998, 7
    %v2000 = vsub.s32 %v1997, %v1999
    %v2001 = vrot.slane %v1987, %v2000
    %v2004 = vmul.f32 %v1975, %v1994
    %v2005 = vmul.f32 %v1976, %v2001
    %2008 = vrot.lane.b32.xlu0 %v2004, 77
    %v2009 = vpop.permute.xlu0 %2008
    %2010 = vrot.lane.b32.xlu0 %v2005, 77
    %v2011 = vpop.permute.xlu0 %2010
    %v2012 = vrot.slane %v2009, 7
    %v2013 = vrot.slane %v2011, 7
    %v2014 = vsel %vm413, %v2012, %v2009
    %v2015 = vsel %vm413, %v2013, %v2011
    %v2018 = vadd.f32 %v1954, %v2014
    %v2019 = vadd.f32 %v1955, %v2015
    %s2020 = scalar_lea.vmem [#allocation8], 51
    %v2021 = vld [vmem:[%s2020] ss:$8 sm:$0x3]
    %v2023 = vlaneseq
    %v2024 = vshrl.u32 %v2023, 7
    %v2025 = vsub.s32 0, %v2024
    %v2026 = vrot.slane %v2021, %v2025
    %v2027 = vlaneseq
    %v2028 = vshrl.u32 %v2027, 7
    %v2029 = vsub.s32 1, %v2028
    %v2030 = vrot.slane %v2021, %v2029
    %2031 = vrot.lane.b32.xlu0 %v371, 125
    %v2032 = vpop.permute.xlu0 %2031
    %2033 = vrot.lane.b32.xlu0 %v373, 125
    %v2034 = vpop.permute.xlu0 %2033
    %v2035 = vrot.slane %v2032, 1
    %v2036 = vrot.slane %v2034, 1
    %v2037 = vrot.slane %v2032, 2
    %v2038 = vrot.slane %v2034, 2
    %v2039 = vsel %vm601, %v2035, %v2037
    %v2040 = vsel %vm601, %v2036, %v2038
    %v2043 = vcombine.low %v2026, %v2030
    %v2045 = vunpack.c.l.s4 1966171168
    %v2046 = vunpack.c.0.s8 %v2045
    %v2047 = vlaneseq
    %v2048 = vshrl.u32 %v2047, 7
    %v2049 = vsub.s32 %v2046, %v2048
    %v2050 = vrot.slane %v2043, %v2049
    %v2051 = vcombine.high %v2050, %v2050
    %v2053 = vunpack.c.l.s4 1966171168
    %v2054 = vunpack.c.0.s8 %v2053
    %v2055 = vlaneseq
    %v2056 = vshrl.u32 %v2055, 7
    %v2057 = vsub.s32 %v2054, %v2056
    %v2058 = vrot.slane %v2050, %v2057
    %v2060 = vunpack.c.l.s4 1966171168
    %v2061 = vunpack.c.0.s8 %v2060
    %v2062 = vlaneseq
    %v2063 = vshrl.u32 %v2062, 7
    %v2064 = vsub.s32 %v2061, %v2063
    %v2065 = vrot.slane %v2051, %v2064
    %v2068 = vmul.f32 %v2039, %v2058
    %v2069 = vmul.f32 %v2040, %v2065
    %2072 = vrot.lane.b32.xlu0 %v2068, 77
    %v2073 = vpop.permute.xlu0 %2072
    %2074 = vrot.lane.b32.xlu0 %v2069, 77
    %v2075 = vpop.permute.xlu0 %2074
    %v2076 = vrot.slane %v2073, 7
    %v2077 = vrot.slane %v2075, 7
    %v2078 = vsel %vm413, %v2076, %v2073
    %v2079 = vsel %vm413, %v2077, %v2075
    %v2082 = vadd.f32 %v2018, %v2078
    %v2083 = vadd.f32 %v2019, %v2079
    %s2084 = scalar_lea.vmem [#allocation8], 52
    %v2085 = vld [vmem:[%s2084] ss:$8 sm:$0x3]
    %v2087 = vlaneseq
    %v2088 = vshrl.u32 %v2087, 7
    %v2089 = vsub.s32 0, %v2088
    %v2090 = vrot.slane %v2085, %v2089
    %v2091 = vlaneseq
    %v2092 = vshrl.u32 %v2091, 7
    %v2093 = vsub.s32 1, %v2092
    %v2094 = vrot.slane %v2085, %v2093
    %2095 = vrot.lane.b32.xlu0 %v371, 115
    %v2096 = vpop.permute.xlu0 %2095
    %2097 = vrot.lane.b32.xlu0 %v373, 115
    %v2098 = vpop.permute.xlu0 %2097
    %v2099 = vrot.slane %v2096, 1
    %v2100 = vrot.slane %v2098, 1
    %v2101 = vrot.slane %v2096, 2
    %v2102 = vrot.slane %v2098, 2
    %v2103 = vsel %vm1632, %v2099, %v2101
    %v2104 = vsel %vm1632, %v2100, %v2102
    %v2107 = vcombine.low %v2090, %v2094
    %v2109 = vunpack.c.l.s4 1966171168
    %v2110 = vunpack.c.0.s8 %v2109
    %v2111 = vlaneseq
    %v2112 = vshrl.u32 %v2111, 7
    %v2113 = vsub.s32 %v2110, %v2112
    %v2114 = vrot.slane %v2107, %v2113
    %v2115 = vcombine.high %v2114, %v2114
    %v2117 = vunpack.c.l.s4 1966171168
    %v2118 = vunpack.c.0.s8 %v2117
    %v2119 = vlaneseq
    %v2120 = vshrl.u32 %v2119, 7
    %v2121 = vsub.s32 %v2118, %v2120
    %v2122 = vrot.slane %v2114, %v2121
    %v2124 = vunpack.c.l.s4 1966171168
    %v2125 = vunpack.c.0.s8 %v2124
    %v2126 = vlaneseq
    %v2127 = vshrl.u32 %v2126, 7
    %v2128 = vsub.s32 %v2125, %v2127
    %v2129 = vrot.slane %v2115, %v2128
    %v2132 = vmul.f32 %v2103, %v2122
    %v2133 = vmul.f32 %v2104, %v2129
    %2136 = vrot.lane.b32.xlu0 %v2132, 77
    %v2137 = vpop.permute.xlu0 %2136
    %2138 = vrot.lane.b32.xlu0 %v2133, 77
    %v2139 = vpop.permute.xlu0 %2138
    %v2140 = vrot.slane %v2137, 7
    %v2141 = vrot.slane %v2139, 7
    %v2142 = vsel %vm413, %v2140, %v2137
    %v2143 = vsel %vm413, %v2141, %v2139
    %v2146 = vadd.f32 %v2082, %v2142
    %v2147 = vadd.f32 %v2083, %v2143
    %s2148 = scalar_lea.vmem [#allocation8], 53
    %v2149 = vld [vmem:[%s2148] ss:$8 sm:$0x3]
    %v2151 = vlaneseq
    %v2152 = vshrl.u32 %v2151, 7
    %v2153 = vsub.s32 0, %v2152
    %v2154 = vrot.slane %v2149, %v2153
    %v2155 = vlaneseq
    %v2156 = vshrl.u32 %v2155, 7
    %v2157 = vsub.s32 1, %v2156
    %v2158 = vrot.slane %v2149, %v2157
    %2159 = vrot.lane.b32.xlu0 %v371, 114
    %v2160 = vpop.permute.xlu0 %2159
    %2161 = vrot.lane.b32.xlu0 %v373, 114
    %v2162 = vpop.permute.xlu0 %2161
    %v2163 = vrot.slane %v2160, 1
    %v2164 = vrot.slane %v2162, 1
    %v2165 = vrot.slane %v2160, 2
    %v2166 = vrot.slane %v2162, 2
    %v2167 = vsel %vm1570, %v2163, %v2165
    %v2168 = vsel %vm1570, %v2164, %v2166
    %v2171 = vcombine.low %v2154, %v2158
    %v2173 = vunpack.c.l.s4 1966171168
    %v2174 = vunpack.c.0.s8 %v2173
    %v2175 = vlaneseq
    %v2176 = vshrl.u32 %v2175, 7
    %v2177 = vsub.s32 %v2174, %v2176
    %v2178 = vrot.slane %v2171, %v2177
    %v2179 = vcombine.high %v2178, %v2178
    %v2181 = vunpack.c.l.s4 1966171168
    %v2182 = vunpack.c.0.s8 %v2181
    %v2183 = vlaneseq
    %v2184 = vshrl.u32 %v2183, 7
    %v2185 = vsub.s32 %v2182, %v2184
    %v2186 = vrot.slane %v2178, %v2185
    %v2188 = vunpack.c.l.s4 1966171168
    %v2189 = vunpack.c.0.s8 %v2188
    %v2190 = vlaneseq
    %v2191 = vshrl.u32 %v2190, 7
    %v2192 = vsub.s32 %v2189, %v2191
    %v2193 = vrot.slane %v2179, %v2192
    %v2196 = vmul.f32 %v2167, %v2186
    %v2197 = vmul.f32 %v2168, %v2193
    %2200 = vrot.lane.b32.xlu0 %v2196, 77
    %v2201 = vpop.permute.xlu0 %2200
    %2202 = vrot.lane.b32.xlu0 %v2197, 77
    %v2203 = vpop.permute.xlu0 %2202
    %v2204 = vrot.slane %v2201, 7
    %v2205 = vrot.slane %v2203, 7
    %v2206 = vsel %vm413, %v2204, %v2201
    %v2207 = vsel %vm413, %v2205, %v2203
    %v2210 = vadd.f32 %v2146, %v2206
    %v2211 = vadd.f32 %v2147, %v2207
    %s2212 = scalar_lea.vmem [#allocation8], 54
    %v2213 = vld [vmem:[%s2212] ss:$8 sm:$0x3]
    %v2215 = vlaneseq
    %v2216 = vshrl.u32 %v2215, 7
    %v2217 = vsub.s32 0, %v2216
    %v2218 = vrot.slane %v2213, %v2217
    %v2219 = vlaneseq
    %v2220 = vshrl.u32 %v2219, 7
    %v2221 = vsub.s32 1, %v2220
    %v2222 = vrot.slane %v2213, %v2221
    %2223 = vrot.lane.b32.xlu0 %v371, 113
    %v2224 = vpop.permute.xlu0 %2223
    %2225 = vrot.lane.b32.xlu0 %v373, 113
    %v2226 = vpop.permute.xlu0 %2225
    %v2227 = vrot.slane %v2224, 1
    %v2228 = vrot.slane %v2226, 1
    %v2229 = vrot.slane %v2224, 2
    %v2230 = vrot.slane %v2226, 2
    %v2231 = vsel %vm1508, %v2227, %v2229
    %v2232 = vsel %vm1508, %v2228, %v2230
    %v2235 = vcombine.low %v2218, %v2222
    %v2237 = vunpack.c.l.s4 1966171168
    %v2238 = vunpack.c.0.s8 %v2237
    %v2239 = vlaneseq
    %v2240 = vshrl.u32 %v2239, 7
    %v2241 = vsub.s32 %v2238, %v2240
    %v2242 = vrot.slane %v2235, %v2241
    %v2243 = vcombine.high %v2242, %v2242
    %v2245 = vunpack.c.l.s4 1966171168
    %v2246 = vunpack.c.0.s8 %v2245
    %v2247 = vlaneseq
    %v2248 = vshrl.u32 %v2247, 7
    %v2249 = vsub.s32 %v2246, %v2248
    %v2250 = vrot.slane %v2242, %v2249
    %v2252 = vunpack.c.l.s4 1966171168
    %v2253 = vunpack.c.0.s8 %v2252
    %v2254 = vlaneseq
    %v2255 = vshrl.u32 %v2254, 7
    %v2256 = vsub.s32 %v2253, %v2255
    %v2257 = vrot.slane %v2243, %v2256
    %v2260 = vmul.f32 %v2231, %v2250
    %v2261 = vmul.f32 %v2232, %v2257
    %2264 = vrot.lane.b32.xlu0 %v2260, 77
    %v2265 = vpop.permute.xlu0 %2264
    %2266 = vrot.lane.b32.xlu0 %v2261, 77
    %v2267 = vpop.permute.xlu0 %2266
    %v2268 = vrot.slane %v2265, 7
    %v2269 = vrot.slane %v2267, 7
    %v2270 = vsel %vm413, %v2268, %v2265
    %v2271 = vsel %vm413, %v2269, %v2267
    %v2274 = vadd.f32 %v2210, %v2270
    %v2275 = vadd.f32 %v2211, %v2271
    %s2276 = scalar_lea.vmem [#allocation8], 55
    %v2277 = vld [vmem:[%s2276] ss:$8 sm:$0x3]
    %v2279 = vlaneseq
    %v2280 = vshrl.u32 %v2279, 7
    %v2281 = vsub.s32 0, %v2280
    %v2282 = vrot.slane %v2277, %v2281
    %v2283 = vlaneseq
    %v2284 = vshrl.u32 %v2283, 7
    %v2285 = vsub.s32 1, %v2284
    %v2286 = vrot.slane %v2277, %v2285
    %2287 = vrot.lane.b32.xlu0 %v371, 112
    %v2288 = vpop.permute.xlu0 %2287
    %2289 = vrot.lane.b32.xlu0 %v373, 112
    %v2290 = vpop.permute.xlu0 %2289
    %v2291 = vrot.slane %v2288, 1
    %v2292 = vrot.slane %v2290, 1
    %v2293 = vrot.slane %v2288, 2
    %v2294 = vrot.slane %v2290, 2
    %v2295 = vsel %vm849, %v2291, %v2293
    %v2296 = vsel %vm849, %v2292, %v2294
    %v2299 = vcombine.low %v2282, %v2286
    %v2301 = vunpack.c.l.s4 1966171168
    %v2302 = vunpack.c.0.s8 %v2301
    %v2303 = vlaneseq
    %v2304 = vshrl.u32 %v2303, 7
    %v2305 = vsub.s32 %v2302, %v2304
    %v2306 = vrot.slane %v2299, %v2305
    %v2307 = vcombine.high %v2306, %v2306
    %v2309 = vunpack.c.l.s4 1966171168
    %v2310 = vunpack.c.0.s8 %v2309
    %v2311 = vlaneseq
    %v2312 = vshrl.u32 %v2311, 7
    %v2313 = vsub.s32 %v2310, %v2312
    %v2314 = vrot.slane %v2306, %v2313
    %v2316 = vunpack.c.l.s4 1966171168
    %v2317 = vunpack.c.0.s8 %v2316
    %v2318 = vlaneseq
    %v2319 = vshrl.u32 %v2318, 7
    %v2320 = vsub.s32 %v2317, %v2319
    %v2321 = vrot.slane %v2307, %v2320
    %v2324 = vmul.f32 %v2295, %v2314
    %v2325 = vmul.f32 %v2296, %v2321
    %2328 = vrot.lane.b32.xlu0 %v2324, 77
    %v2329 = vpop.permute.xlu0 %2328
    %2330 = vrot.lane.b32.xlu0 %v2325, 77
    %v2331 = vpop.permute.xlu0 %2330
    %v2332 = vrot.slane %v2329, 7
    %v2333 = vrot.slane %v2331, 7
    %v2334 = vsel %vm413, %v2332, %v2329
    %v2335 = vsel %vm413, %v2333, %v2331
    %v2338 = vadd.f32 %v2274, %v2334
    %v2339 = vadd.f32 %v2275, %v2335
    %s2340 = scalar_lea.vmem [#allocation8], 64
    %v2341 = vld [vmem:[%s2340] ss:$8 sm:$0x3]
    %v2343 = vlaneseq
    %v2344 = vshrl.u32 %v2343, 7
    %v2345 = vsub.s32 0, %v2344
    %v2346 = vrot.slane %v2341, %v2345
    %v2347 = vlaneseq
    %v2348 = vshrl.u32 %v2347, 7
    %v2349 = vsub.s32 1, %v2348
    %v2350 = vrot.slane %v2341, %v2349
    %2351 = vrot.lane.b32.xlu0 %v371, 111
    %v2352 = vpop.permute.xlu0 %2351
    %2353 = vrot.lane.b32.xlu0 %v373, 111
    %v2354 = vpop.permute.xlu0 %2353
    %v2355 = vrot.slane %v2352, 1
    %v2356 = vrot.slane %v2354, 1
    %v2357 = vrot.slane %v2352, 2
    %v2358 = vrot.slane %v2354, 2
    %v2359 = vsel %vm911, %v2355, %v2357
    %v2360 = vsel %vm911, %v2356, %v2358
    %v2363 = vcombine.low %v2346, %v2350
    %v2365 = vunpack.c.l.s4 1966171168
    %v2366 = vunpack.c.0.s8 %v2365
    %v2367 = vlaneseq
    %v2368 = vshrl.u32 %v2367, 7
    %v2369 = vsub.s32 %v2366, %v2368
    %v2370 = vrot.slane %v2363, %v2369
    %v2371 = vcombine.high %v2370, %v2370
    %v2373 = vunpack.c.l.s4 1966171168
    %v2374 = vunpack.c.0.s8 %v2373
    %v2375 = vlaneseq
    %v2376 = vshrl.u32 %v2375, 7
    %v2377 = vsub.s32 %v2374, %v2376
    %v2378 = vrot.slane %v2370, %v2377
    %v2380 = vunpack.c.l.s4 1966171168
    %v2381 = vunpack.c.0.s8 %v2380
    %v2382 = vlaneseq
    %v2383 = vshrl.u32 %v2382, 7
    %v2384 = vsub.s32 %v2381, %v2383
    %v2385 = vrot.slane %v2371, %v2384
    %v2388 = vmul.f32 %v2359, %v2378
    %v2389 = vmul.f32 %v2360, %v2385
    %2392 = vrot.lane.b32.xlu0 %v2388, 77
    %v2393 = vpop.permute.xlu0 %2392
    %2394 = vrot.lane.b32.xlu0 %v2389, 77
    %v2395 = vpop.permute.xlu0 %2394
    %v2396 = vrot.slane %v2393, 7
    %v2397 = vrot.slane %v2395, 7
    %v2398 = vsel %vm413, %v2396, %v2393
    %v2399 = vsel %vm413, %v2397, %v2395
    %v2402 = vadd.f32 %v2338, %v2398
    %v2403 = vadd.f32 %v2339, %v2399
    %s2404 = scalar_lea.vmem [#allocation8], 65
    %v2405 = vld [vmem:[%s2404] ss:$8 sm:$0x3]
    %v2407 = vlaneseq
    %v2408 = vshrl.u32 %v2407, 7
    %v2409 = vsub.s32 0, %v2408
    %v2410 = vrot.slane %v2405, %v2409
    %v2411 = vlaneseq
    %v2412 = vshrl.u32 %v2411, 7
    %v2413 = vsub.s32 1, %v2412
    %v2414 = vrot.slane %v2405, %v2413
    %2415 = vrot.lane.b32.xlu0 %v371, 110
    %v2416 = vpop.permute.xlu0 %2415
    %2417 = vrot.lane.b32.xlu0 %v373, 110
    %v2418 = vpop.permute.xlu0 %2417
    %v2419 = vrot.slane %v2416, 1
    %v2420 = vrot.slane %v2418, 1
    %v2421 = vrot.slane %v2416, 2
    %v2422 = vrot.slane %v2418, 2
    %v2423 = vsel %vm973, %v2419, %v2421
    %v2424 = vsel %vm973, %v2420, %v2422
    %v2427 = vcombine.low %v2410, %v2414
    %v2429 = vunpack.c.l.s4 1966171168
    %v2430 = vunpack.c.0.s8 %v2429
    %v2431 = vlaneseq
    %v2432 = vshrl.u32 %v2431, 7
    %v2433 = vsub.s32 %v2430, %v2432
    %v2434 = vrot.slane %v2427, %v2433
    %v2435 = vcombine.high %v2434, %v2434
    %v2437 = vunpack.c.l.s4 1966171168
    %v2438 = vunpack.c.0.s8 %v2437
    %v2439 = vlaneseq
    %v2440 = vshrl.u32 %v2439, 7
    %v2441 = vsub.s32 %v2438, %v2440
    %v2442 = vrot.slane %v2434, %v2441
    %v2444 = vunpack.c.l.s4 1966171168
    %v2445 = vunpack.c.0.s8 %v2444
    %v2446 = vlaneseq
    %v2447 = vshrl.u32 %v2446, 7
    %v2448 = vsub.s32 %v2445, %v2447
    %v2449 = vrot.slane %v2435, %v2448
    %v2452 = vmul.f32 %v2423, %v2442
    %v2453 = vmul.f32 %v2424, %v2449
    %2456 = vrot.lane.b32.xlu0 %v2452, 77
    %v2457 = vpop.permute.xlu0 %2456
    %2458 = vrot.lane.b32.xlu0 %v2453, 77
    %v2459 = vpop.permute.xlu0 %2458
    %v2460 = vrot.slane %v2457, 7
    %v2461 = vrot.slane %v2459, 7
    %v2462 = vsel %vm413, %v2460, %v2457
    %v2463 = vsel %vm413, %v2461, %v2459
    %v2466 = vadd.f32 %v2402, %v2462
    %v2467 = vadd.f32 %v2403, %v2463
    %s2468 = scalar_lea.vmem [#allocation8], 66
    %v2469 = vld [vmem:[%s2468] ss:$8 sm:$0x3]
    %v2471 = vlaneseq
    %v2472 = vshrl.u32 %v2471, 7
    %v2473 = vsub.s32 0, %v2472
    %v2474 = vrot.slane %v2469, %v2473
    %v2475 = vlaneseq
    %v2476 = vshrl.u32 %v2475, 7
    %v2477 = vsub.s32 1, %v2476
    %v2478 = vrot.slane %v2469, %v2477
    %2479 = vrot.lane.b32.xlu0 %v371, 109
    %v2480 = vpop.permute.xlu0 %2479
    %2481 = vrot.lane.b32.xlu0 %v373, 109
    %v2482 = vpop.permute.xlu0 %2481
    %v2483 = vrot.slane %v2480, 1
    %v2484 = vrot.slane %v2482, 1
    %v2485 = vrot.slane %v2480, 2
    %v2486 = vrot.slane %v2482, 2
    %v2487 = vsel %vm1035, %v2483, %v2485
    %v2488 = vsel %vm1035, %v2484, %v2486
    %v2491 = vcombine.low %v2474, %v2478
    %v2493 = vunpack.c.l.s4 1966171168
    %v2494 = vunpack.c.0.s8 %v2493
    %v2495 = vlaneseq
    %v2496 = vshrl.u32 %v2495, 7
    %v2497 = vsub.s32 %v2494, %v2496
    %v2498 = vrot.slane %v2491, %v2497
    %v2499 = vcombine.high %v2498, %v2498
    %v2501 = vunpack.c.l.s4 1966171168
    %v2502 = vunpack.c.0.s8 %v2501
    %v2503 = vlaneseq
    %v2504 = vshrl.u32 %v2503, 7
    %v2505 = vsub.s32 %v2502, %v2504
    %v2506 = vrot.slane %v2498, %v2505
    %v2508 = vunpack.c.l.s4 1966171168
    %v2509 = vunpack.c.0.s8 %v2508
    %v2510 = vlaneseq
    %v2511 = vshrl.u32 %v2510, 7
    %v2512 = vsub.s32 %v2509, %v2511
    %v2513 = vrot.slane %v2499, %v2512
    %v2516 = vmul.f32 %v2487, %v2506
    %v2517 = vmul.f32 %v2488, %v2513
    %2520 = vrot.lane.b32.xlu0 %v2516, 77
    %v2521 = vpop.permute.xlu0 %2520
    %2522 = vrot.lane.b32.xlu0 %v2517, 77
    %v2523 = vpop.permute.xlu0 %2522
    %v2524 = vrot.slane %v2521, 7
    %v2525 = vrot.slane %v2523, 7
    %v2526 = vsel %vm413, %v2524, %v2521
    %v2527 = vsel %vm413, %v2525, %v2523
    %v2530 = vadd.f32 %v2466, %v2526
    %v2531 = vadd.f32 %v2467, %v2527
    %s2532 = scalar_lea.vmem [#allocation8], 67
    %v2533 = vld [vmem:[%s2532] ss:$8 sm:$0x3]
    %v2535 = vlaneseq
    %v2536 = vshrl.u32 %v2535, 7
    %v2537 = vsub.s32 0, %v2536
    %v2538 = vrot.slane %v2533, %v2537
    %v2539 = vlaneseq
    %v2540 = vshrl.u32 %v2539, 7
    %v2541 = vsub.s32 1, %v2540
    %v2542 = vrot.slane %v2533, %v2541
    %2543 = vrot.lane.b32.xlu0 %v371, 99
    %v2544 = vpop.permute.xlu0 %2543
    %2545 = vrot.lane.b32.xlu0 %v373, 99
    %v2546 = vpop.permute.xlu0 %2545
    %v2547 = vrot.slane %v2544, 1
    %v2548 = vrot.slane %v2546, 1
    %v2549 = vrot.slane %v2544, 2
    %v2550 = vrot.slane %v2546, 2
    %v2551 = vsel %vm1206, %v2547, %v2549
    %v2552 = vsel %vm1206, %v2548, %v2550
    %v2555 = vcombine.low %v2538, %v2542
    %v2557 = vunpack.c.l.s4 1966171168
    %v2558 = vunpack.c.0.s8 %v2557
    %v2559 = vlaneseq
    %v2560 = vshrl.u32 %v2559, 7
    %v2561 = vsub.s32 %v2558, %v2560
    %v2562 = vrot.slane %v2555, %v2561
    %v2563 = vcombine.high %v2562, %v2562
    %v2565 = vunpack.c.l.s4 1966171168
    %v2566 = vunpack.c.0.s8 %v2565
    %v2567 = vlaneseq
    %v2568 = vshrl.u32 %v2567, 7
    %v2569 = vsub.s32 %v2566, %v2568
    %v2570 = vrot.slane %v2562, %v2569
    %v2572 = vunpack.c.l.s4 1966171168
    %v2573 = vunpack.c.0.s8 %v2572
    %v2574 = vlaneseq
    %v2575 = vshrl.u32 %v2574, 7
    %v2576 = vsub.s32 %v2573, %v2575
    %v2577 = vrot.slane %v2563, %v2576
    %v2580 = vmul.f32 %v2551, %v2570
    %v2581 = vmul.f32 %v2552, %v2577
    %2584 = vrot.lane.b32.xlu0 %v2580, 77
    %v2585 = vpop.permute.xlu0 %2584
    %2586 = vrot.lane.b32.xlu0 %v2581, 77
    %v2587 = vpop.permute.xlu0 %2586
    %v2588 = vrot.slane %v2585, 7
    %v2589 = vrot.slane %v2587, 7
    %v2590 = vsel %vm413, %v2588, %v2585
    %v2591 = vsel %vm413, %v2589, %v2587
    %v2594 = vadd.f32 %v2530, %v2590
    %v2595 = vadd.f32 %v2531, %v2591
    %s2596 = scalar_lea.vmem [#allocation8], 68
    %v2597 = vld [vmem:[%s2596] ss:$8 sm:$0x3]
    %v2599 = vlaneseq
    %v2600 = vshrl.u32 %v2599, 7
    %v2601 = vsub.s32 0, %v2600
    %v2602 = vrot.slane %v2597, %v2601
    %v2603 = vlaneseq
    %v2604 = vshrl.u32 %v2603, 7
    %v2605 = vsub.s32 1, %v2604
    %v2606 = vrot.slane %v2597, %v2605
    %2607 = vrot.lane.b32.xlu0 %v371, 98
    %v2608 = vpop.permute.xlu0 %2607
    %2609 = vrot.lane.b32.xlu0 %v373, 98
    %v2610 = vpop.permute.xlu0 %2609
    %v2611 = vrot.slane %v2608, 1
    %v2612 = vrot.slane %v2610, 1
    %v2613 = vrot.slane %v2608, 2
    %v2614 = vrot.slane %v2610, 2
    %v2615 = vsel %vm1144, %v2611, %v2613
    %v2616 = vsel %vm1144, %v2612, %v2614
    %v2619 = vcombine.low %v2602, %v2606
    %v2621 = vunpack.c.l.s4 1966171168
    %v2622 = vunpack.c.0.s8 %v2621
    %v2623 = vlaneseq
    %v2624 = vshrl.u32 %v2623, 7
    %v2625 = vsub.s32 %v2622, %v2624
    %v2626 = vrot.slane %v2619, %v2625
    %v2627 = vcombine.high %v2626, %v2626
    %v2629 = vunpack.c.l.s4 1966171168
    %v2630 = vunpack.c.0.s8 %v2629
    %v2631 = vlaneseq
    %v2632 = vshrl.u32 %v2631, 7
    %v2633 = vsub.s32 %v2630, %v2632
    %v2634 = vrot.slane %v2626, %v2633
    %v2636 = vunpack.c.l.s4 1966171168
    %v2637 = vunpack.c.0.s8 %v2636
    %v2638 = vlaneseq
    %v2639 = vshrl.u32 %v2638, 7
    %v2640 = vsub.s32 %v2637, %v2639
    %v2641 = vrot.slane %v2627, %v2640
    %v2644 = vmul.f32 %v2615, %v2634
    %v2645 = vmul.f32 %v2616, %v2641
    %2648 = vrot.lane.b32.xlu0 %v2644, 77
    %v2649 = vpop.permute.xlu0 %2648
    %2650 = vrot.lane.b32.xlu0 %v2645, 77
    %v2651 = vpop.permute.xlu0 %2650
    %v2652 = vrot.slane %v2649, 7
    %v2653 = vrot.slane %v2651, 7
    %v2654 = vsel %vm413, %v2652, %v2649
    %v2655 = vsel %vm413, %v2653, %v2651
    %v2658 = vadd.f32 %v2594, %v2654
    %v2659 = vadd.f32 %v2595, %v2655
    %s2660 = scalar_lea.vmem [#allocation8], 69
    %v2661 = vld [vmem:[%s2660] ss:$8 sm:$0x3]
    %v2663 = vlaneseq
    %v2664 = vshrl.u32 %v2663, 7
    %v2665 = vsub.s32 0, %v2664
    %v2666 = vrot.slane %v2661, %v2665
    %v2667 = vlaneseq
    %v2668 = vshrl.u32 %v2667, 7
    %v2669 = vsub.s32 1, %v2668
    %v2670 = vrot.slane %v2661, %v2669
    %2671 = vrot.lane.b32.xlu0 %v371, 97
    %v2672 = vpop.permute.xlu0 %2671
    %2673 = vrot.lane.b32.xlu0 %v373, 97
    %v2674 = vpop.permute.xlu0 %2673
    %v2675 = vrot.slane %v2672, 1
    %v2676 = vrot.slane %v2674, 1
    %v2677 = vrot.slane %v2672, 2
    %v2678 = vrot.slane %v2674, 2
    %v2679 = vsel %vm1082, %v2675, %v2677
    %v2680 = vsel %vm1082, %v2676, %v2678
    %v2683 = vcombine.low %v2666, %v2670
    %v2685 = vunpack.c.l.s4 1966171168
    %v2686 = vunpack.c.0.s8 %v2685
    %v2687 = vlaneseq
    %v2688 = vshrl.u32 %v2687, 7
    %v2689 = vsub.s32 %v2686, %v2688
    %v2690 = vrot.slane %v2683, %v2689
    %v2691 = vcombine.high %v2690, %v2690
    %v2693 = vunpack.c.l.s4 1966171168
    %v2694 = vunpack.c.0.s8 %v2693
    %v2695 = vlaneseq
    %v2696 = vshrl.u32 %v2695, 7
    %v2697 = vsub.s32 %v2694, %v2696
    %v2698 = vrot.slane %v2690, %v2697
    %v2700 = vunpack.c.l.s4 1966171168
    %v2701 = vunpack.c.0.s8 %v2700
    %v2702 = vlaneseq
    %v2703 = vshrl.u32 %v2702, 7
    %v2704 = vsub.s32 %v2701, %v2703
    %v2705 = vrot.slane %v2691, %v2704
    %v2708 = vmul.f32 %v2679, %v2698
    %v2709 = vmul.f32 %v2680, %v2705
    %2712 = vrot.lane.b32.xlu0 %v2708, 77
    %v2713 = vpop.permute.xlu0 %2712
    %2714 = vrot.lane.b32.xlu0 %v2709, 77
    %v2715 = vpop.permute.xlu0 %2714
    %v2716 = vrot.slane %v2713, 7
    %v2717 = vrot.slane %v2715, 7
    %v2718 = vsel %vm413, %v2716, %v2713
    %v2719 = vsel %vm413, %v2717, %v2715
    %v2722 = vadd.f32 %v2658, %v2718
    %v2723 = vadd.f32 %v2659, %v2719
    %s2724 = scalar_lea.vmem [#allocation8], 70
    %v2725 = vld [vmem:[%s2724] ss:$8 sm:$0x3]
    %v2727 = vlaneseq
    %v2728 = vshrl.u32 %v2727, 7
    %v2729 = vsub.s32 0, %v2728
    %v2730 = vrot.slane %v2725, %v2729
    %v2731 = vlaneseq
    %v2732 = vshrl.u32 %v2731, 7
    %v2733 = vsub.s32 1, %v2732
    %v2734 = vrot.slane %v2725, %v2733
    %2735 = vrot.lane.b32.xlu0 %v371, 96
    %v2736 = vpop.permute.xlu0 %2735
    %2737 = vrot.lane.b32.xlu0 %v373, 96
    %v2738 = vpop.permute.xlu0 %2737
    %v2739 = vrot.slane %v2736, 1
    %v2740 = vrot.slane %v2738, 1
    %v2741 = vrot.slane %v2736, 2
    %v2742 = vrot.slane %v2738, 2
    %v2743 = vsel %vm1020, %v2739, %v2741
    %v2744 = vsel %vm1020, %v2740, %v2742
    %v2747 = vcombine.low %v2730, %v2734
    %v2749 = vunpack.c.l.s4 1966171168
    %v2750 = vunpack.c.0.s8 %v2749
    %v2751 = vlaneseq
    %v2752 = vshrl.u32 %v2751, 7
    %v2753 = vsub.s32 %v2750, %v2752
    %v2754 = vrot.slane %v2747, %v2753
    %v2755 = vcombine.high %v2754, %v2754
    %v2757 = vunpack.c.l.s4 1966171168
    %v2758 = vunpack.c.0.s8 %v2757
    %v2759 = vlaneseq
    %v2760 = vshrl.u32 %v2759, 7
    %v2761 = vsub.s32 %v2758, %v2760
    %v2762 = vrot.slane %v2754, %v2761
    %v2764 = vunpack.c.l.s4 1966171168
    %v2765 = vunpack.c.0.s8 %v2764
    %v2766 = vlaneseq
    %v2767 = vshrl.u32 %v2766, 7
    %v2768 = vsub.s32 %v2765, %v2767
    %v2769 = vrot.slane %v2755, %v2768
    %v2772 = vmul.f32 %v2743, %v2762
    %v2773 = vmul.f32 %v2744, %v2769
    %2776 = vrot.lane.b32.xlu0 %v2772, 77
    %v2777 = vpop.permute.xlu0 %2776
    %2778 = vrot.lane.b32.xlu0 %v2773, 77
    %v2779 = vpop.permute.xlu0 %2778
    %v2780 = vrot.slane %v2777, 7
    %v2781 = vrot.slane %v2779, 7
    %v2782 = vsel %vm413, %v2780, %v2777
    %v2783 = vsel %vm413, %v2781, %v2779
    %v2786 = vadd.f32 %v2722, %v2782
    %v2787 = vadd.f32 %v2723, %v2783
    %s2788 = scalar_lea.vmem [#allocation8], 71
    %v2789 = vld [vmem:[%s2788] ss:$8 sm:$0x3]
    %v2791 = vlaneseq
    %v2792 = vshrl.u32 %v2791, 7
    %v2793 = vsub.s32 0, %v2792
    %v2794 = vrot.slane %v2789, %v2793
    %v2795 = vlaneseq
    %v2796 = vshrl.u32 %v2795, 7
    %v2797 = vsub.s32 1, %v2796
    %v2798 = vrot.slane %v2789, %v2797
    %2799 = vrot.lane.b32.xlu0 %v371, 95
    %v2800 = vpop.permute.xlu0 %2799
    %2801 = vrot.lane.b32.xlu0 %v373, 95
    %v2802 = vpop.permute.xlu0 %2801
    %v2803 = vrot.slane %v2800, 1
    %v2804 = vrot.slane %v2802, 1
    %v2805 = vrot.slane %v2800, 2
    %v2806 = vrot.slane %v2802, 2
    %v2807 = vsel %vm958, %v2803, %v2805
    %v2808 = vsel %vm958, %v2804, %v2806
    %v2811 = vcombine.low %v2794, %v2798
    %v2813 = vunpack.c.l.s4 1966171168
    %v2814 = vunpack.c.0.s8 %v2813
    %v2815 = vlaneseq
    %v2816 = vshrl.u32 %v2815, 7
    %v2817 = vsub.s32 %v2814, %v2816
    %v2818 = vrot.slane %v2811, %v2817
    %v2819 = vcombine.high %v2818, %v2818
    %v2821 = vunpack.c.l.s4 1966171168
    %v2822 = vunpack.c.0.s8 %v2821
    %v2823 = vlaneseq
    %v2824 = vshrl.u32 %v2823, 7
    %v2825 = vsub.s32 %v2822, %v2824
    %v2826 = vrot.slane %v2818, %v2825
    %v2828 = vunpack.c.l.s4 1966171168
    %v2829 = vunpack.c.0.s8 %v2828
    %v2830 = vlaneseq
    %v2831 = vshrl.u32 %v2830, 7
    %v2832 = vsub.s32 %v2829, %v2831
    %v2833 = vrot.slane %v2819, %v2832
    %v2836 = vmul.f32 %v2807, %v2826
    %v2837 = vmul.f32 %v2808, %v2833
    %2840 = vrot.lane.b32.xlu0 %v2836, 77
    %v2841 = vpop.permute.xlu0 %2840
    %2842 = vrot.lane.b32.xlu0 %v2837, 77
    %v2843 = vpop.permute.xlu0 %2842
    %v2844 = vrot.slane %v2841, 7
    %v2845 = vrot.slane %v2843, 7
    %v2846 = vsel %vm413, %v2844, %v2841
    %v2847 = vsel %vm413, %v2845, %v2843
    %v2850 = vadd.f32 %v2786, %v2846
    %v2851 = vadd.f32 %v2787, %v2847
    %s2852 = scalar_lea.vmem [#allocation8], 80
    %v2853 = vld [vmem:[%s2852] ss:$8 sm:$0x3]
    %v2855 = vlaneseq
    %v2856 = vshrl.u32 %v2855, 7
    %v2857 = vsub.s32 0, %v2856
    %v2858 = vrot.slane %v2853, %v2857
    %v2859 = vlaneseq
    %v2860 = vshrl.u32 %v2859, 7
    %v2861 = vsub.s32 1, %v2860
    %v2862 = vrot.slane %v2853, %v2861
    %2863 = vrot.lane.b32.xlu0 %v371, 94
    %v2864 = vpop.permute.xlu0 %2863
    %2865 = vrot.lane.b32.xlu0 %v373, 94
    %v2866 = vpop.permute.xlu0 %2865
    %v2867 = vrot.slane %v2864, 1
    %v2868 = vrot.slane %v2866, 1
    %v2869 = vrot.slane %v2864, 2
    %v2870 = vrot.slane %v2866, 2
    %v2871 = vsel %vm896, %v2867, %v2869
    %v2872 = vsel %vm896, %v2868, %v2870
    %v2875 = vcombine.low %v2858, %v2862
    %v2877 = vunpack.c.l.s4 1966171168
    %v2878 = vunpack.c.0.s8 %v2877
    %v2879 = vlaneseq
    %v2880 = vshrl.u32 %v2879, 7
    %v2881 = vsub.s32 %v2878, %v2880
    %v2882 = vrot.slane %v2875, %v2881
    %v2883 = vcombine.high %v2882, %v2882
    %v2885 = vunpack.c.l.s4 1966171168
    %v2886 = vunpack.c.0.s8 %v2885
    %v2887 = vlaneseq
    %v2888 = vshrl.u32 %v2887, 7
    %v2889 = vsub.s32 %v2886, %v2888
    %v2890 = vrot.slane %v2882, %v2889
    %v2892 = vunpack.c.l.s4 1966171168
    %v2893 = vunpack.c.0.s8 %v2892
    %v2894 = vlaneseq
    %v2895 = vshrl.u32 %v2894, 7
    %v2896 = vsub.s32 %v2893, %v2895
    %v2897 = vrot.slane %v2883, %v2896
    %v2900 = vmul.f32 %v2871, %v2890
    %v2901 = vmul.f32 %v2872, %v2897
    %2904 = vrot.lane.b32.xlu0 %v2900, 77
    %v2905 = vpop.permute.xlu0 %2904
    %2906 = vrot.lane.b32.xlu0 %v2901, 77
    %v2907 = vpop.permute.xlu0 %2906
    %v2908 = vrot.slane %v2905, 7
    %v2909 = vrot.slane %v2907, 7
    %v2910 = vsel %vm413, %v2908, %v2905
    %v2911 = vsel %vm413, %v2909, %v2907
    %v2914 = vadd.f32 %v2850, %v2910
    %v2915 = vadd.f32 %v2851, %v2911
    %s2916 = scalar_lea.vmem [#allocation8], 81
    %v2917 = vld [vmem:[%s2916] ss:$8 sm:$0x3]
    %v2919 = vlaneseq
    %v2920 = vshrl.u32 %v2919, 7
    %v2921 = vsub.s32 0, %v2920
    %v2922 = vrot.slane %v2917, %v2921
    %v2923 = vlaneseq
    %v2924 = vshrl.u32 %v2923, 7
    %v2925 = vsub.s32 1, %v2924
    %v2926 = vrot.slane %v2917, %v2925
    %2927 = vrot.lane.b32.xlu0 %v371, 93
    %v2928 = vpop.permute.xlu0 %2927
    %2929 = vrot.lane.b32.xlu0 %v373, 93
    %v2930 = vpop.permute.xlu0 %2929
    %v2931 = vrot.slane %v2928, 1
    %v2932 = vrot.slane %v2930, 1
    %v2933 = vrot.slane %v2928, 2
    %v2934 = vrot.slane %v2930, 2
    %v2935 = vsel %vm834, %v2931, %v2933
    %v2936 = vsel %vm834, %v2932, %v2934
    %v2939 = vcombine.low %v2922, %v2926
    %v2941 = vunpack.c.l.s4 1966171168
    %v2942 = vunpack.c.0.s8 %v2941
    %v2943 = vlaneseq
    %v2944 = vshrl.u32 %v2943, 7
    %v2945 = vsub.s32 %v2942, %v2944
    %v2946 = vrot.slane %v2939, %v2945
    %v2947 = vcombine.high %v2946, %v2946
    %v2949 = vunpack.c.l.s4 1966171168
    %v2950 = vunpack.c.0.s8 %v2949
    %v2951 = vlaneseq
    %v2952 = vshrl.u32 %v2951, 7
    %v2953 = vsub.s32 %v2950, %v2952
    %v2954 = vrot.slane %v2946, %v2953
    %v2956 = vunpack.c.l.s4 1966171168
    %v2957 = vunpack.c.0.s8 %v2956
    %v2958 = vlaneseq
    %v2959 = vshrl.u32 %v2958, 7
    %v2960 = vsub.s32 %v2957, %v2959
    %v2961 = vrot.slane %v2947, %v2960
    %v2964 = vmul.f32 %v2935, %v2954
    %v2965 = vmul.f32 %v2936, %v2961
    %2968 = vrot.lane.b32.xlu0 %v2964, 77
    %v2969 = vpop.permute.xlu0 %2968
    %2970 = vrot.lane.b32.xlu0 %v2965, 77
    %v2971 = vpop.permute.xlu0 %2970
    %v2972 = vrot.slane %v2969, 7
    %v2973 = vrot.slane %v2971, 7
    %v2974 = vsel %vm413, %v2972, %v2969
    %v2975 = vsel %vm413, %v2973, %v2971
    %v2978 = vadd.f32 %v2914, %v2974
    %v2979 = vadd.f32 %v2915, %v2975
    %s2980 = scalar_lea.vmem [#allocation8], 82
    %v2981 = vld [vmem:[%s2980] ss:$8 sm:$0x3]
    %v2983 = vlaneseq
    %v2984 = vshrl.u32 %v2983, 7
    %v2985 = vsub.s32 0, %v2984
    %v2986 = vrot.slane %v2981, %v2985
    %v2987 = vlaneseq
    %v2988 = vshrl.u32 %v2987, 7
    %v2989 = vsub.s32 1, %v2988
    %v2990 = vrot.slane %v2981, %v2989
    %2991 = vrot.lane.b32.xlu0 %v371, 83
    %v2992 = vpop.permute.xlu0 %2991
    %2993 = vrot.lane.b32.xlu0 %v373, 83
    %v2994 = vpop.permute.xlu0 %2993
    %v2995 = vrot.slane %v2992, 1
    %v2996 = vrot.slane %v2994, 1
    %v2997 = vrot.slane %v2992, 2
    %v2998 = vrot.slane %v2994, 2
    %v2999 = vsel %vm772, %v2995, %v2997
    %v3000 = vsel %vm772, %v2996, %v2998
    %v3003 = vcombine.low %v2986, %v2990
    %v3005 = vunpack.c.l.s4 1966171168
    %v3006 = vunpack.c.0.s8 %v3005
    %v3007 = vlaneseq
    %v3008 = vshrl.u32 %v3007, 7
    %v3009 = vsub.s32 %v3006, %v3008
    %v3010 = vrot.slane %v3003, %v3009
    %v3011 = vcombine.high %v3010, %v3010
    %v3013 = vunpack.c.l.s4 1966171168
    %v3014 = vunpack.c.0.s8 %v3013
    %v3015 = vlaneseq
    %v3016 = vshrl.u32 %v3015, 7
    %v3017 = vsub.s32 %v3014, %v3016
    %v3018 = vrot.slane %v3010, %v3017
    %v3020 = vunpack.c.l.s4 1966171168
    %v3021 = vunpack.c.0.s8 %v3020
    %v3022 = vlaneseq
    %v3023 = vshrl.u32 %v3022, 7
    %v3024 = vsub.s32 %v3021, %v3023
    %v3025 = vrot.slane %v3011, %v3024
    %v3028 = vmul.f32 %v2999, %v3018
    %v3029 = vmul.f32 %v3000, %v3025
    %3032 = vrot.lane.b32.xlu0 %v3028, 77
    %v3033 = vpop.permute.xlu0 %3032
    %3034 = vrot.lane.b32.xlu0 %v3029, 77
    %v3035 = vpop.permute.xlu0 %3034
    %v3036 = vrot.slane %v3033, 7
    %v3037 = vrot.slane %v3035, 7
    %v3038 = vsel %vm413, %v3036, %v3033
    %v3039 = vsel %vm413, %v3037, %v3035
    %v3042 = vadd.f32 %v2978, %v3038
    %v3043 = vadd.f32 %v2979, %v3039
    %s3044 = scalar_lea.vmem [#allocation8], 83
    %v3045 = vld [vmem:[%s3044] ss:$8 sm:$0x3]
    %v3047 = vlaneseq
    %v3048 = vshrl.u32 %v3047, 7
    %v3049 = vsub.s32 0, %v3048
    %v3050 = vrot.slane %v3045, %v3049
    %v3051 = vlaneseq
    %v3052 = vshrl.u32 %v3051, 7
    %v3053 = vsub.s32 1, %v3052
    %v3054 = vrot.slane %v3045, %v3053
    %3055 = vrot.lane.b32.xlu0 %v371, 82
    %v3056 = vpop.permute.xlu0 %3055
    %3057 = vrot.lane.b32.xlu0 %v373, 82
    %v3058 = vpop.permute.xlu0 %3057
    %v3059 = vrot.slane %v3056, 1
    %v3060 = vrot.slane %v3058, 1
    %v3061 = vrot.slane %v3056, 2
    %v3062 = vrot.slane %v3058, 2
    %v3063 = vsel %vm710, %v3059, %v3061
    %v3064 = vsel %vm710, %v3060, %v3062
    %v3067 = vcombine.low %v3050, %v3054
    %v3069 = vunpack.c.l.s4 1966171168
    %v3070 = vunpack.c.0.s8 %v3069
    %v3071 = vlaneseq
    %v3072 = vshrl.u32 %v3071, 7
    %v3073 = vsub.s32 %v3070, %v3072
    %v3074 = vrot.slane %v3067, %v3073
    %v3075 = vcombine.high %v3074, %v3074
    %v3077 = vunpack.c.l.s4 1966171168
    %v3078 = vunpack.c.0.s8 %v3077
    %v3079 = vlaneseq
    %v3080 = vshrl.u32 %v3079, 7
    %v3081 = vsub.s32 %v3078, %v3080
    %v3082 = vrot.slane %v3074, %v3081
    %v3084 = vunpack.c.l.s4 1966171168
    %v3085 = vunpack.c.0.s8 %v3084
    %v3086 = vlaneseq
    %v3087 = vshrl.u32 %v3086, 7
    %v3088 = vsub.s32 %v3085, %v3087
    %v3089 = vrot.slane %v3075, %v3088
    %v3092 = vmul.f32 %v3063, %v3082
    %v3093 = vmul.f32 %v3064, %v3089
    %3096 = vrot.lane.b32.xlu0 %v3092, 77
    %v3097 = vpop.permute.xlu0 %3096
    %3098 = vrot.lane.b32.xlu0 %v3093, 77
    %v3099 = vpop.permute.xlu0 %3098
    %v3100 = vrot.slane %v3097, 7
    %v3101 = vrot.slane %v3099, 7
    %v3102 = vsel %vm413, %v3100, %v3097
    %v3103 = vsel %vm413, %v3101, %v3099
    %v3106 = vadd.f32 %v3042, %v3102
    %v3107 = vadd.f32 %v3043, %v3103
    %s3108 = scalar_lea.vmem [#allocation8], 84
    %v3109 = vld [vmem:[%s3108] ss:$8 sm:$0x3]
    %v3111 = vlaneseq
    %v3112 = vshrl.u32 %v3111, 7
    %v3113 = vsub.s32 0, %v3112
    %v3114 = vrot.slane %v3109, %v3113
    %v3115 = vlaneseq
    %v3116 = vshrl.u32 %v3115, 7
    %v3117 = vsub.s32 1, %v3116
    %v3118 = vrot.slane %v3109, %v3117
    %3119 = vrot.lane.b32.xlu0 %v371, 81
    %v3120 = vpop.permute.xlu0 %3119
    %3121 = vrot.lane.b32.xlu0 %v373, 81
    %v3122 = vpop.permute.xlu0 %3121
    %v3123 = vrot.slane %v3120, 1
    %v3124 = vrot.slane %v3122, 1
    %v3125 = vrot.slane %v3120, 2
    %v3126 = vrot.slane %v3122, 2
    %v3127 = vsel %vm648, %v3123, %v3125
    %v3128 = vsel %vm648, %v3124, %v3126
    %v3131 = vcombine.low %v3114, %v3118
    %v3133 = vunpack.c.l.s4 1966171168
    %v3134 = vunpack.c.0.s8 %v3133
    %v3135 = vlaneseq
    %v3136 = vshrl.u32 %v3135, 7
    %v3137 = vsub.s32 %v3134, %v3136
    %v3138 = vrot.slane %v3131, %v3137
    %v3139 = vcombine.high %v3138, %v3138
    %v3141 = vunpack.c.l.s4 1966171168
    %v3142 = vunpack.c.0.s8 %v3141
    %v3143 = vlaneseq
    %v3144 = vshrl.u32 %v3143, 7
    %v3145 = vsub.s32 %v3142, %v3144
    %v3146 = vrot.slane %v3138, %v3145
    %v3148 = vunpack.c.l.s4 1966171168
    %v3149 = vunpack.c.0.s8 %v3148
    %v3150 = vlaneseq
    %v3151 = vshrl.u32 %v3150, 7
    %v3152 = vsub.s32 %v3149, %v3151
    %v3153 = vrot.slane %v3139, %v3152
    %v3156 = vmul.f32 %v3127, %v3146
    %v3157 = vmul.f32 %v3128, %v3153
    %3160 = vrot.lane.b32.xlu0 %v3156, 77
    %v3161 = vpop.permute.xlu0 %3160
    %3162 = vrot.lane.b32.xlu0 %v3157, 77
    %v3163 = vpop.permute.xlu0 %3162
    %v3164 = vrot.slane %v3161, 7
    %v3165 = vrot.slane %v3163, 7
    %v3166 = vsel %vm413, %v3164, %v3161
    %v3167 = vsel %vm413, %v3165, %v3163
    %v3170 = vadd.f32 %v3106, %v3166
    %v3171 = vadd.f32 %v3107, %v3167
    %s3172 = scalar_lea.vmem [#allocation8], 85
    %v3173 = vld [vmem:[%s3172] ss:$8 sm:$0x3]
    %v3175 = vlaneseq
    %v3176 = vshrl.u32 %v3175, 7
    %v3177 = vsub.s32 0, %v3176
    %v3178 = vrot.slane %v3173, %v3177
    %v3179 = vlaneseq
    %v3180 = vshrl.u32 %v3179, 7
    %v3181 = vsub.s32 1, %v3180
    %v3182 = vrot.slane %v3173, %v3181
    %3183 = vrot.lane.b32.xlu0 %v371, 80
    %v3184 = vpop.permute.xlu0 %3183
    %3185 = vrot.lane.b32.xlu0 %v373, 80
    %v3186 = vpop.permute.xlu0 %3185
    %v3187 = vrot.slane %v3184, 1
    %v3188 = vrot.slane %v3186, 1
    %v3189 = vrot.slane %v3184, 2
    %v3190 = vrot.slane %v3186, 2
    %v3191 = vsel %vm586, %v3187, %v3189
    %v3192 = vsel %vm586, %v3188, %v3190
    %v3195 = vcombine.low %v3178, %v3182
    %v3197 = vunpack.c.l.s4 1966171168
    %v3198 = vunpack.c.0.s8 %v3197
    %v3199 = vlaneseq
    %v3200 = vshrl.u32 %v3199, 7
    %v3201 = vsub.s32 %v3198, %v3200
    %v3202 = vrot.slane %v3195, %v3201
    %v3203 = vcombine.high %v3202, %v3202
    %v3205 = vunpack.c.l.s4 1966171168
    %v3206 = vunpack.c.0.s8 %v3205
    %v3207 = vlaneseq
    %v3208 = vshrl.u32 %v3207, 7
    %v3209 = vsub.s32 %v3206, %v3208
    %v3210 = vrot.slane %v3202, %v3209
    %v3212 = vunpack.c.l.s4 1966171168
    %v3213 = vunpack.c.0.s8 %v3212
    %v3214 = vlaneseq
    %v3215 = vshrl.u32 %v3214, 7
    %v3216 = vsub.s32 %v3213, %v3215
    %v3217 = vrot.slane %v3203, %v3216
    %v3220 = vmul.f32 %v3191, %v3210
    %v3221 = vmul.f32 %v3192, %v3217
    %3224 = vrot.lane.b32.xlu0 %v3220, 77
    %v3225 = vpop.permute.xlu0 %3224
    %3226 = vrot.lane.b32.xlu0 %v3221, 77
    %v3227 = vpop.permute.xlu0 %3226
    %v3228 = vrot.slane %v3225, 7
    %v3229 = vrot.slane %v3227, 7
    %v3230 = vsel %vm413, %v3228, %v3225
    %v3231 = vsel %vm413, %v3229, %v3227
    %v3234 = vadd.f32 %v3170, %v3230
    %v3235 = vadd.f32 %v3171, %v3231
    %s3236 = scalar_lea.vmem [#allocation8], 86
    %v3237 = vld [vmem:[%s3236] ss:$8 sm:$0x3]
    %v3239 = vlaneseq
    %v3240 = vshrl.u32 %v3239, 7
    %v3241 = vsub.s32 0, %v3240
    %v3242 = vrot.slane %v3237, %v3241
    %v3243 = vlaneseq
    %v3244 = vshrl.u32 %v3243, 7
    %v3245 = vsub.s32 1, %v3244
    %v3246 = vrot.slane %v3237, %v3245
    %3247 = vrot.lane.b32.xlu0 %v371, 79
    %v3248 = vpop.permute.xlu0 %3247
    %3249 = vrot.lane.b32.xlu0 %v373, 79
    %v3250 = vpop.permute.xlu0 %3249
    %v3251 = vrot.slane %v3248, 1
    %v3252 = vrot.slane %v3250, 1
    %v3253 = vrot.slane %v3248, 2
    %v3254 = vrot.slane %v3250, 2
    %v3255 = vsel %vm524, %v3251, %v3253
    %v3256 = vsel %vm524, %v3252, %v3254
    %v3259 = vcombine.low %v3242, %v3246
    %v3261 = vunpack.c.l.s4 1966171168
    %v3262 = vunpack.c.0.s8 %v3261
    %v3263 = vlaneseq
    %v3264 = vshrl.u32 %v3263, 7
    %v3265 = vsub.s32 %v3262, %v3264
    %v3266 = vrot.slane %v3259, %v3265
    %v3267 = vcombine.high %v3266, %v3266
    %v3269 = vunpack.c.l.s4 1966171168
    %v3270 = vunpack.c.0.s8 %v3269
    %v3271 = vlaneseq
    %v3272 = vshrl.u32 %v3271, 7
    %v3273 = vsub.s32 %v3270, %v3272
    %v3274 = vrot.slane %v3266, %v3273
    %v3276 = vunpack.c.l.s4 1966171168
    %v3277 = vunpack.c.0.s8 %v3276
    %v3278 = vlaneseq
    %v3279 = vshrl.u32 %v3278, 7
    %v3280 = vsub.s32 %v3277, %v3279
    %v3281 = vrot.slane %v3267, %v3280
    %v3284 = vmul.f32 %v3255, %v3274
    %v3285 = vmul.f32 %v3256, %v3281
    %3288 = vrot.lane.b32.xlu0 %v3284, 77
    %v3289 = vpop.permute.xlu0 %3288
    %3290 = vrot.lane.b32.xlu0 %v3285, 77
    %v3291 = vpop.permute.xlu0 %3290
    %v3292 = vrot.slane %v3289, 7
    %v3293 = vrot.slane %v3291, 7
    %v3294 = vsel %vm413, %v3292, %v3289
    %v3295 = vsel %vm413, %v3293, %v3291
    %v3298 = vadd.f32 %v3234, %v3294
    %v3299 = vadd.f32 %v3235, %v3295
    %s3300 = scalar_lea.vmem [#allocation8], 87
    %v3301 = vld [vmem:[%s3300] ss:$8 sm:$0x3]
    %v3303 = vlaneseq
    %v3304 = vshrl.u32 %v3303, 7
    %v3305 = vsub.s32 0, %v3304
    %v3306 = vrot.slane %v3301, %v3305
    %v3307 = vlaneseq
    %v3308 = vshrl.u32 %v3307, 7
    %v3309 = vsub.s32 1, %v3308
    %v3310 = vrot.slane %v3301, %v3309
    %3311 = vrot.lane.b32.xlu0 %v371, 78
    %v3312 = vpop.permute.xlu0 %3311
    %3313 = vrot.lane.b32.xlu0 %v373, 78
    %v3314 = vpop.permute.xlu0 %3313
    %v3315 = vrot.slane %v3312, 1
    %v3316 = vrot.slane %v3314, 1
    %v3317 = vrot.slane %v3312, 2
    %v3318 = vrot.slane %v3314, 2
    %v3319 = vsel %vm462, %v3315, %v3317
    %v3320 = vsel %vm462, %v3316, %v3318
    %v3323 = vcombine.low %v3306, %v3310
    %v3325 = vunpack.c.l.s4 1966171168
    %v3326 = vunpack.c.0.s8 %v3325
    %v3327 = vlaneseq
    %v3328 = vshrl.u32 %v3327, 7
    %v3329 = vsub.s32 %v3326, %v3328
    %v3330 = vrot.slane %v3323, %v3329
    %v3331 = vcombine.high %v3330, %v3330
    %v3333 = vunpack.c.l.s4 1966171168
    %v3334 = vunpack.c.0.s8 %v3333
    %v3335 = vlaneseq
    %v3336 = vshrl.u32 %v3335, 7
    %v3337 = vsub.s32 %v3334, %v3336
    %v3338 = vrot.slane %v3330, %v3337
    %v3340 = vunpack.c.l.s4 1966171168
    %v3341 = vunpack.c.0.s8 %v3340
    %v3342 = vlaneseq
    %v3343 = vshrl.u32 %v3342, 7
    %v3344 = vsub.s32 %v3341, %v3343
    %v3345 = vrot.slane %v3331, %v3344
    %v3348 = vmul.f32 %v3319, %v3338
    %v3349 = vmul.f32 %v3320, %v3345
    %3352 = vrot.lane.b32.xlu0 %v3348, 77
    %v3353 = vpop.permute.xlu0 %3352
    %3354 = vrot.lane.b32.xlu0 %v3349, 77
    %v3355 = vpop.permute.xlu0 %3354
    %v3356 = vrot.slane %v3353, 7
    %v3357 = vrot.slane %v3355, 7
    %v3358 = vsel %vm413, %v3356, %v3353
    %v3359 = vsel %vm413, %v3357, %v3355
    %v3362 = vadd.f32 %v3298, %v3358
    %v3363 = vadd.f32 %v3299, %v3359
    %s3364 = scalar_lea.vmem [#allocation8], 96
    %v3365 = vld [vmem:[%s3364] ss:$8 sm:$0x3]
    %v3367 = vlaneseq
    %v3368 = vshrl.u32 %v3367, 7
    %v3369 = vsub.s32 0, %v3368
    %v3370 = vrot.slane %v3365, %v3369
    %v3371 = vlaneseq
    %v3372 = vshrl.u32 %v3371, 7
    %v3373 = vsub.s32 1, %v3372
    %v3374 = vrot.slane %v3365, %v3373
    %3375 = vrot.lane.b32.xlu0 %v371, 77
    %v3376 = vpop.permute.xlu0 %3375
    %3377 = vrot.lane.b32.xlu0 %v373, 77
    %v3378 = vpop.permute.xlu0 %3377
    %v3379 = vrot.slane %v3376, 1
    %v3380 = vrot.slane %v3378, 1
    %v3381 = vrot.slane %v3376, 2
    %v3382 = vrot.slane %v3378, 2
    %v3383 = vsel %vm413, %v3379, %v3381
    %v3384 = vsel %vm413, %v3380, %v3382
    %v3387 = vcombine.low %v3370, %v3374
    %v3389 = vunpack.c.l.s4 1966171168
    %v3390 = vunpack.c.0.s8 %v3389
    %v3391 = vlaneseq
    %v3392 = vshrl.u32 %v3391, 7
    %v3393 = vsub.s32 %v3390, %v3392
    %v3394 = vrot.slane %v3387, %v3393
    %v3395 = vcombine.high %v3394, %v3394
    %v3397 = vunpack.c.l.s4 1966171168
    %v3398 = vunpack.c.0.s8 %v3397
    %v3399 = vlaneseq
    %v3400 = vshrl.u32 %v3399, 7
    %v3401 = vsub.s32 %v3398, %v3400
    %v3402 = vrot.slane %v3394, %v3401
    %v3404 = vunpack.c.l.s4 1966171168
    %v3405 = vunpack.c.0.s8 %v3404
    %v3406 = vlaneseq
    %v3407 = vshrl.u32 %v3406, 7
    %v3408 = vsub.s32 %v3405, %v3407
    %v3409 = vrot.slane %v3395, %v3408
    %v3412 = vmul.f32 %v3383, %v3402
    %v3413 = vmul.f32 %v3384, %v3409
    %3416 = vrot.lane.b32.xlu0 %v3412, 77
    %v3417 = vpop.permute.xlu0 %3416
    %3418 = vrot.lane.b32.xlu0 %v3413, 77
    %v3419 = vpop.permute.xlu0 %3418
    %v3420 = vrot.slane %v3417, 7
    %v3421 = vrot.slane %v3419, 7
    %v3422 = vsel %vm413, %v3420, %v3417
    %v3423 = vsel %vm413, %v3421, %v3419
    %v3426 = vadd.f32 %v3362, %v3422
    %v3427 = vadd.f32 %v3363, %v3423
    %s3428 = scalar_lea.vmem [#allocation2], 1
    %v3429 = vld [vmem:[%s3428] ss:$2 sm:$0xf]
    %s3430 = scalar_lea.vmem [#allocation2], 9
    %v3431 = vld [vmem:[%s3430] ss:$2 sm:$0xf]
    %s3432 = scalar_lea.vmem [#allocation8], 97
    %v3433 = vld [vmem:[%s3432] ss:$8 sm:$0x3]
    %v3435 = vlaneseq
    %v3436 = vshrl.u32 %v3435, 7
    %v3437 = vsub.s32 0, %v3436
    %v3438 = vrot.slane %v3433, %v3437
    %v3439 = vlaneseq
    %v3440 = vshrl.u32 %v3439, 7
    %v3441 = vsub.s32 1, %v3440
    %v3442 = vrot.slane %v3433, %v3441
    %v3443 = vcombine.low %v3438, %v3442
    %v3445 = vunpack.c.l.s4 1966171168
    %v3446 = vunpack.c.0.s8 %v3445
    %v3447 = vlaneseq
    %v3448 = vshrl.u32 %v3447, 7
    %v3449 = vsub.s32 %v3446, %v3448
    %v3450 = vrot.slane %v3443, %v3449
    %v3451 = vcombine.high %v3450, %v3450
    %v3453 = vunpack.c.l.s4 1966171168
    %v3454 = vunpack.c.0.s8 %v3453
    %v3455 = vlaneseq
    %v3456 = vshrl.u32 %v3455, 7
    %v3457 = vsub.s32 %v3454, %v3456
    %v3458 = vrot.slane %v3450, %v3457
    %v3460 = vunpack.c.l.s4 1966171168
    %v3461 = vunpack.c.0.s8 %v3460
    %v3462 = vlaneseq
    %v3463 = vshrl.u32 %v3462, 7
    %v3464 = vsub.s32 %v3461, %v3463
    %v3465 = vrot.slane %v3451, %v3464
    %3466 = vrot.lane.b32.xlu0 %v3458, 77
    %v3467 = vpop.permute.xlu0 %3466
    %3468 = vrot.lane.b32.xlu0 %v3465, 77
    %v3469 = vpop.permute.xlu0 %3468
    %v3470 = vrot.slane %v3467, 7
    %v3471 = vrot.slane %v3469, 7
    %v3472 = vsel %vm413, %v3470, %v3467
    %v3473 = vsel %vm413, %v3471, %v3469
    %v3476 = vmul.f32 %v3429, %v3472
    %v3477 = vmul.f32 %v3431, %v3473
    %v3478 = vadd.f32 %v3426, %v3476
    %v3479 = vadd.f32 %v3427, %v3477
    %s3480 = scalar_lea.vmem [#allocation8], 98
    %v3481 = vld [vmem:[%s3480] ss:$8 sm:$0x3]
    %v3483 = vlaneseq
    %v3484 = vshrl.u32 %v3483, 7
    %v3485 = vsub.s32 0, %v3484
    %v3486 = vrot.slane %v3481, %v3485
    %v3487 = vlaneseq
    %v3488 = vshrl.u32 %v3487, 7
    %v3489 = vsub.s32 1, %v3488
    %v3490 = vrot.slane %v3481, %v3489
    %v3491 = vcombine.low %v3486, %v3490
    %v3493 = vunpack.c.l.s4 1966171168
    %v3494 = vunpack.c.0.s8 %v3493
    %v3495 = vlaneseq
    %v3496 = vshrl.u32 %v3495, 7
    %v3497 = vsub.s32 %v3494, %v3496
    %v3498 = vrot.slane %v3491, %v3497
    %v3499 = vcombine.high %v3498, %v3498
    %v3501 = vunpack.c.l.s4 1966171168
    %v3502 = vunpack.c.0.s8 %v3501
    %v3503 = vlaneseq
    %v3504 = vshrl.u32 %v3503, 7
    %v3505 = vsub.s32 %v3502, %v3504
    %v3506 = vrot.slane %v3498, %v3505
    %v3508 = vunpack.c.l.s4 1966171168
    %v3509 = vunpack.c.0.s8 %v3508
    %v3510 = vlaneseq
    %v3511 = vshrl.u32 %v3510, 7
    %v3512 = vsub.s32 %v3509, %v3511
    %v3513 = vrot.slane %v3499, %v3512
    %3514 = vrot.lane.b32.xlu0 %v3506, 78
    %v3515 = vpop.permute.xlu0 %3514
    %3516 = vrot.lane.b32.xlu0 %v3513, 78
    %v3517 = vpop.permute.xlu0 %3516
    %v3518 = vrot.slane %v3515, 7
    %v3519 = vrot.slane %v3517, 7
    %v3520 = vsel %vm462, %v3518, %v3515
    %v3521 = vsel %vm462, %v3519, %v3517
    %v3524 = vmul.f32 %v3429, %v3520
    %v3525 = vmul.f32 %v3431, %v3521
    %3528 = vrot.lane.b32.xlu0 %v3524, 127
    %v3529 = vpop.permute.xlu0 %3528
    %3530 = vrot.lane.b32.xlu0 %v3525, 127
    %v3531 = vpop.permute.xlu0 %3530
    %v3532 = vrot.slane %v3529, 1
    %v3533 = vrot.slane %v3531, 1
    %v3534 = vsel %vm477, %v3529, %v3532
    %v3535 = vsel %vm477, %v3531, %v3533
    %v3538 = vadd.f32 %v3478, %v3534
    %v3539 = vadd.f32 %v3479, %v3535
    %s3540 = scalar_lea.vmem [#allocation8], 99
    %v3541 = vld [vmem:[%s3540] ss:$8 sm:$0x3]
    %v3543 = vlaneseq
    %v3544 = vshrl.u32 %v3543, 7
    %v3545 = vsub.s32 0, %v3544
    %v3546 = vrot.slane %v3541, %v3545
    %v3547 = vlaneseq
    %v3548 = vshrl.u32 %v3547, 7
    %v3549 = vsub.s32 1, %v3548
    %v3550 = vrot.slane %v3541, %v3549
    %v3551 = vcombine.low %v3546, %v3550
    %v3553 = vunpack.c.l.s4 1966171168
    %v3554 = vunpack.c.0.s8 %v3553
    %v3555 = vlaneseq
    %v3556 = vshrl.u32 %v3555, 7
    %v3557 = vsub.s32 %v3554, %v3556
    %v3558 = vrot.slane %v3551, %v3557
    %v3559 = vcombine.high %v3558, %v3558
    %v3561 = vunpack.c.l.s4 1966171168
    %v3562 = vunpack.c.0.s8 %v3561
    %v3563 = vlaneseq
    %v3564 = vshrl.u32 %v3563, 7
    %v3565 = vsub.s32 %v3562, %v3564
    %v3566 = vrot.slane %v3558, %v3565
    %v3568 = vunpack.c.l.s4 1966171168
    %v3569 = vunpack.c.0.s8 %v3568
    %v3570 = vlaneseq
    %v3571 = vshrl.u32 %v3570, 7
    %v3572 = vsub.s32 %v3569, %v3571
    %v3573 = vrot.slane %v3559, %v3572
    %3574 = vrot.lane.b32.xlu0 %v3566, 79
    %v3575 = vpop.permute.xlu0 %3574
    %3576 = vrot.lane.b32.xlu0 %v3573, 79
    %v3577 = vpop.permute.xlu0 %3576
    %v3578 = vrot.slane %v3575, 7
    %v3579 = vrot.slane %v3577, 7
    %v3580 = vsel %vm524, %v3578, %v3575
    %v3581 = vsel %vm524, %v3579, %v3577
    %v3584 = vmul.f32 %v3429, %v3580
    %v3585 = vmul.f32 %v3431, %v3581
    %3588 = vrot.lane.b32.xlu0 %v3584, 126
    %v3589 = vpop.permute.xlu0 %3588
    %3590 = vrot.lane.b32.xlu0 %v3585, 126
    %v3591 = vpop.permute.xlu0 %3590
    %v3592 = vrot.slane %v3589, 1
    %v3593 = vrot.slane %v3591, 1
    %v3594 = vsel %vm539, %v3589, %v3592
    %v3595 = vsel %vm539, %v3591, %v3593
    %v3598 = vadd.f32 %v3538, %v3594
    %v3599 = vadd.f32 %v3539, %v3595
    %s3600 = scalar_lea.vmem [#allocation8], 100
    %v3601 = vld [vmem:[%s3600] ss:$8 sm:$0x3]
    %v3603 = vlaneseq
    %v3604 = vshrl.u32 %v3603, 7
    %v3605 = vsub.s32 0, %v3604
    %v3606 = vrot.slane %v3601, %v3605
    %v3607 = vlaneseq
    %v3608 = vshrl.u32 %v3607, 7
    %v3609 = vsub.s32 1, %v3608
    %v3610 = vrot.slane %v3601, %v3609
    %v3611 = vcombine.low %v3606, %v3610
    %v3613 = vunpack.c.l.s4 1966171168
    %v3614 = vunpack.c.0.s8 %v3613
    %v3615 = vlaneseq
    %v3616 = vshrl.u32 %v3615, 7
    %v3617 = vsub.s32 %v3614, %v3616
    %v3618 = vrot.slane %v3611, %v3617
    %v3619 = vcombine.high %v3618, %v3618
    %v3621 = vunpack.c.l.s4 1966171168
    %v3622 = vunpack.c.0.s8 %v3621
    %v3623 = vlaneseq
    %v3624 = vshrl.u32 %v3623, 7
    %v3625 = vsub.s32 %v3622, %v3624
    %v3626 = vrot.slane %v3618, %v3625
    %v3628 = vunpack.c.l.s4 1966171168
    %v3629 = vunpack.c.0.s8 %v3628
    %v3630 = vlaneseq
    %v3631 = vshrl.u32 %v3630, 7
    %v3632 = vsub.s32 %v3629, %v3631
    %v3633 = vrot.slane %v3619, %v3632
    %3634 = vrot.lane.b32.xlu0 %v3626, 80
    %v3635 = vpop.permute.xlu0 %3634
    %3636 = vrot.lane.b32.xlu0 %v3633, 80
    %v3637 = vpop.permute.xlu0 %3636
    %v3638 = vrot.slane %v3635, 7
    %v3639 = vrot.slane %v3637, 7
    %v3640 = vsel %vm586, %v3638, %v3635
    %v3641 = vsel %vm586, %v3639, %v3637
    %v3644 = vmul.f32 %v3429, %v3640
    %v3645 = vmul.f32 %v3431, %v3641
    %3648 = vrot.lane.b32.xlu0 %v3644, 125
    %v3649 = vpop.permute.xlu0 %3648
    %3650 = vrot.lane.b32.xlu0 %v3645, 125
    %v3651 = vpop.permute.xlu0 %3650
    %v3652 = vrot.slane %v3649, 1
    %v3653 = vrot.slane %v3651, 1
    %v3654 = vsel %vm601, %v3649, %v3652
    %v3655 = vsel %vm601, %v3651, %v3653
    %v3658 = vadd.f32 %v3598, %v3654
    %v3659 = vadd.f32 %v3599, %v3655
    %s3660 = scalar_lea.vmem [#allocation8], 101
    %v3661 = vld [vmem:[%s3660] ss:$8 sm:$0x3]
    %v3663 = vlaneseq
    %v3664 = vshrl.u32 %v3663, 7
    %v3665 = vsub.s32 0, %v3664
    %v3666 = vrot.slane %v3661, %v3665
    %v3667 = vlaneseq
    %v3668 = vshrl.u32 %v3667, 7
    %v3669 = vsub.s32 1, %v3668
    %v3670 = vrot.slane %v3661, %v3669
    %v3671 = vcombine.low %v3666, %v3670
    %v3673 = vunpack.c.l.s4 1966171168
    %v3674 = vunpack.c.0.s8 %v3673
    %v3675 = vlaneseq
    %v3676 = vshrl.u32 %v3675, 7
    %v3677 = vsub.s32 %v3674, %v3676
    %v3678 = vrot.slane %v3671, %v3677
    %v3679 = vcombine.high %v3678, %v3678
    %v3681 = vunpack.c.l.s4 1966171168
    %v3682 = vunpack.c.0.s8 %v3681
    %v3683 = vlaneseq
    %v3684 = vshrl.u32 %v3683, 7
    %v3685 = vsub.s32 %v3682, %v3684
    %v3686 = vrot.slane %v3678, %v3685
    %v3688 = vunpack.c.l.s4 1966171168
    %v3689 = vunpack.c.0.s8 %v3688
    %v3690 = vlaneseq
    %v3691 = vshrl.u32 %v3690, 7
    %v3692 = vsub.s32 %v3689, %v3691
    %v3693 = vrot.slane %v3679, %v3692
    %3694 = vrot.lane.b32.xlu0 %v3686, 81
    %v3695 = vpop.permute.xlu0 %3694
    %3696 = vrot.lane.b32.xlu0 %v3693, 81
    %v3697 = vpop.permute.xlu0 %3696
    %v3698 = vrot.slane %v3695, 7
    %v3699 = vrot.slane %v3697, 7
    %v3700 = vsel %vm648, %v3698, %v3695
    %v3701 = vsel %vm648, %v3699, %v3697
    %v3704 = vmul.f32 %v3429, %v3700
    %v3705 = vmul.f32 %v3431, %v3701
    %3708 = vrot.lane.b32.xlu0 %v3704, 124
    %v3709 = vpop.permute.xlu0 %3708
    %3710 = vrot.lane.b32.xlu0 %v3705, 124
    %v3711 = vpop.permute.xlu0 %3710
    %v3712 = vrot.slane %v3709, 1
    %v3713 = vrot.slane %v3711, 1
    %v3714 = vsel %vm663, %v3709, %v3712
    %v3715 = vsel %vm663, %v3711, %v3713
    %v3718 = vadd.f32 %v3658, %v3714
    %v3719 = vadd.f32 %v3659, %v3715
    %s3720 = scalar_lea.vmem [#allocation8], 102
    %v3721 = vld [vmem:[%s3720] ss:$8 sm:$0x3]
    %v3723 = vlaneseq
    %v3724 = vshrl.u32 %v3723, 7
    %v3725 = vsub.s32 0, %v3724
    %v3726 = vrot.slane %v3721, %v3725
    %v3727 = vlaneseq
    %v3728 = vshrl.u32 %v3727, 7
    %v3729 = vsub.s32 1, %v3728
    %v3730 = vrot.slane %v3721, %v3729
    %v3731 = vcombine.low %v3726, %v3730
    %v3733 = vunpack.c.l.s4 1966171168
    %v3734 = vunpack.c.0.s8 %v3733
    %v3735 = vlaneseq
    %v3736 = vshrl.u32 %v3735, 7
    %v3737 = vsub.s32 %v3734, %v3736
    %v3738 = vrot.slane %v3731, %v3737
    %v3739 = vcombine.high %v3738, %v3738
    %v3741 = vunpack.c.l.s4 1966171168
    %v3742 = vunpack.c.0.s8 %v3741
    %v3743 = vlaneseq
    %v3744 = vshrl.u32 %v3743, 7
    %v3745 = vsub.s32 %v3742, %v3744
    %v3746 = vrot.slane %v3738, %v3745
    %v3748 = vunpack.c.l.s4 1966171168
    %v3749 = vunpack.c.0.s8 %v3748
    %v3750 = vlaneseq
    %v3751 = vshrl.u32 %v3750, 7
    %v3752 = vsub.s32 %v3749, %v3751
    %v3753 = vrot.slane %v3739, %v3752
    %3754 = vrot.lane.b32.xlu0 %v3746, 82
    %v3755 = vpop.permute.xlu0 %3754
    %3756 = vrot.lane.b32.xlu0 %v3753, 82
    %v3757 = vpop.permute.xlu0 %3756
    %v3758 = vrot.slane %v3755, 7
    %v3759 = vrot.slane %v3757, 7
    %v3760 = vsel %vm710, %v3758, %v3755
    %v3761 = vsel %vm710, %v3759, %v3757
    %v3764 = vmul.f32 %v3429, %v3760
    %v3765 = vmul.f32 %v3431, %v3761
    %3768 = vrot.lane.b32.xlu0 %v3764, 123
    %v3769 = vpop.permute.xlu0 %3768
    %3770 = vrot.lane.b32.xlu0 %v3765, 123
    %v3771 = vpop.permute.xlu0 %3770
    %v3772 = vrot.slane %v3769, 1
    %v3773 = vrot.slane %v3771, 1
    %v3774 = vsel %vm725, %v3769, %v3772
    %v3775 = vsel %vm725, %v3771, %v3773
    %v3778 = vadd.f32 %v3718, %v3774
    %v3779 = vadd.f32 %v3719, %v3775
    %s3780 = scalar_lea.vmem [#allocation8], 103
    %v3781 = vld [vmem:[%s3780] ss:$8 sm:$0x3]
    %v3783 = vlaneseq
    %v3784 = vshrl.u32 %v3783, 7
    %v3785 = vsub.s32 0, %v3784
    %v3786 = vrot.slane %v3781, %v3785
    %v3787 = vlaneseq
    %v3788 = vshrl.u32 %v3787, 7
    %v3789 = vsub.s32 1, %v3788
    %v3790 = vrot.slane %v3781, %v3789
    %v3791 = vcombine.low %v3786, %v3790
    %v3793 = vunpack.c.l.s4 1966171168
    %v3794 = vunpack.c.0.s8 %v3793
    %v3795 = vlaneseq
    %v3796 = vshrl.u32 %v3795, 7
    %v3797 = vsub.s32 %v3794, %v3796
    %v3798 = vrot.slane %v3791, %v3797
    %v3799 = vcombine.high %v3798, %v3798
    %v3801 = vunpack.c.l.s4 1966171168
    %v3802 = vunpack.c.0.s8 %v3801
    %v3803 = vlaneseq
    %v3804 = vshrl.u32 %v3803, 7
    %v3805 = vsub.s32 %v3802, %v3804
    %v3806 = vrot.slane %v3798, %v3805
    %v3808 = vunpack.c.l.s4 1966171168
    %v3809 = vunpack.c.0.s8 %v3808
    %v3810 = vlaneseq
    %v3811 = vshrl.u32 %v3810, 7
    %v3812 = vsub.s32 %v3809, %v3811
    %v3813 = vrot.slane %v3799, %v3812
    %3814 = vrot.lane.b32.xlu0 %v3806, 83
    %v3815 = vpop.permute.xlu0 %3814
    %3816 = vrot.lane.b32.xlu0 %v3813, 83
    %v3817 = vpop.permute.xlu0 %3816
    %v3818 = vrot.slane %v3815, 7
    %v3819 = vrot.slane %v3817, 7
    %v3820 = vsel %vm772, %v3818, %v3815
    %v3821 = vsel %vm772, %v3819, %v3817
    %v3824 = vmul.f32 %v3429, %v3820
    %v3825 = vmul.f32 %v3431, %v3821
    %3828 = vrot.lane.b32.xlu0 %v3824, 122
    %v3829 = vpop.permute.xlu0 %3828
    %3830 = vrot.lane.b32.xlu0 %v3825, 122
    %v3831 = vpop.permute.xlu0 %3830
    %v3832 = vrot.slane %v3829, 1
    %v3833 = vrot.slane %v3831, 1
    %v3834 = vsel %vm787, %v3829, %v3832
    %v3835 = vsel %vm787, %v3831, %v3833
    %v3838 = vadd.f32 %v3778, %v3834
    %v3839 = vadd.f32 %v3779, %v3835
    %s3840 = scalar_lea.vmem [#allocation8], 112
    %v3841 = vld [vmem:[%s3840] ss:$8 sm:$0x3]
    %v3843 = vlaneseq
    %v3844 = vshrl.u32 %v3843, 7
    %v3845 = vsub.s32 0, %v3844
    %v3846 = vrot.slane %v3841, %v3845
    %v3847 = vlaneseq
    %v3848 = vshrl.u32 %v3847, 7
    %v3849 = vsub.s32 1, %v3848
    %v3850 = vrot.slane %v3841, %v3849
    %v3851 = vcombine.low %v3846, %v3850
    %v3853 = vunpack.c.l.s4 1966171168
    %v3854 = vunpack.c.0.s8 %v3853
    %v3855 = vlaneseq
    %v3856 = vshrl.u32 %v3855, 7
    %v3857 = vsub.s32 %v3854, %v3856
    %v3858 = vrot.slane %v3851, %v3857
    %v3859 = vcombine.high %v3858, %v3858
    %v3861 = vunpack.c.l.s4 1966171168
    %v3862 = vunpack.c.0.s8 %v3861
    %v3863 = vlaneseq
    %v3864 = vshrl.u32 %v3863, 7
    %v3865 = vsub.s32 %v3862, %v3864
    %v3866 = vrot.slane %v3858, %v3865
    %v3868 = vunpack.c.l.s4 1966171168
    %v3869 = vunpack.c.0.s8 %v3868
    %v3870 = vlaneseq
    %v3871 = vshrl.u32 %v3870, 7
    %v3872 = vsub.s32 %v3869, %v3871
    %v3873 = vrot.slane %v3859, %v3872
    %3874 = vrot.lane.b32.xlu0 %v3866, 93
    %v3875 = vpop.permute.xlu0 %3874
    %3876 = vrot.lane.b32.xlu0 %v3873, 93
    %v3877 = vpop.permute.xlu0 %3876
    %v3878 = vrot.slane %v3875, 7
    %v3879 = vrot.slane %v3877, 7
    %v3880 = vsel %vm834, %v3878, %v3875
    %v3881 = vsel %vm834, %v3879, %v3877
    %v3884 = vmul.f32 %v3429, %v3880
    %v3885 = vmul.f32 %v3431, %v3881
    %3888 = vrot.lane.b32.xlu0 %v3884, 112
    %v3889 = vpop.permute.xlu0 %3888
    %3890 = vrot.lane.b32.xlu0 %v3885, 112
    %v3891 = vpop.permute.xlu0 %3890
    %v3892 = vrot.slane %v3889, 1
    %v3893 = vrot.slane %v3891, 1
    %v3894 = vsel %vm849, %v3889, %v3892
    %v3895 = vsel %vm849, %v3891, %v3893
    %v3898 = vadd.f32 %v3838, %v3894
    %v3899 = vadd.f32 %v3839, %v3895
    %s3900 = scalar_lea.vmem [#allocation8], 113
    %v3901 = vld [vmem:[%s3900] ss:$8 sm:$0x3]
    %v3903 = vlaneseq
    %v3904 = vshrl.u32 %v3903, 7
    %v3905 = vsub.s32 0, %v3904
    %v3906 = vrot.slane %v3901, %v3905
    %v3907 = vlaneseq
    %v3908 = vshrl.u32 %v3907, 7
    %v3909 = vsub.s32 1, %v3908
    %v3910 = vrot.slane %v3901, %v3909
    %v3911 = vcombine.low %v3906, %v3910
    %v3913 = vunpack.c.l.s4 1966171168
    %v3914 = vunpack.c.0.s8 %v3913
    %v3915 = vlaneseq
    %v3916 = vshrl.u32 %v3915, 7
    %v3917 = vsub.s32 %v3914, %v3916
    %v3918 = vrot.slane %v3911, %v3917
    %v3919 = vcombine.high %v3918, %v3918
    %v3921 = vunpack.c.l.s4 1966171168
    %v3922 = vunpack.c.0.s8 %v3921
    %v3923 = vlaneseq
    %v3924 = vshrl.u32 %v3923, 7
    %v3925 = vsub.s32 %v3922, %v3924
    %v3926 = vrot.slane %v3918, %v3925
    %v3928 = vunpack.c.l.s4 1966171168
    %v3929 = vunpack.c.0.s8 %v3928
    %v3930 = vlaneseq
    %v3931 = vshrl.u32 %v3930, 7
    %v3932 = vsub.s32 %v3929, %v3931
    %v3933 = vrot.slane %v3919, %v3932
    %3934 = vrot.lane.b32.xlu0 %v3926, 94
    %v3935 = vpop.permute.xlu0 %3934
    %3936 = vrot.lane.b32.xlu0 %v3933, 94
    %v3937 = vpop.permute.xlu0 %3936
    %v3938 = vrot.slane %v3935, 7
    %v3939 = vrot.slane %v3937, 7
    %v3940 = vsel %vm896, %v3938, %v3935
    %v3941 = vsel %vm896, %v3939, %v3937
    %v3944 = vmul.f32 %v3429, %v3940
    %v3945 = vmul.f32 %v3431, %v3941
    %3948 = vrot.lane.b32.xlu0 %v3944, 111
    %v3949 = vpop.permute.xlu0 %3948
    %3950 = vrot.lane.b32.xlu0 %v3945, 111
    %v3951 = vpop.permute.xlu0 %3950
    %v3952 = vrot.slane %v3949, 1
    %v3953 = vrot.slane %v3951, 1
    %v3954 = vsel %vm911, %v3949, %v3952
    %v3955 = vsel %vm911, %v3951, %v3953
    %v3958 = vadd.f32 %v3898, %v3954
    %v3959 = vadd.f32 %v3899, %v3955
    %s3960 = scalar_lea.vmem [#allocation8], 114
    %v3961 = vld [vmem:[%s3960] ss:$8 sm:$0x3]
    %v3963 = vlaneseq
    %v3964 = vshrl.u32 %v3963, 7
    %v3965 = vsub.s32 0, %v3964
    %v3966 = vrot.slane %v3961, %v3965
    %v3967 = vlaneseq
    %v3968 = vshrl.u32 %v3967, 7
    %v3969 = vsub.s32 1, %v3968
    %v3970 = vrot.slane %v3961, %v3969
    %v3971 = vcombine.low %v3966, %v3970
    %v3973 = vunpack.c.l.s4 1966171168
    %v3974 = vunpack.c.0.s8 %v3973
    %v3975 = vlaneseq
    %v3976 = vshrl.u32 %v3975, 7
    %v3977 = vsub.s32 %v3974, %v3976
    %v3978 = vrot.slane %v3971, %v3977
    %v3979 = vcombine.high %v3978, %v3978
    %v3981 = vunpack.c.l.s4 1966171168
    %v3982 = vunpack.c.0.s8 %v3981
    %v3983 = vlaneseq
    %v3984 = vshrl.u32 %v3983, 7
    %v3985 = vsub.s32 %v3982, %v3984
    %v3986 = vrot.slane %v3978, %v3985
    %v3988 = vunpack.c.l.s4 1966171168
    %v3989 = vunpack.c.0.s8 %v3988
    %v3990 = vlaneseq
    %v3991 = vshrl.u32 %v3990, 7
    %v3992 = vsub.s32 %v3989, %v3991
    %v3993 = vrot.slane %v3979, %v3992
    %3994 = vrot.lane.b32.xlu0 %v3986, 95
    %v3995 = vpop.permute.xlu0 %3994
    %3996 = vrot.lane.b32.xlu0 %v3993, 95
    %v3997 = vpop.permute.xlu0 %3996
    %v3998 = vrot.slane %v3995, 7
    %v3999 = vrot.slane %v3997, 7
    %v4000 = vsel %vm958, %v3998, %v3995
    %v4001 = vsel %vm958, %v3999, %v3997
    %v4004 = vmul.f32 %v3429, %v4000
    %v4005 = vmul.f32 %v3431, %v4001
    %4008 = vrot.lane.b32.xlu0 %v4004, 110
    %v4009 = vpop.permute.xlu0 %4008
    %4010 = vrot.lane.b32.xlu0 %v4005, 110
    %v4011 = vpop.permute.xlu0 %4010
    %v4012 = vrot.slane %v4009, 1
    %v4013 = vrot.slane %v4011, 1
    %v4014 = vsel %vm973, %v4009, %v4012
    %v4015 = vsel %vm973, %v4011, %v4013
    %v4018 = vadd.f32 %v3958, %v4014
    %v4019 = vadd.f32 %v3959, %v4015
    %s4020 = scalar_lea.vmem [#allocation8], 115
    %v4021 = vld [vmem:[%s4020] ss:$8 sm:$0x3]
    %v4023 = vlaneseq
    %v4024 = vshrl.u32 %v4023, 7
    %v4025 = vsub.s32 0, %v4024
    %v4026 = vrot.slane %v4021, %v4025
    %v4027 = vlaneseq
    %v4028 = vshrl.u32 %v4027, 7
    %v4029 = vsub.s32 1, %v4028
    %v4030 = vrot.slane %v4021, %v4029
    %v4031 = vcombine.low %v4026, %v4030
    %v4033 = vunpack.c.l.s4 1966171168
    %v4034 = vunpack.c.0.s8 %v4033
    %v4035 = vlaneseq
    %v4036 = vshrl.u32 %v4035, 7
    %v4037 = vsub.s32 %v4034, %v4036
    %v4038 = vrot.slane %v4031, %v4037
    %v4039 = vcombine.high %v4038, %v4038
    %v4041 = vunpack.c.l.s4 1966171168
    %v4042 = vunpack.c.0.s8 %v4041
    %v4043 = vlaneseq
    %v4044 = vshrl.u32 %v4043, 7
    %v4045 = vsub.s32 %v4042, %v4044
    %v4046 = vrot.slane %v4038, %v4045
    %v4048 = vunpack.c.l.s4 1966171168
    %v4049 = vunpack.c.0.s8 %v4048
    %v4050 = vlaneseq
    %v4051 = vshrl.u32 %v4050, 7
    %v4052 = vsub.s32 %v4049, %v4051
    %v4053 = vrot.slane %v4039, %v4052
    %4054 = vrot.lane.b32.xlu0 %v4046, 96
    %v4055 = vpop.permute.xlu0 %4054
    %4056 = vrot.lane.b32.xlu0 %v4053, 96
    %v4057 = vpop.permute.xlu0 %4056
    %v4058 = vrot.slane %v4055, 7
    %v4059 = vrot.slane %v4057, 7
    %v4060 = vsel %vm1020, %v4058, %v4055
    %v4061 = vsel %vm1020, %v4059, %v4057
    %v4064 = vmul.f32 %v3429, %v4060
    %v4065 = vmul.f32 %v3431, %v4061
    %4068 = vrot.lane.b32.xlu0 %v4064, 109
    %v4069 = vpop.permute.xlu0 %4068
    %4070 = vrot.lane.b32.xlu0 %v4065, 109
    %v4071 = vpop.permute.xlu0 %4070
    %v4072 = vrot.slane %v4069, 1
    %v4073 = vrot.slane %v4071, 1
    %v4074 = vsel %vm1035, %v4069, %v4072
    %v4075 = vsel %vm1035, %v4071, %v4073
    %v4078 = vadd.f32 %v4018, %v4074
    %v4079 = vadd.f32 %v4019, %v4075
    %s4080 = scalar_lea.vmem [#allocation8], 116
    %v4081 = vld [vmem:[%s4080] ss:$8 sm:$0x3]
    %v4083 = vlaneseq
    %v4084 = vshrl.u32 %v4083, 7
    %v4085 = vsub.s32 0, %v4084
    %v4086 = vrot.slane %v4081, %v4085
    %v4087 = vlaneseq
    %v4088 = vshrl.u32 %v4087, 7
    %v4089 = vsub.s32 1, %v4088
    %v4090 = vrot.slane %v4081, %v4089
    %v4091 = vcombine.low %v4086, %v4090
    %v4093 = vunpack.c.l.s4 1966171168
    %v4094 = vunpack.c.0.s8 %v4093
    %v4095 = vlaneseq
    %v4096 = vshrl.u32 %v4095, 7
    %v4097 = vsub.s32 %v4094, %v4096
    %v4098 = vrot.slane %v4091, %v4097
    %v4099 = vcombine.high %v4098, %v4098
    %v4101 = vunpack.c.l.s4 1966171168
    %v4102 = vunpack.c.0.s8 %v4101
    %v4103 = vlaneseq
    %v4104 = vshrl.u32 %v4103, 7
    %v4105 = vsub.s32 %v4102, %v4104
    %v4106 = vrot.slane %v4098, %v4105
    %v4108 = vunpack.c.l.s4 1966171168
    %v4109 = vunpack.c.0.s8 %v4108
    %v4110 = vlaneseq
    %v4111 = vshrl.u32 %v4110, 7
    %v4112 = vsub.s32 %v4109, %v4111
    %v4113 = vrot.slane %v4099, %v4112
    %4114 = vrot.lane.b32.xlu0 %v4106, 97
    %v4115 = vpop.permute.xlu0 %4114
    %4116 = vrot.lane.b32.xlu0 %v4113, 97
    %v4117 = vpop.permute.xlu0 %4116
    %v4118 = vrot.slane %v4115, 7
    %v4119 = vrot.slane %v4117, 7
    %v4120 = vsel %vm1082, %v4118, %v4115
    %v4121 = vsel %vm1082, %v4119, %v4117
    %v4124 = vmul.f32 %v3429, %v4120
    %v4125 = vmul.f32 %v3431, %v4121
    %4128 = vrot.lane.b32.xlu0 %v4124, 108
    %v4129 = vpop.permute.xlu0 %4128
    %4130 = vrot.lane.b32.xlu0 %v4125, 108
    %v4131 = vpop.permute.xlu0 %4130
    %v4132 = vrot.slane %v4129, 1
    %v4133 = vrot.slane %v4131, 1
    %v4134 = vsel %vm1097, %v4129, %v4132
    %v4135 = vsel %vm1097, %v4131, %v4133
    %v4138 = vadd.f32 %v4078, %v4134
    %v4139 = vadd.f32 %v4079, %v4135
    %s4140 = scalar_lea.vmem [#allocation8], 117
    %v4141 = vld [vmem:[%s4140] ss:$8 sm:$0x3]
    %v4143 = vlaneseq
    %v4144 = vshrl.u32 %v4143, 7
    %v4145 = vsub.s32 0, %v4144
    %v4146 = vrot.slane %v4141, %v4145
    %v4147 = vlaneseq
    %v4148 = vshrl.u32 %v4147, 7
    %v4149 = vsub.s32 1, %v4148
    %v4150 = vrot.slane %v4141, %v4149
    %v4151 = vcombine.low %v4146, %v4150
    %v4153 = vunpack.c.l.s4 1966171168
    %v4154 = vunpack.c.0.s8 %v4153
    %v4155 = vlaneseq
    %v4156 = vshrl.u32 %v4155, 7
    %v4157 = vsub.s32 %v4154, %v4156
    %v4158 = vrot.slane %v4151, %v4157
    %v4159 = vcombine.high %v4158, %v4158
    %v4161 = vunpack.c.l.s4 1966171168
    %v4162 = vunpack.c.0.s8 %v4161
    %v4163 = vlaneseq
    %v4164 = vshrl.u32 %v4163, 7
    %v4165 = vsub.s32 %v4162, %v4164
    %v4166 = vrot.slane %v4158, %v4165
    %v4168 = vunpack.c.l.s4 1966171168
    %v4169 = vunpack.c.0.s8 %v4168
    %v4170 = vlaneseq
    %v4171 = vshrl.u32 %v4170, 7
    %v4172 = vsub.s32 %v4169, %v4171
    %v4173 = vrot.slane %v4159, %v4172
    %4174 = vrot.lane.b32.xlu0 %v4166, 98
    %v4175 = vpop.permute.xlu0 %4174
    %4176 = vrot.lane.b32.xlu0 %v4173, 98
    %v4177 = vpop.permute.xlu0 %4176
    %v4178 = vrot.slane %v4175, 7
    %v4179 = vrot.slane %v4177, 7
    %v4180 = vsel %vm1144, %v4178, %v4175
    %v4181 = vsel %vm1144, %v4179, %v4177
    %v4184 = vmul.f32 %v3429, %v4180
    %v4185 = vmul.f32 %v3431, %v4181
    %4188 = vrot.lane.b32.xlu0 %v4184, 107
    %v4189 = vpop.permute.xlu0 %4188
    %4190 = vrot.lane.b32.xlu0 %v4185, 107
    %v4191 = vpop.permute.xlu0 %4190
    %v4192 = vrot.slane %v4189, 1
    %v4193 = vrot.slane %v4191, 1
    %v4194 = vsel %vm1159, %v4189, %v4192
    %v4195 = vsel %vm1159, %v4191, %v4193
    %v4198 = vadd.f32 %v4138, %v4194
    %v4199 = vadd.f32 %v4139, %v4195
    %s4200 = scalar_lea.vmem [#allocation8], 118
    %v4201 = vld [vmem:[%s4200] ss:$8 sm:$0x3]
    %v4203 = vlaneseq
    %v4204 = vshrl.u32 %v4203, 7
    %v4205 = vsub.s32 0, %v4204
    %v4206 = vrot.slane %v4201, %v4205
    %v4207 = vlaneseq
    %v4208 = vshrl.u32 %v4207, 7
    %v4209 = vsub.s32 1, %v4208
    %v4210 = vrot.slane %v4201, %v4209
    %v4211 = vcombine.low %v4206, %v4210
    %v4213 = vunpack.c.l.s4 1966171168
    %v4214 = vunpack.c.0.s8 %v4213
    %v4215 = vlaneseq
    %v4216 = vshrl.u32 %v4215, 7
    %v4217 = vsub.s32 %v4214, %v4216
    %v4218 = vrot.slane %v4211, %v4217
    %v4219 = vcombine.high %v4218, %v4218
    %v4221 = vunpack.c.l.s4 1966171168
    %v4222 = vunpack.c.0.s8 %v4221
    %v4223 = vlaneseq
    %v4224 = vshrl.u32 %v4223, 7
    %v4225 = vsub.s32 %v4222, %v4224
    %v4226 = vrot.slane %v4218, %v4225
    %v4228 = vunpack.c.l.s4 1966171168
    %v4229 = vunpack.c.0.s8 %v4228
    %v4230 = vlaneseq
    %v4231 = vshrl.u32 %v4230, 7
    %v4232 = vsub.s32 %v4229, %v4231
    %v4233 = vrot.slane %v4219, %v4232
    %4234 = vrot.lane.b32.xlu0 %v4226, 99
    %v4235 = vpop.permute.xlu0 %4234
    %4236 = vrot.lane.b32.xlu0 %v4233, 99
    %v4237 = vpop.permute.xlu0 %4236
    %v4238 = vrot.slane %v4235, 7
    %v4239 = vrot.slane %v4237, 7
    %v4240 = vsel %vm1206, %v4238, %v4235
    %v4241 = vsel %vm1206, %v4239, %v4237
    %v4244 = vmul.f32 %v3429, %v4240
    %v4245 = vmul.f32 %v3431, %v4241
    %4248 = vrot.lane.b32.xlu0 %v4244, 106
    %v4249 = vpop.permute.xlu0 %4248
    %4250 = vrot.lane.b32.xlu0 %v4245, 106
    %v4251 = vpop.permute.xlu0 %4250
    %v4252 = vrot.slane %v4249, 1
    %v4253 = vrot.slane %v4251, 1
    %v4254 = vsel %vm1221, %v4249, %v4252
    %v4255 = vsel %vm1221, %v4251, %v4253
    %v4258 = vadd.f32 %v4198, %v4254
    %v4259 = vadd.f32 %v4199, %v4255
    %s4260 = scalar_lea.vmem [#allocation8], 119
    %v4261 = vld [vmem:[%s4260] ss:$8 sm:$0x3]
    %v4263 = vlaneseq
    %v4264 = vshrl.u32 %v4263, 7
    %v4265 = vsub.s32 0, %v4264
    %v4266 = vrot.slane %v4261, %v4265
    %v4267 = vlaneseq
    %v4268 = vshrl.u32 %v4267, 7
    %v4269 = vsub.s32 1, %v4268
    %v4270 = vrot.slane %v4261, %v4269
    %v4271 = vcombine.low %v4266, %v4270
    %v4273 = vunpack.c.l.s4 1966171168
    %v4274 = vunpack.c.0.s8 %v4273
    %v4275 = vlaneseq
    %v4276 = vshrl.u32 %v4275, 7
    %v4277 = vsub.s32 %v4274, %v4276
    %v4278 = vrot.slane %v4271, %v4277
    %v4279 = vcombine.high %v4278, %v4278
    %v4281 = vunpack.c.l.s4 1966171168
    %v4282 = vunpack.c.0.s8 %v4281
    %v4283 = vlaneseq
    %v4284 = vshrl.u32 %v4283, 7
    %v4285 = vsub.s32 %v4282, %v4284
    %v4286 = vrot.slane %v4278, %v4285
    %v4288 = vunpack.c.l.s4 1966171168
    %v4289 = vunpack.c.0.s8 %v4288
    %v4290 = vlaneseq
    %v4291 = vshrl.u32 %v4290, 7
    %v4292 = vsub.s32 %v4289, %v4291
    %v4293 = vrot.slane %v4279, %v4292
    %4294 = vrot.lane.b32.xlu0 %v4286, 109
    %v4295 = vpop.permute.xlu0 %4294
    %4296 = vrot.lane.b32.xlu0 %v4293, 109
    %v4297 = vpop.permute.xlu0 %4296
    %v4298 = vrot.slane %v4295, 7
    %v4299 = vrot.slane %v4297, 7
    %v4300 = vsel %vm1035, %v4298, %v4295
    %v4301 = vsel %vm1035, %v4299, %v4297
    %v4304 = vmul.f32 %v3429, %v4300
    %v4305 = vmul.f32 %v3431, %v4301
    %4308 = vrot.lane.b32.xlu0 %v4304, 96
    %v4309 = vpop.permute.xlu0 %4308
    %4310 = vrot.lane.b32.xlu0 %v4305, 96
    %v4311 = vpop.permute.xlu0 %4310
    %v4312 = vrot.slane %v4309, 1
    %v4313 = vrot.slane %v4311, 1
    %v4314 = vsel %vm1020, %v4309, %v4312
    %v4315 = vsel %vm1020, %v4311, %v4313
    %v4318 = vadd.f32 %v4258, %v4314
    %v4319 = vadd.f32 %v4259, %v4315
    %s4320 = scalar_lea.vmem [#allocation8], 128
    %v4321 = vld [vmem:[%s4320] ss:$8 sm:$0x3]
    %v4323 = vlaneseq
    %v4324 = vshrl.u32 %v4323, 7
    %v4325 = vsub.s32 0, %v4324
    %v4326 = vrot.slane %v4321, %v4325
    %v4327 = vlaneseq
    %v4328 = vshrl.u32 %v4327, 7
    %v4329 = vsub.s32 1, %v4328
    %v4330 = vrot.slane %v4321, %v4329
    %v4331 = vcombine.low %v4326, %v4330
    %v4333 = vunpack.c.l.s4 1966171168
    %v4334 = vunpack.c.0.s8 %v4333
    %v4335 = vlaneseq
    %v4336 = vshrl.u32 %v4335, 7
    %v4337 = vsub.s32 %v4334, %v4336
    %v4338 = vrot.slane %v4331, %v4337
    %v4339 = vcombine.high %v4338, %v4338
    %v4341 = vunpack.c.l.s4 1966171168
    %v4342 = vunpack.c.0.s8 %v4341
    %v4343 = vlaneseq
    %v4344 = vshrl.u32 %v4343, 7
    %v4345 = vsub.s32 %v4342, %v4344
    %v4346 = vrot.slane %v4338, %v4345
    %v4348 = vunpack.c.l.s4 1966171168
    %v4349 = vunpack.c.0.s8 %v4348
    %v4350 = vlaneseq
    %v4351 = vshrl.u32 %v4350, 7
    %v4352 = vsub.s32 %v4349, %v4351
    %v4353 = vrot.slane %v4339, %v4352
    %4354 = vrot.lane.b32.xlu0 %v4346, 110
    %v4355 = vpop.permute.xlu0 %4354
    %4356 = vrot.lane.b32.xlu0 %v4353, 110
    %v4357 = vpop.permute.xlu0 %4356
    %v4358 = vrot.slane %v4355, 7
    %v4359 = vrot.slane %v4357, 7
    %v4360 = vsel %vm973, %v4358, %v4355
    %v4361 = vsel %vm973, %v4359, %v4357
    %v4364 = vmul.f32 %v3429, %v4360
    %v4365 = vmul.f32 %v3431, %v4361
    %4368 = vrot.lane.b32.xlu0 %v4364, 95
    %v4369 = vpop.permute.xlu0 %4368
    %4370 = vrot.lane.b32.xlu0 %v4365, 95
    %v4371 = vpop.permute.xlu0 %4370
    %v4372 = vrot.slane %v4369, 1
    %v4373 = vrot.slane %v4371, 1
    %v4374 = vsel %vm958, %v4369, %v4372
    %v4375 = vsel %vm958, %v4371, %v4373
    %v4378 = vadd.f32 %v4318, %v4374
    %v4379 = vadd.f32 %v4319, %v4375
    %s4380 = scalar_lea.vmem [#allocation8], 129
    %v4381 = vld [vmem:[%s4380] ss:$8 sm:$0x3]
    %v4383 = vlaneseq
    %v4384 = vshrl.u32 %v4383, 7
    %v4385 = vsub.s32 0, %v4384
    %v4386 = vrot.slane %v4381, %v4385
    %v4387 = vlaneseq
    %v4388 = vshrl.u32 %v4387, 7
    %v4389 = vsub.s32 1, %v4388
    %v4390 = vrot.slane %v4381, %v4389
    %v4391 = vcombine.low %v4386, %v4390
    %v4393 = vunpack.c.l.s4 1966171168
    %v4394 = vunpack.c.0.s8 %v4393
    %v4395 = vlaneseq
    %v4396 = vshrl.u32 %v4395, 7
    %v4397 = vsub.s32 %v4394, %v4396
    %v4398 = vrot.slane %v4391, %v4397
    %v4399 = vcombine.high %v4398, %v4398
    %v4401 = vunpack.c.l.s4 1966171168
    %v4402 = vunpack.c.0.s8 %v4401
    %v4403 = vlaneseq
    %v4404 = vshrl.u32 %v4403, 7
    %v4405 = vsub.s32 %v4402, %v4404
    %v4406 = vrot.slane %v4398, %v4405
    %v4408 = vunpack.c.l.s4 1966171168
    %v4409 = vunpack.c.0.s8 %v4408
    %v4410 = vlaneseq
    %v4411 = vshrl.u32 %v4410, 7
    %v4412 = vsub.s32 %v4409, %v4411
    %v4413 = vrot.slane %v4399, %v4412
    %4414 = vrot.lane.b32.xlu0 %v4406, 111
    %v4415 = vpop.permute.xlu0 %4414
    %4416 = vrot.lane.b32.xlu0 %v4413, 111
    %v4417 = vpop.permute.xlu0 %4416
    %v4418 = vrot.slane %v4415, 7
    %v4419 = vrot.slane %v4417, 7
    %v4420 = vsel %vm911, %v4418, %v4415
    %v4421 = vsel %vm911, %v4419, %v4417
    %v4424 = vmul.f32 %v3429, %v4420
    %v4425 = vmul.f32 %v3431, %v4421
    %4428 = vrot.lane.b32.xlu0 %v4424, 94
    %v4429 = vpop.permute.xlu0 %4428
    %4430 = vrot.lane.b32.xlu0 %v4425, 94
    %v4431 = vpop.permute.xlu0 %4430
    %v4432 = vrot.slane %v4429, 1
    %v4433 = vrot.slane %v4431, 1
    %v4434 = vsel %vm896, %v4429, %v4432
    %v4435 = vsel %vm896, %v4431, %v4433
    %v4438 = vadd.f32 %v4378, %v4434
    %v4439 = vadd.f32 %v4379, %v4435
    %s4440 = scalar_lea.vmem [#allocation8], 130
    %v4441 = vld [vmem:[%s4440] ss:$8 sm:$0x3]
    %v4443 = vlaneseq
    %v4444 = vshrl.u32 %v4443, 7
    %v4445 = vsub.s32 0, %v4444
    %v4446 = vrot.slane %v4441, %v4445
    %v4447 = vlaneseq
    %v4448 = vshrl.u32 %v4447, 7
    %v4449 = vsub.s32 1, %v4448
    %v4450 = vrot.slane %v4441, %v4449
    %v4451 = vcombine.low %v4446, %v4450
    %v4453 = vunpack.c.l.s4 1966171168
    %v4454 = vunpack.c.0.s8 %v4453
    %v4455 = vlaneseq
    %v4456 = vshrl.u32 %v4455, 7
    %v4457 = vsub.s32 %v4454, %v4456
    %v4458 = vrot.slane %v4451, %v4457
    %v4459 = vcombine.high %v4458, %v4458
    %v4461 = vunpack.c.l.s4 1966171168
    %v4462 = vunpack.c.0.s8 %v4461
    %v4463 = vlaneseq
    %v4464 = vshrl.u32 %v4463, 7
    %v4465 = vsub.s32 %v4462, %v4464
    %v4466 = vrot.slane %v4458, %v4465
    %v4468 = vunpack.c.l.s4 1966171168
    %v4469 = vunpack.c.0.s8 %v4468
    %v4470 = vlaneseq
    %v4471 = vshrl.u32 %v4470, 7
    %v4472 = vsub.s32 %v4469, %v4471
    %v4473 = vrot.slane %v4459, %v4472
    %4474 = vrot.lane.b32.xlu0 %v4466, 112
    %v4475 = vpop.permute.xlu0 %4474
    %4476 = vrot.lane.b32.xlu0 %v4473, 112
    %v4477 = vpop.permute.xlu0 %4476
    %v4478 = vrot.slane %v4475, 7
    %v4479 = vrot.slane %v4477, 7
    %v4480 = vsel %vm849, %v4478, %v4475
    %v4481 = vsel %vm849, %v4479, %v4477
    %v4484 = vmul.f32 %v3429, %v4480
    %v4485 = vmul.f32 %v3431, %v4481
    %4488 = vrot.lane.b32.xlu0 %v4484, 93
    %v4489 = vpop.permute.xlu0 %4488
    %4490 = vrot.lane.b32.xlu0 %v4485, 93
    %v4491 = vpop.permute.xlu0 %4490
    %v4492 = vrot.slane %v4489, 1
    %v4493 = vrot.slane %v4491, 1
    %v4494 = vsel %vm834, %v4489, %v4492
    %v4495 = vsel %vm834, %v4491, %v4493
    %v4498 = vadd.f32 %v4438, %v4494
    %v4499 = vadd.f32 %v4439, %v4495
    %s4500 = scalar_lea.vmem [#allocation8], 131
    %v4501 = vld [vmem:[%s4500] ss:$8 sm:$0x3]
    %v4503 = vlaneseq
    %v4504 = vshrl.u32 %v4503, 7
    %v4505 = vsub.s32 0, %v4504
    %v4506 = vrot.slane %v4501, %v4505
    %v4507 = vlaneseq
    %v4508 = vshrl.u32 %v4507, 7
    %v4509 = vsub.s32 1, %v4508
    %v4510 = vrot.slane %v4501, %v4509
    %v4511 = vcombine.low %v4506, %v4510
    %v4513 = vunpack.c.l.s4 1966171168
    %v4514 = vunpack.c.0.s8 %v4513
    %v4515 = vlaneseq
    %v4516 = vshrl.u32 %v4515, 7
    %v4517 = vsub.s32 %v4514, %v4516
    %v4518 = vrot.slane %v4511, %v4517
    %v4519 = vcombine.high %v4518, %v4518
    %v4521 = vunpack.c.l.s4 1966171168
    %v4522 = vunpack.c.0.s8 %v4521
    %v4523 = vlaneseq
    %v4524 = vshrl.u32 %v4523, 7
    %v4525 = vsub.s32 %v4522, %v4524
    %v4526 = vrot.slane %v4518, %v4525
    %v4528 = vunpack.c.l.s4 1966171168
    %v4529 = vunpack.c.0.s8 %v4528
    %v4530 = vlaneseq
    %v4531 = vshrl.u32 %v4530, 7
    %v4532 = vsub.s32 %v4529, %v4531
    %v4533 = vrot.slane %v4519, %v4532
    %4534 = vrot.lane.b32.xlu0 %v4526, 113
    %v4535 = vpop.permute.xlu0 %4534
    %4536 = vrot.lane.b32.xlu0 %v4533, 113
    %v4537 = vpop.permute.xlu0 %4536
    %v4538 = vrot.slane %v4535, 7
    %v4539 = vrot.slane %v4537, 7
    %v4540 = vsel %vm1508, %v4538, %v4535
    %v4541 = vsel %vm1508, %v4539, %v4537
    %v4544 = vmul.f32 %v3429, %v4540
    %v4545 = vmul.f32 %v3431, %v4541
    %4548 = vrot.lane.b32.xlu0 %v4544, 92
    %v4549 = vpop.permute.xlu0 %4548
    %4550 = vrot.lane.b32.xlu0 %v4545, 92
    %v4551 = vpop.permute.xlu0 %4550
    %v4552 = vrot.slane %v4549, 1
    %v4553 = vrot.slane %v4551, 1
    %v4554 = vsel %vm1523, %v4549, %v4552
    %v4555 = vsel %vm1523, %v4551, %v4553
    %v4558 = vadd.f32 %v4498, %v4554
    %v4559 = vadd.f32 %v4499, %v4555
    %s4560 = scalar_lea.vmem [#allocation8], 132
    %v4561 = vld [vmem:[%s4560] ss:$8 sm:$0x3]
    %v4563 = vlaneseq
    %v4564 = vshrl.u32 %v4563, 7
    %v4565 = vsub.s32 0, %v4564
    %v4566 = vrot.slane %v4561, %v4565
    %v4567 = vlaneseq
    %v4568 = vshrl.u32 %v4567, 7
    %v4569 = vsub.s32 1, %v4568
    %v4570 = vrot.slane %v4561, %v4569
    %v4571 = vcombine.low %v4566, %v4570
    %v4573 = vunpack.c.l.s4 1966171168
    %v4574 = vunpack.c.0.s8 %v4573
    %v4575 = vlaneseq
    %v4576 = vshrl.u32 %v4575, 7
    %v4577 = vsub.s32 %v4574, %v4576
    %v4578 = vrot.slane %v4571, %v4577
    %v4579 = vcombine.high %v4578, %v4578
    %v4581 = vunpack.c.l.s4 1966171168
    %v4582 = vunpack.c.0.s8 %v4581
    %v4583 = vlaneseq
    %v4584 = vshrl.u32 %v4583, 7
    %v4585 = vsub.s32 %v4582, %v4584
    %v4586 = vrot.slane %v4578, %v4585
    %v4588 = vunpack.c.l.s4 1966171168
    %v4589 = vunpack.c.0.s8 %v4588
    %v4590 = vlaneseq
    %v4591 = vshrl.u32 %v4590, 7
    %v4592 = vsub.s32 %v4589, %v4591
    %v4593 = vrot.slane %v4579, %v4592
    %4594 = vrot.lane.b32.xlu0 %v4586, 114
    %v4595 = vpop.permute.xlu0 %4594
    %4596 = vrot.lane.b32.xlu0 %v4593, 114
    %v4597 = vpop.permute.xlu0 %4596
    %v4598 = vrot.slane %v4595, 7
    %v4599 = vrot.slane %v4597, 7
    %v4600 = vsel %vm1570, %v4598, %v4595
    %v4601 = vsel %vm1570, %v4599, %v4597
    %v4604 = vmul.f32 %v3429, %v4600
    %v4605 = vmul.f32 %v3431, %v4601
    %4608 = vrot.lane.b32.xlu0 %v4604, 91
    %v4609 = vpop.permute.xlu0 %4608
    %4610 = vrot.lane.b32.xlu0 %v4605, 91
    %v4611 = vpop.permute.xlu0 %4610
    %v4612 = vrot.slane %v4609, 1
    %v4613 = vrot.slane %v4611, 1
    %v4614 = vsel %vm1585, %v4609, %v4612
    %v4615 = vsel %vm1585, %v4611, %v4613
    %v4618 = vadd.f32 %v4558, %v4614
    %v4619 = vadd.f32 %v4559, %v4615
    %s4620 = scalar_lea.vmem [#allocation8], 133
    %v4621 = vld [vmem:[%s4620] ss:$8 sm:$0x3]
    %v4623 = vlaneseq
    %v4624 = vshrl.u32 %v4623, 7
    %v4625 = vsub.s32 0, %v4624
    %v4626 = vrot.slane %v4621, %v4625
    %v4627 = vlaneseq
    %v4628 = vshrl.u32 %v4627, 7
    %v4629 = vsub.s32 1, %v4628
    %v4630 = vrot.slane %v4621, %v4629
    %v4631 = vcombine.low %v4626, %v4630
    %v4633 = vunpack.c.l.s4 1966171168
    %v4634 = vunpack.c.0.s8 %v4633
    %v4635 = vlaneseq
    %v4636 = vshrl.u32 %v4635, 7
    %v4637 = vsub.s32 %v4634, %v4636
    %v4638 = vrot.slane %v4631, %v4637
    %v4639 = vcombine.high %v4638, %v4638
    %v4641 = vunpack.c.l.s4 1966171168
    %v4642 = vunpack.c.0.s8 %v4641
    %v4643 = vlaneseq
    %v4644 = vshrl.u32 %v4643, 7
    %v4645 = vsub.s32 %v4642, %v4644
    %v4646 = vrot.slane %v4638, %v4645
    %v4648 = vunpack.c.l.s4 1966171168
    %v4649 = vunpack.c.0.s8 %v4648
    %v4650 = vlaneseq
    %v4651 = vshrl.u32 %v4650, 7
    %v4652 = vsub.s32 %v4649, %v4651
    %v4653 = vrot.slane %v4639, %v4652
    %4654 = vrot.lane.b32.xlu0 %v4646, 115
    %v4655 = vpop.permute.xlu0 %4654
    %4656 = vrot.lane.b32.xlu0 %v4653, 115
    %v4657 = vpop.permute.xlu0 %4656
    %v4658 = vrot.slane %v4655, 7
    %v4659 = vrot.slane %v4657, 7
    %v4660 = vsel %vm1632, %v4658, %v4655
    %v4661 = vsel %vm1632, %v4659, %v4657
    %v4664 = vmul.f32 %v3429, %v4660
    %v4665 = vmul.f32 %v3431, %v4661
    %4668 = vrot.lane.b32.xlu0 %v4664, 90
    %v4669 = vpop.permute.xlu0 %4668
    %4670 = vrot.lane.b32.xlu0 %v4665, 90
    %v4671 = vpop.permute.xlu0 %4670
    %v4672 = vrot.slane %v4669, 1
    %v4673 = vrot.slane %v4671, 1
    %v4674 = vsel %vm1647, %v4669, %v4672
    %v4675 = vsel %vm1647, %v4671, %v4673
    %v4678 = vadd.f32 %v4618, %v4674
    %v4679 = vadd.f32 %v4619, %v4675
    %s4680 = scalar_lea.vmem [#allocation8], 134
    %v4681 = vld [vmem:[%s4680] ss:$8 sm:$0x3]
    %v4683 = vlaneseq
    %v4684 = vshrl.u32 %v4683, 7
    %v4685 = vsub.s32 0, %v4684
    %v4686 = vrot.slane %v4681, %v4685
    %v4687 = vlaneseq
    %v4688 = vshrl.u32 %v4687, 7
    %v4689 = vsub.s32 1, %v4688
    %v4690 = vrot.slane %v4681, %v4689
    %v4691 = vcombine.low %v4686, %v4690
    %v4693 = vunpack.c.l.s4 1966171168
    %v4694 = vunpack.c.0.s8 %v4693
    %v4695 = vlaneseq
    %v4696 = vshrl.u32 %v4695, 7
    %v4697 = vsub.s32 %v4694, %v4696
    %v4698 = vrot.slane %v4691, %v4697
    %v4699 = vcombine.high %v4698, %v4698
    %v4701 = vunpack.c.l.s4 1966171168
    %v4702 = vunpack.c.0.s8 %v4701
    %v4703 = vlaneseq
    %v4704 = vshrl.u32 %v4703, 7
    %v4705 = vsub.s32 %v4702, %v4704
    %v4706 = vrot.slane %v4698, %v4705
    %v4708 = vunpack.c.l.s4 1966171168
    %v4709 = vunpack.c.0.s8 %v4708
    %v4710 = vlaneseq
    %v4711 = vshrl.u32 %v4710, 7
    %v4712 = vsub.s32 %v4709, %v4711
    %v4713 = vrot.slane %v4699, %v4712
    %4714 = vrot.lane.b32.xlu0 %v4706, 125
    %v4715 = vpop.permute.xlu0 %4714
    %4716 = vrot.lane.b32.xlu0 %v4713, 125
    %v4717 = vpop.permute.xlu0 %4716
    %v4718 = vrot.slane %v4715, 7
    %v4719 = vrot.slane %v4717, 7
    %v4720 = vsel %vm601, %v4718, %v4715
    %v4721 = vsel %vm601, %v4719, %v4717
    %v4724 = vmul.f32 %v3429, %v4720
    %v4725 = vmul.f32 %v3431, %v4721
    %4728 = vrot.lane.b32.xlu0 %v4724, 80
    %v4729 = vpop.permute.xlu0 %4728
    %4730 = vrot.lane.b32.xlu0 %v4725, 80
    %v4731 = vpop.permute.xlu0 %4730
    %v4732 = vrot.slane %v4729, 1
    %v4733 = vrot.slane %v4731, 1
    %v4734 = vsel %vm586, %v4729, %v4732
    %v4735 = vsel %vm586, %v4731, %v4733
    %v4738 = vadd.f32 %v4678, %v4734
    %v4739 = vadd.f32 %v4679, %v4735
    %s4740 = scalar_lea.vmem [#allocation8], 135
    %v4741 = vld [vmem:[%s4740] ss:$8 sm:$0x3]
    %v4743 = vlaneseq
    %v4744 = vshrl.u32 %v4743, 7
    %v4745 = vsub.s32 0, %v4744
    %v4746 = vrot.slane %v4741, %v4745
    %v4747 = vlaneseq
    %v4748 = vshrl.u32 %v4747, 7
    %v4749 = vsub.s32 1, %v4748
    %v4750 = vrot.slane %v4741, %v4749
    %v4751 = vcombine.low %v4746, %v4750
    %v4753 = vunpack.c.l.s4 1966171168
    %v4754 = vunpack.c.0.s8 %v4753
    %v4755 = vlaneseq
    %v4756 = vshrl.u32 %v4755, 7
    %v4757 = vsub.s32 %v4754, %v4756
    %v4758 = vrot.slane %v4751, %v4757
    %v4759 = vcombine.high %v4758, %v4758
    %v4761 = vunpack.c.l.s4 1966171168
    %v4762 = vunpack.c.0.s8 %v4761
    %v4763 = vlaneseq
    %v4764 = vshrl.u32 %v4763, 7
    %v4765 = vsub.s32 %v4762, %v4764
    %v4766 = vrot.slane %v4758, %v4765
    %v4768 = vunpack.c.l.s4 1966171168
    %v4769 = vunpack.c.0.s8 %v4768
    %v4770 = vlaneseq
    %v4771 = vshrl.u32 %v4770, 7
    %v4772 = vsub.s32 %v4769, %v4771
    %v4773 = vrot.slane %v4759, %v4772
    %4774 = vrot.lane.b32.xlu0 %v4766, 126
    %v4775 = vpop.permute.xlu0 %4774
    %4776 = vrot.lane.b32.xlu0 %v4773, 126
    %v4777 = vpop.permute.xlu0 %4776
    %v4778 = vrot.slane %v4775, 7
    %v4779 = vrot.slane %v4777, 7
    %v4780 = vsel %vm539, %v4778, %v4775
    %v4781 = vsel %vm539, %v4779, %v4777
    %v4784 = vmul.f32 %v3429, %v4780
    %v4785 = vmul.f32 %v3431, %v4781
    %4788 = vrot.lane.b32.xlu0 %v4784, 79
    %v4789 = vpop.permute.xlu0 %4788
    %4790 = vrot.lane.b32.xlu0 %v4785, 79
    %v4791 = vpop.permute.xlu0 %4790
    %v4792 = vrot.slane %v4789, 1
    %v4793 = vrot.slane %v4791, 1
    %v4794 = vsel %vm524, %v4789, %v4792
    %v4795 = vsel %vm524, %v4791, %v4793
    %v4798 = vadd.f32 %v4738, %v4794
    %v4799 = vadd.f32 %v4739, %v4795
    %s4800 = scalar_lea.vmem [#allocation8], 144
    %v4801 = vld [vmem:[%s4800] ss:$8 sm:$0x3]
    %v4803 = vlaneseq
    %v4804 = vshrl.u32 %v4803, 7
    %v4805 = vsub.s32 0, %v4804
    %v4806 = vrot.slane %v4801, %v4805
    %v4807 = vlaneseq
    %v4808 = vshrl.u32 %v4807, 7
    %v4809 = vsub.s32 1, %v4808
    %v4810 = vrot.slane %v4801, %v4809
    %v4811 = vcombine.low %v4806, %v4810
    %v4813 = vunpack.c.l.s4 1966171168
    %v4814 = vunpack.c.0.s8 %v4813
    %v4815 = vlaneseq
    %v4816 = vshrl.u32 %v4815, 7
    %v4817 = vsub.s32 %v4814, %v4816
    %v4818 = vrot.slane %v4811, %v4817
    %v4819 = vcombine.high %v4818, %v4818
    %v4821 = vunpack.c.l.s4 1966171168
    %v4822 = vunpack.c.0.s8 %v4821
    %v4823 = vlaneseq
    %v4824 = vshrl.u32 %v4823, 7
    %v4825 = vsub.s32 %v4822, %v4824
    %v4826 = vrot.slane %v4818, %v4825
    %v4828 = vunpack.c.l.s4 1966171168
    %v4829 = vunpack.c.0.s8 %v4828
    %v4830 = vlaneseq
    %v4831 = vshrl.u32 %v4830, 7
    %v4832 = vsub.s32 %v4829, %v4831
    %v4833 = vrot.slane %v4819, %v4832
    %4834 = vrot.lane.b32.xlu0 %v4826, 127
    %v4835 = vpop.permute.xlu0 %4834
    %4836 = vrot.lane.b32.xlu0 %v4833, 127
    %v4837 = vpop.permute.xlu0 %4836
    %v4838 = vrot.slane %v4835, 7
    %v4839 = vrot.slane %v4837, 7
    %v4840 = vsel %vm477, %v4838, %v4835
    %v4841 = vsel %vm477, %v4839, %v4837
    %v4844 = vmul.f32 %v3429, %v4840
    %v4845 = vmul.f32 %v3431, %v4841
    %4848 = vrot.lane.b32.xlu0 %v4844, 78
    %v4849 = vpop.permute.xlu0 %4848
    %4850 = vrot.lane.b32.xlu0 %v4845, 78
    %v4851 = vpop.permute.xlu0 %4850
    %v4852 = vrot.slane %v4849, 1
    %v4853 = vrot.slane %v4851, 1
    %v4854 = vsel %vm462, %v4849, %v4852
    %v4855 = vsel %vm462, %v4851, %v4853
    %v4858 = vadd.f32 %v4798, %v4854
    %v4859 = vadd.f32 %v4799, %v4855
    %s4860 = scalar_lea.vmem [#allocation8], 145
    %v4861 = vld [vmem:[%s4860] ss:$8 sm:$0x3]
    %v4863 = vlaneseq
    %v4864 = vshrl.u32 %v4863, 7
    %v4865 = vsub.s32 0, %v4864
    %v4866 = vrot.slane %v4861, %v4865
    %v4867 = vlaneseq
    %v4868 = vshrl.u32 %v4867, 7
    %v4869 = vsub.s32 1, %v4868
    %v4870 = vrot.slane %v4861, %v4869
    %v4873 = vrot.slane %v3429, 1
    %v4874 = vrot.slane %v3431, 1
    %v4877 = vcombine.low %v4866, %v4870
    %v4879 = vunpack.c.l.s4 1966171168
    %v4880 = vunpack.c.0.s8 %v4879
    %v4881 = vlaneseq
    %v4882 = vshrl.u32 %v4881, 7
    %v4883 = vsub.s32 %v4880, %v4882
    %v4884 = vrot.slane %v4877, %v4883
    %v4885 = vcombine.high %v4884, %v4884
    %v4887 = vunpack.c.l.s4 1966171168
    %v4888 = vunpack.c.0.s8 %v4887
    %v4889 = vlaneseq
    %v4890 = vshrl.u32 %v4889, 7
    %v4891 = vsub.s32 %v4888, %v4890
    %v4892 = vrot.slane %v4884, %v4891
    %v4894 = vunpack.c.l.s4 1966171168
    %v4895 = vunpack.c.0.s8 %v4894
    %v4896 = vlaneseq
    %v4897 = vshrl.u32 %v4896, 7
    %v4898 = vsub.s32 %v4895, %v4897
    %v4899 = vrot.slane %v4885, %v4898
    %v4902 = vmul.f32 %v4873, %v4892
    %v4903 = vmul.f32 %v4874, %v4899
    %4906 = vrot.lane.b32.xlu0 %v4902, 77
    %v4907 = vpop.permute.xlu0 %4906
    %4908 = vrot.lane.b32.xlu0 %v4903, 77
    %v4909 = vpop.permute.xlu0 %4908
    %v4910 = vrot.slane %v4907, 7
    %v4911 = vrot.slane %v4909, 7
    %v4912 = vsel %vm413, %v4910, %v4907
    %v4913 = vsel %vm413, %v4911, %v4909
    %v4916 = vadd.f32 %v4858, %v4912
    %v4917 = vadd.f32 %v4859, %v4913
    %s4918 = scalar_lea.vmem [#allocation8], 146
    %v4919 = vld [vmem:[%s4918] ss:$8 sm:$0x3]
    %v4921 = vlaneseq
    %v4922 = vshrl.u32 %v4921, 7
    %v4923 = vsub.s32 0, %v4922
    %v4924 = vrot.slane %v4919, %v4923
    %v4925 = vlaneseq
    %v4926 = vshrl.u32 %v4925, 7
    %v4927 = vsub.s32 1, %v4926
    %v4928 = vrot.slane %v4919, %v4927
    %4929 = vrot.lane.b32.xlu0 %v3429, 127
    %v4930 = vpop.permute.xlu0 %4929
    %4931 = vrot.lane.b32.xlu0 %v3431, 127
    %v4932 = vpop.permute.xlu0 %4931
    %v4933 = vrot.slane %v4930, 1
    %v4934 = vrot.slane %v4932, 1
    %v4935 = vrot.slane %v4930, 2
    %v4936 = vrot.slane %v4932, 2
    %v4937 = vsel %vm477, %v4933, %v4935
    %v4938 = vsel %vm477, %v4934, %v4936
    %v4941 = vcombine.low %v4924, %v4928
    %v4943 = vunpack.c.l.s4 1966171168
    %v4944 = vunpack.c.0.s8 %v4943
    %v4945 = vlaneseq
    %v4946 = vshrl.u32 %v4945, 7
    %v4947 = vsub.s32 %v4944, %v4946
    %v4948 = vrot.slane %v4941, %v4947
    %v4949 = vcombine.high %v4948, %v4948
    %v4951 = vunpack.c.l.s4 1966171168
    %v4952 = vunpack.c.0.s8 %v4951
    %v4953 = vlaneseq
    %v4954 = vshrl.u32 %v4953, 7
    %v4955 = vsub.s32 %v4952, %v4954
    %v4956 = vrot.slane %v4948, %v4955
    %v4958 = vunpack.c.l.s4 1966171168
    %v4959 = vunpack.c.0.s8 %v4958
    %v4960 = vlaneseq
    %v4961 = vshrl.u32 %v4960, 7
    %v4962 = vsub.s32 %v4959, %v4961
    %v4963 = vrot.slane %v4949, %v4962
    %v4966 = vmul.f32 %v4937, %v4956
    %v4967 = vmul.f32 %v4938, %v4963
    %4970 = vrot.lane.b32.xlu0 %v4966, 77
    %v4971 = vpop.permute.xlu0 %4970
    %4972 = vrot.lane.b32.xlu0 %v4967, 77
    %v4973 = vpop.permute.xlu0 %4972
    %v4974 = vrot.slane %v4971, 7
    %v4975 = vrot.slane %v4973, 7
    %v4976 = vsel %vm413, %v4974, %v4971
    %v4977 = vsel %vm413, %v4975, %v4973
    %v4980 = vadd.f32 %v4916, %v4976
    %v4981 = vadd.f32 %v4917, %v4977
    %s4982 = scalar_lea.vmem [#allocation8], 147
    %v4983 = vld [vmem:[%s4982] ss:$8 sm:$0x3]
    %v4985 = vlaneseq
    %v4986 = vshrl.u32 %v4985, 7
    %v4987 = vsub.s32 0, %v4986
    %v4988 = vrot.slane %v4983, %v4987
    %v4989 = vlaneseq
    %v4990 = vshrl.u32 %v4989, 7
    %v4991 = vsub.s32 1, %v4990
    %v4992 = vrot.slane %v4983, %v4991
    %4993 = vrot.lane.b32.xlu0 %v3429, 126
    %v4994 = vpop.permute.xlu0 %4993
    %4995 = vrot.lane.b32.xlu0 %v3431, 126
    %v4996 = vpop.permute.xlu0 %4995
    %v4997 = vrot.slane %v4994, 1
    %v4998 = vrot.slane %v4996, 1
    %v4999 = vrot.slane %v4994, 2
    %v5000 = vrot.slane %v4996, 2
    %v5001 = vsel %vm539, %v4997, %v4999
    %v5002 = vsel %vm539, %v4998, %v5000
    %v5005 = vcombine.low %v4988, %v4992
    %v5007 = vunpack.c.l.s4 1966171168
    %v5008 = vunpack.c.0.s8 %v5007
    %v5009 = vlaneseq
    %v5010 = vshrl.u32 %v5009, 7
    %v5011 = vsub.s32 %v5008, %v5010
    %v5012 = vrot.slane %v5005, %v5011
    %v5013 = vcombine.high %v5012, %v5012
    %v5015 = vunpack.c.l.s4 1966171168
    %v5016 = vunpack.c.0.s8 %v5015
    %v5017 = vlaneseq
    %v5018 = vshrl.u32 %v5017, 7
    %v5019 = vsub.s32 %v5016, %v5018
    %v5020 = vrot.slane %v5012, %v5019
    %v5022 = vunpack.c.l.s4 1966171168
    %v5023 = vunpack.c.0.s8 %v5022
    %v5024 = vlaneseq
    %v5025 = vshrl.u32 %v5024, 7
    %v5026 = vsub.s32 %v5023, %v5025
    %v5027 = vrot.slane %v5013, %v5026
    %v5030 = vmul.f32 %v5001, %v5020
    %v5031 = vmul.f32 %v5002, %v5027
    %5034 = vrot.lane.b32.xlu0 %v5030, 77
    %v5035 = vpop.permute.xlu0 %5034
    %5036 = vrot.lane.b32.xlu0 %v5031, 77
    %v5037 = vpop.permute.xlu0 %5036
    %v5038 = vrot.slane %v5035, 7
    %v5039 = vrot.slane %v5037, 7
    %v5040 = vsel %vm413, %v5038, %v5035
    %v5041 = vsel %vm413, %v5039, %v5037
    %v5044 = vadd.f32 %v4980, %v5040
    %v5045 = vadd.f32 %v4981, %v5041
    %s5046 = scalar_lea.vmem [#allocation8], 148
    %v5047 = vld [vmem:[%s5046] ss:$8 sm:$0x3]
    %v5049 = vlaneseq
    %v5050 = vshrl.u32 %v5049, 7
    %v5051 = vsub.s32 0, %v5050
    %v5052 = vrot.slane %v5047, %v5051
    %v5053 = vlaneseq
    %v5054 = vshrl.u32 %v5053, 7
    %v5055 = vsub.s32 1, %v5054
    %v5056 = vrot.slane %v5047, %v5055
    %5057 = vrot.lane.b32.xlu0 %v3429, 125
    %v5058 = vpop.permute.xlu0 %5057
    %5059 = vrot.lane.b32.xlu0 %v3431, 125
    %v5060 = vpop.permute.xlu0 %5059
    %v5061 = vrot.slane %v5058, 1
    %v5062 = vrot.slane %v5060, 1
    %v5063 = vrot.slane %v5058, 2
    %v5064 = vrot.slane %v5060, 2
    %v5065 = vsel %vm601, %v5061, %v5063
    %v5066 = vsel %vm601, %v5062, %v5064
    %v5069 = vcombine.low %v5052, %v5056
    %v5071 = vunpack.c.l.s4 1966171168
    %v5072 = vunpack.c.0.s8 %v5071
    %v5073 = vlaneseq
    %v5074 = vshrl.u32 %v5073, 7
    %v5075 = vsub.s32 %v5072, %v5074
    %v5076 = vrot.slane %v5069, %v5075
    %v5077 = vcombine.high %v5076, %v5076
    %v5079 = vunpack.c.l.s4 1966171168
    %v5080 = vunpack.c.0.s8 %v5079
    %v5081 = vlaneseq
    %v5082 = vshrl.u32 %v5081, 7
    %v5083 = vsub.s32 %v5080, %v5082
    %v5084 = vrot.slane %v5076, %v5083
    %v5086 = vunpack.c.l.s4 1966171168
    %v5087 = vunpack.c.0.s8 %v5086
    %v5088 = vlaneseq
    %v5089 = vshrl.u32 %v5088, 7
    %v5090 = vsub.s32 %v5087, %v5089
    %v5091 = vrot.slane %v5077, %v5090
    %v5094 = vmul.f32 %v5065, %v5084
    %v5095 = vmul.f32 %v5066, %v5091
    %5098 = vrot.lane.b32.xlu0 %v5094, 77
    %v5099 = vpop.permute.xlu0 %5098
    %5100 = vrot.lane.b32.xlu0 %v5095, 77
    %v5101 = vpop.permute.xlu0 %5100
    %v5102 = vrot.slane %v5099, 7
    %v5103 = vrot.slane %v5101, 7
    %v5104 = vsel %vm413, %v5102, %v5099
    %v5105 = vsel %vm413, %v5103, %v5101
    %v5108 = vadd.f32 %v5044, %v5104
    %v5109 = vadd.f32 %v5045, %v5105
    %s5110 = scalar_lea.vmem [#allocation8], 149
    %v5111 = vld [vmem:[%s5110] ss:$8 sm:$0x3]
    %v5113 = vlaneseq
    %v5114 = vshrl.u32 %v5113, 7
    %v5115 = vsub.s32 0, %v5114
    %v5116 = vrot.slane %v5111, %v5115
    %v5117 = vlaneseq
    %v5118 = vshrl.u32 %v5117, 7
    %v5119 = vsub.s32 1, %v5118
    %v5120 = vrot.slane %v5111, %v5119
    %5121 = vrot.lane.b32.xlu0 %v3429, 115
    %v5122 = vpop.permute.xlu0 %5121
    %5123 = vrot.lane.b32.xlu0 %v3431, 115
    %v5124 = vpop.permute.xlu0 %5123
    %v5125 = vrot.slane %v5122, 1
    %v5126 = vrot.slane %v5124, 1
    %v5127 = vrot.slane %v5122, 2
    %v5128 = vrot.slane %v5124, 2
    %v5129 = vsel %vm1632, %v5125, %v5127
    %v5130 = vsel %vm1632, %v5126, %v5128
    %v5133 = vcombine.low %v5116, %v5120
    %v5135 = vunpack.c.l.s4 1966171168
    %v5136 = vunpack.c.0.s8 %v5135
    %v5137 = vlaneseq
    %v5138 = vshrl.u32 %v5137, 7
    %v5139 = vsub.s32 %v5136, %v5138
    %v5140 = vrot.slane %v5133, %v5139
    %v5141 = vcombine.high %v5140, %v5140
    %v5143 = vunpack.c.l.s4 1966171168
    %v5144 = vunpack.c.0.s8 %v5143
    %v5145 = vlaneseq
    %v5146 = vshrl.u32 %v5145, 7
    %v5147 = vsub.s32 %v5144, %v5146
    %v5148 = vrot.slane %v5140, %v5147
    %v5150 = vunpack.c.l.s4 1966171168
    %v5151 = vunpack.c.0.s8 %v5150
    %v5152 = vlaneseq
    %v5153 = vshrl.u32 %v5152, 7
    %v5154 = vsub.s32 %v5151, %v5153
    %v5155 = vrot.slane %v5141, %v5154
    %v5158 = vmul.f32 %v5129, %v5148
    %v5159 = vmul.f32 %v5130, %v5155
    %5162 = vrot.lane.b32.xlu0 %v5158, 77
    %v5163 = vpop.permute.xlu0 %5162
    %5164 = vrot.lane.b32.xlu0 %v5159, 77
    %v5165 = vpop.permute.xlu0 %5164
    %v5166 = vrot.slane %v5163, 7
    %v5167 = vrot.slane %v5165, 7
    %v5168 = vsel %vm413, %v5166, %v5163
    %v5169 = vsel %vm413, %v5167, %v5165
    %v5172 = vadd.f32 %v5108, %v5168
    %v5173 = vadd.f32 %v5109, %v5169
    %s5174 = scalar_lea.vmem [#allocation8], 150
    %v5175 = vld [vmem:[%s5174] ss:$8 sm:$0x3]
    %v5177 = vlaneseq
    %v5178 = vshrl.u32 %v5177, 7
    %v5179 = vsub.s32 0, %v5178
    %v5180 = vrot.slane %v5175, %v5179
    %v5181 = vlaneseq
    %v5182 = vshrl.u32 %v5181, 7
    %v5183 = vsub.s32 1, %v5182
    %v5184 = vrot.slane %v5175, %v5183
    %5185 = vrot.lane.b32.xlu0 %v3429, 114
    %v5186 = vpop.permute.xlu0 %5185
    %5187 = vrot.lane.b32.xlu0 %v3431, 114
    %v5188 = vpop.permute.xlu0 %5187
    %v5189 = vrot.slane %v5186, 1
    %v5190 = vrot.slane %v5188, 1
    %v5191 = vrot.slane %v5186, 2
    %v5192 = vrot.slane %v5188, 2
    %v5193 = vsel %vm1570, %v5189, %v5191
    %v5194 = vsel %vm1570, %v5190, %v5192
    %v5197 = vcombine.low %v5180, %v5184
    %v5199 = vunpack.c.l.s4 1966171168
    %v5200 = vunpack.c.0.s8 %v5199
    %v5201 = vlaneseq
    %v5202 = vshrl.u32 %v5201, 7
    %v5203 = vsub.s32 %v5200, %v5202
    %v5204 = vrot.slane %v5197, %v5203
    %v5205 = vcombine.high %v5204, %v5204
    %v5207 = vunpack.c.l.s4 1966171168
    %v5208 = vunpack.c.0.s8 %v5207
    %v5209 = vlaneseq
    %v5210 = vshrl.u32 %v5209, 7
    %v5211 = vsub.s32 %v5208, %v5210
    %v5212 = vrot.slane %v5204, %v5211
    %v5214 = vunpack.c.l.s4 1966171168
    %v5215 = vunpack.c.0.s8 %v5214
    %v5216 = vlaneseq
    %v5217 = vshrl.u32 %v5216, 7
    %v5218 = vsub.s32 %v5215, %v5217
    %v5219 = vrot.slane %v5205, %v5218
    %v5222 = vmul.f32 %v5193, %v5212
    %v5223 = vmul.f32 %v5194, %v5219
    %5226 = vrot.lane.b32.xlu0 %v5222, 77
    %v5227 = vpop.permute.xlu0 %5226
    %5228 = vrot.lane.b32.xlu0 %v5223, 77
    %v5229 = vpop.permute.xlu0 %5228
    %v5230 = vrot.slane %v5227, 7
    %v5231 = vrot.slane %v5229, 7
    %v5232 = vsel %vm413, %v5230, %v5227
    %v5233 = vsel %vm413, %v5231, %v5229
    %v5236 = vadd.f32 %v5172, %v5232
    %v5237 = vadd.f32 %v5173, %v5233
    %s5238 = scalar_lea.vmem [#allocation8], 151
    %v5239 = vld [vmem:[%s5238] ss:$8 sm:$0x3]
    %v5241 = vlaneseq
    %v5242 = vshrl.u32 %v5241, 7
    %v5243 = vsub.s32 0, %v5242
    %v5244 = vrot.slane %v5239, %v5243
    %v5245 = vlaneseq
    %v5246 = vshrl.u32 %v5245, 7
    %v5247 = vsub.s32 1, %v5246
    %v5248 = vrot.slane %v5239, %v5247
    %5249 = vrot.lane.b32.xlu0 %v3429, 113
    %v5250 = vpop.permute.xlu0 %5249
    %5251 = vrot.lane.b32.xlu0 %v3431, 113
    %v5252 = vpop.permute.xlu0 %5251
    %v5253 = vrot.slane %v5250, 1
    %v5254 = vrot.slane %v5252, 1
    %v5255 = vrot.slane %v5250, 2
    %v5256 = vrot.slane %v5252, 2
    %v5257 = vsel %vm1508, %v5253, %v5255
    %v5258 = vsel %vm1508, %v5254, %v5256
    %v5261 = vcombine.low %v5244, %v5248
    %v5263 = vunpack.c.l.s4 1966171168
    %v5264 = vunpack.c.0.s8 %v5263
    %v5265 = vlaneseq
    %v5266 = vshrl.u32 %v5265, 7
    %v5267 = vsub.s32 %v5264, %v5266
    %v5268 = vrot.slane %v5261, %v5267
    %v5269 = vcombine.high %v5268, %v5268
    %v5271 = vunpack.c.l.s4 1966171168
    %v5272 = vunpack.c.0.s8 %v5271
    %v5273 = vlaneseq
    %v5274 = vshrl.u32 %v5273, 7
    %v5275 = vsub.s32 %v5272, %v5274
    %v5276 = vrot.slane %v5268, %v5275
    %v5278 = vunpack.c.l.s4 1966171168
    %v5279 = vunpack.c.0.s8 %v5278
    %v5280 = vlaneseq
    %v5281 = vshrl.u32 %v5280, 7
    %v5282 = vsub.s32 %v5279, %v5281
    %v5283 = vrot.slane %v5269, %v5282
    %v5286 = vmul.f32 %v5257, %v5276
    %v5287 = vmul.f32 %v5258, %v5283
    %5290 = vrot.lane.b32.xlu0 %v5286, 77
    %v5291 = vpop.permute.xlu0 %5290
    %5292 = vrot.lane.b32.xlu0 %v5287, 77
    %v5293 = vpop.permute.xlu0 %5292
    %v5294 = vrot.slane %v5291, 7
    %v5295 = vrot.slane %v5293, 7
    %v5296 = vsel %vm413, %v5294, %v5291
    %v5297 = vsel %vm413, %v5295, %v5293
    %v5300 = vadd.f32 %v5236, %v5296
    %v5301 = vadd.f32 %v5237, %v5297
    %s5302 = scalar_lea.vmem [#allocation8], 160
    %v5303 = vld [vmem:[%s5302] ss:$8 sm:$0x3]
    %v5305 = vlaneseq
    %v5306 = vshrl.u32 %v5305, 7
    %v5307 = vsub.s32 0, %v5306
    %v5308 = vrot.slane %v5303, %v5307
    %v5309 = vlaneseq
    %v5310 = vshrl.u32 %v5309, 7
    %v5311 = vsub.s32 1, %v5310
    %v5312 = vrot.slane %v5303, %v5311
    %5313 = vrot.lane.b32.xlu0 %v3429, 112
    %v5314 = vpop.permute.xlu0 %5313
    %5315 = vrot.lane.b32.xlu0 %v3431, 112
    %v5316 = vpop.permute.xlu0 %5315
    %v5317 = vrot.slane %v5314, 1
    %v5318 = vrot.slane %v5316, 1
    %v5319 = vrot.slane %v5314, 2
    %v5320 = vrot.slane %v5316, 2
    %v5321 = vsel %vm849, %v5317, %v5319
    %v5322 = vsel %vm849, %v5318, %v5320
    %v5325 = vcombine.low %v5308, %v5312
    %v5327 = vunpack.c.l.s4 1966171168
    %v5328 = vunpack.c.0.s8 %v5327
    %v5329 = vlaneseq
    %v5330 = vshrl.u32 %v5329, 7
    %v5331 = vsub.s32 %v5328, %v5330
    %v5332 = vrot.slane %v5325, %v5331
    %v5333 = vcombine.high %v5332, %v5332
    %v5335 = vunpack.c.l.s4 1966171168
    %v5336 = vunpack.c.0.s8 %v5335
    %v5337 = vlaneseq
    %v5338 = vshrl.u32 %v5337, 7
    %v5339 = vsub.s32 %v5336, %v5338
    %v5340 = vrot.slane %v5332, %v5339
    %v5342 = vunpack.c.l.s4 1966171168
    %v5343 = vunpack.c.0.s8 %v5342
    %v5344 = vlaneseq
    %v5345 = vshrl.u32 %v5344, 7
    %v5346 = vsub.s32 %v5343, %v5345
    %v5347 = vrot.slane %v5333, %v5346
    %v5350 = vmul.f32 %v5321, %v5340
    %v5351 = vmul.f32 %v5322, %v5347
    %5354 = vrot.lane.b32.xlu0 %v5350, 77
    %v5355 = vpop.permute.xlu0 %5354
    %5356 = vrot.lane.b32.xlu0 %v5351, 77
    %v5357 = vpop.permute.xlu0 %5356
    %v5358 = vrot.slane %v5355, 7
    %v5359 = vrot.slane %v5357, 7
    %v5360 = vsel %vm413, %v5358, %v5355
    %v5361 = vsel %vm413, %v5359, %v5357
    %v5364 = vadd.f32 %v5300, %v5360
    %v5365 = vadd.f32 %v5301, %v5361
    %s5366 = scalar_lea.vmem [#allocation8], 161
    %v5367 = vld [vmem:[%s5366] ss:$8 sm:$0x3]
    %v5369 = vlaneseq
    %v5370 = vshrl.u32 %v5369, 7
    %v5371 = vsub.s32 0, %v5370
    %v5372 = vrot.slane %v5367, %v5371
    %v5373 = vlaneseq
    %v5374 = vshrl.u32 %v5373, 7
    %v5375 = vsub.s32 1, %v5374
    %v5376 = vrot.slane %v5367, %v5375
    %5377 = vrot.lane.b32.xlu0 %v3429, 111
    %v5378 = vpop.permute.xlu0 %5377
    %5379 = vrot.lane.b32.xlu0 %v3431, 111
    %v5380 = vpop.permute.xlu0 %5379
    %v5381 = vrot.slane %v5378, 1
    %v5382 = vrot.slane %v5380, 1
    %v5383 = vrot.slane %v5378, 2
    %v5384 = vrot.slane %v5380, 2
    %v5385 = vsel %vm911, %v5381, %v5383
    %v5386 = vsel %vm911, %v5382, %v5384
    %v5389 = vcombine.low %v5372, %v5376
    %v5391 = vunpack.c.l.s4 1966171168
    %v5392 = vunpack.c.0.s8 %v5391
    %v5393 = vlaneseq
    %v5394 = vshrl.u32 %v5393, 7
    %v5395 = vsub.s32 %v5392, %v5394
    %v5396 = vrot.slane %v5389, %v5395
    %v5397 = vcombine.high %v5396, %v5396
    %v5399 = vunpack.c.l.s4 1966171168
    %v5400 = vunpack.c.0.s8 %v5399
    %v5401 = vlaneseq
    %v5402 = vshrl.u32 %v5401, 7
    %v5403 = vsub.s32 %v5400, %v5402
    %v5404 = vrot.slane %v5396, %v5403
    %v5406 = vunpack.c.l.s4 1966171168
    %v5407 = vunpack.c.0.s8 %v5406
    %v5408 = vlaneseq
    %v5409 = vshrl.u32 %v5408, 7
    %v5410 = vsub.s32 %v5407, %v5409
    %v5411 = vrot.slane %v5397, %v5410
    %v5414 = vmul.f32 %v5385, %v5404
    %v5415 = vmul.f32 %v5386, %v5411
    %5418 = vrot.lane.b32.xlu0 %v5414, 77
    %v5419 = vpop.permute.xlu0 %5418
    %5420 = vrot.lane.b32.xlu0 %v5415, 77
    %v5421 = vpop.permute.xlu0 %5420
    %v5422 = vrot.slane %v5419, 7
    %v5423 = vrot.slane %v5421, 7
    %v5424 = vsel %vm413, %v5422, %v5419
    %v5425 = vsel %vm413, %v5423, %v5421
    %v5428 = vadd.f32 %v5364, %v5424
    %v5429 = vadd.f32 %v5365, %v5425
    %s5430 = scalar_lea.vmem [#allocation8], 162
    %v5431 = vld [vmem:[%s5430] ss:$8 sm:$0x3]
    %v5433 = vlaneseq
    %v5434 = vshrl.u32 %v5433, 7
    %v5435 = vsub.s32 0, %v5434
    %v5436 = vrot.slane %v5431, %v5435
    %v5437 = vlaneseq
    %v5438 = vshrl.u32 %v5437, 7
    %v5439 = vsub.s32 1, %v5438
    %v5440 = vrot.slane %v5431, %v5439
    %5441 = vrot.lane.b32.xlu0 %v3429, 110
    %v5442 = vpop.permute.xlu0 %5441
    %5443 = vrot.lane.b32.xlu0 %v3431, 110
    %v5444 = vpop.permute.xlu0 %5443
    %v5445 = vrot.slane %v5442, 1
    %v5446 = vrot.slane %v5444, 1
    %v5447 = vrot.slane %v5442, 2
    %v5448 = vrot.slane %v5444, 2
    %v5449 = vsel %vm973, %v5445, %v5447
    %v5450 = vsel %vm973, %v5446, %v5448
    %v5453 = vcombine.low %v5436, %v5440
    %v5455 = vunpack.c.l.s4 1966171168
    %v5456 = vunpack.c.0.s8 %v5455
    %v5457 = vlaneseq
    %v5458 = vshrl.u32 %v5457, 7
    %v5459 = vsub.s32 %v5456, %v5458
    %v5460 = vrot.slane %v5453, %v5459
    %v5461 = vcombine.high %v5460, %v5460
    %v5463 = vunpack.c.l.s4 1966171168
    %v5464 = vunpack.c.0.s8 %v5463
    %v5465 = vlaneseq
    %v5466 = vshrl.u32 %v5465, 7
    %v5467 = vsub.s32 %v5464, %v5466
    %v5468 = vrot.slane %v5460, %v5467
    %v5470 = vunpack.c.l.s4 1966171168
    %v5471 = vunpack.c.0.s8 %v5470
    %v5472 = vlaneseq
    %v5473 = vshrl.u32 %v5472, 7
    %v5474 = vsub.s32 %v5471, %v5473
    %v5475 = vrot.slane %v5461, %v5474
    %v5478 = vmul.f32 %v5449, %v5468
    %v5479 = vmul.f32 %v5450, %v5475
    %5482 = vrot.lane.b32.xlu0 %v5478, 77
    %v5483 = vpop.permute.xlu0 %5482
    %5484 = vrot.lane.b32.xlu0 %v5479, 77
    %v5485 = vpop.permute.xlu0 %5484
    %v5486 = vrot.slane %v5483, 7
    %v5487 = vrot.slane %v5485, 7
    %v5488 = vsel %vm413, %v5486, %v5483
    %v5489 = vsel %vm413, %v5487, %v5485
    %v5492 = vadd.f32 %v5428, %v5488
    %v5493 = vadd.f32 %v5429, %v5489
    %s5494 = scalar_lea.vmem [#allocation8], 163
    %v5495 = vld [vmem:[%s5494] ss:$8 sm:$0x3]
    %v5497 = vlaneseq
    %v5498 = vshrl.u32 %v5497, 7
    %v5499 = vsub.s32 0, %v5498
    %v5500 = vrot.slane %v5495, %v5499
    %v5501 = vlaneseq
    %v5502 = vshrl.u32 %v5501, 7
    %v5503 = vsub.s32 1, %v5502
    %v5504 = vrot.slane %v5495, %v5503
    %5505 = vrot.lane.b32.xlu0 %v3429, 109
    %v5506 = vpop.permute.xlu0 %5505
    %5507 = vrot.lane.b32.xlu0 %v3431, 109
    %v5508 = vpop.permute.xlu0 %5507
    %v5509 = vrot.slane %v5506, 1
    %v5510 = vrot.slane %v5508, 1
    %v5511 = vrot.slane %v5506, 2
    %v5512 = vrot.slane %v5508, 2
    %v5513 = vsel %vm1035, %v5509, %v5511
    %v5514 = vsel %vm1035, %v5510, %v5512
    %v5517 = vcombine.low %v5500, %v5504
    %v5519 = vunpack.c.l.s4 1966171168
    %v5520 = vunpack.c.0.s8 %v5519
    %v5521 = vlaneseq
    %v5522 = vshrl.u32 %v5521, 7
    %v5523 = vsub.s32 %v5520, %v5522
    %v5524 = vrot.slane %v5517, %v5523
    %v5525 = vcombine.high %v5524, %v5524
    %v5527 = vunpack.c.l.s4 1966171168
    %v5528 = vunpack.c.0.s8 %v5527
    %v5529 = vlaneseq
    %v5530 = vshrl.u32 %v5529, 7
    %v5531 = vsub.s32 %v5528, %v5530
    %v5532 = vrot.slane %v5524, %v5531
    %v5534 = vunpack.c.l.s4 1966171168
    %v5535 = vunpack.c.0.s8 %v5534
    %v5536 = vlaneseq
    %v5537 = vshrl.u32 %v5536, 7
    %v5538 = vsub.s32 %v5535, %v5537
    %v5539 = vrot.slane %v5525, %v5538
    %v5542 = vmul.f32 %v5513, %v5532
    %v5543 = vmul.f32 %v5514, %v5539
    %5546 = vrot.lane.b32.xlu0 %v5542, 77
    %v5547 = vpop.permute.xlu0 %5546
    %5548 = vrot.lane.b32.xlu0 %v5543, 77
    %v5549 = vpop.permute.xlu0 %5548
    %v5550 = vrot.slane %v5547, 7
    %v5551 = vrot.slane %v5549, 7
    %v5552 = vsel %vm413, %v5550, %v5547
    %v5553 = vsel %vm413, %v5551, %v5549
    %v5556 = vadd.f32 %v5492, %v5552
    %v5557 = vadd.f32 %v5493, %v5553
    %s5558 = scalar_lea.vmem [#allocation8], 164
    %v5559 = vld [vmem:[%s5558] ss:$8 sm:$0x3]
    %v5561 = vlaneseq
    %v5562 = vshrl.u32 %v5561, 7
    %v5563 = vsub.s32 0, %v5562
    %v5564 = vrot.slane %v5559, %v5563
    %v5565 = vlaneseq
    %v5566 = vshrl.u32 %v5565, 7
    %v5567 = vsub.s32 1, %v5566
    %v5568 = vrot.slane %v5559, %v5567
    %5569 = vrot.lane.b32.xlu0 %v3429, 99
    %v5570 = vpop.permute.xlu0 %5569
    %5571 = vrot.lane.b32.xlu0 %v3431, 99
    %v5572 = vpop.permute.xlu0 %5571
    %v5573 = vrot.slane %v5570, 1
    %v5574 = vrot.slane %v5572, 1
    %v5575 = vrot.slane %v5570, 2
    %v5576 = vrot.slane %v5572, 2
    %v5577 = vsel %vm1206, %v5573, %v5575
    %v5578 = vsel %vm1206, %v5574, %v5576
    %v5581 = vcombine.low %v5564, %v5568
    %v5583 = vunpack.c.l.s4 1966171168
    %v5584 = vunpack.c.0.s8 %v5583
    %v5585 = vlaneseq
    %v5586 = vshrl.u32 %v5585, 7
    %v5587 = vsub.s32 %v5584, %v5586
    %v5588 = vrot.slane %v5581, %v5587
    %v5589 = vcombine.high %v5588, %v5588
    %v5591 = vunpack.c.l.s4 1966171168
    %v5592 = vunpack.c.0.s8 %v5591
    %v5593 = vlaneseq
    %v5594 = vshrl.u32 %v5593, 7
    %v5595 = vsub.s32 %v5592, %v5594
    %v5596 = vrot.slane %v5588, %v5595
    %v5598 = vunpack.c.l.s4 1966171168
    %v5599 = vunpack.c.0.s8 %v5598
    %v5600 = vlaneseq
    %v5601 = vshrl.u32 %v5600, 7
    %v5602 = vsub.s32 %v5599, %v5601
    %v5603 = vrot.slane %v5589, %v5602
    %v5606 = vmul.f32 %v5577, %v5596
    %v5607 = vmul.f32 %v5578, %v5603
    %5610 = vrot.lane.b32.xlu0 %v5606, 77
    %v5611 = vpop.permute.xlu0 %5610
    %5612 = vrot.lane.b32.xlu0 %v5607, 77
    %v5613 = vpop.permute.xlu0 %5612
    %v5614 = vrot.slane %v5611, 7
    %v5615 = vrot.slane %v5613, 7
    %v5616 = vsel %vm413, %v5614, %v5611
    %v5617 = vsel %vm413, %v5615, %v5613
    %v5620 = vadd.f32 %v5556, %v5616
    %v5621 = vadd.f32 %v5557, %v5617
    %s5622 = scalar_lea.vmem [#allocation8], 165
    %v5623 = vld [vmem:[%s5622] ss:$8 sm:$0x3]
    %v5625 = vlaneseq
    %v5626 = vshrl.u32 %v5625, 7
    %v5627 = vsub.s32 0, %v5626
    %v5628 = vrot.slane %v5623, %v5627
    %v5629 = vlaneseq
    %v5630 = vshrl.u32 %v5629, 7
    %v5631 = vsub.s32 1, %v5630
    %v5632 = vrot.slane %v5623, %v5631
    %5633 = vrot.lane.b32.xlu0 %v3429, 98
    %v5634 = vpop.permute.xlu0 %5633
    %5635 = vrot.lane.b32.xlu0 %v3431, 98
    %v5636 = vpop.permute.xlu0 %5635
    %v5637 = vrot.slane %v5634, 1
    %v5638 = vrot.slane %v5636, 1
    %v5639 = vrot.slane %v5634, 2
    %v5640 = vrot.slane %v5636, 2
    %v5641 = vsel %vm1144, %v5637, %v5639
    %v5642 = vsel %vm1144, %v5638, %v5640
    %v5645 = vcombine.low %v5628, %v5632
    %v5647 = vunpack.c.l.s4 1966171168
    %v5648 = vunpack.c.0.s8 %v5647
    %v5649 = vlaneseq
    %v5650 = vshrl.u32 %v5649, 7
    %v5651 = vsub.s32 %v5648, %v5650
    %v5652 = vrot.slane %v5645, %v5651
    %v5653 = vcombine.high %v5652, %v5652
    %v5655 = vunpack.c.l.s4 1966171168
    %v5656 = vunpack.c.0.s8 %v5655
    %v5657 = vlaneseq
    %v5658 = vshrl.u32 %v5657, 7
    %v5659 = vsub.s32 %v5656, %v5658
    %v5660 = vrot.slane %v5652, %v5659
    %v5662 = vunpack.c.l.s4 1966171168
    %v5663 = vunpack.c.0.s8 %v5662
    %v5664 = vlaneseq
    %v5665 = vshrl.u32 %v5664, 7
    %v5666 = vsub.s32 %v5663, %v5665
    %v5667 = vrot.slane %v5653, %v5666
    %v5670 = vmul.f32 %v5641, %v5660
    %v5671 = vmul.f32 %v5642, %v5667
    %5674 = vrot.lane.b32.xlu0 %v5670, 77
    %v5675 = vpop.permute.xlu0 %5674
    %5676 = vrot.lane.b32.xlu0 %v5671, 77
    %v5677 = vpop.permute.xlu0 %5676
    %v5678 = vrot.slane %v5675, 7
    %v5679 = vrot.slane %v5677, 7
    %v5680 = vsel %vm413, %v5678, %v5675
    %v5681 = vsel %vm413, %v5679, %v5677
    %v5684 = vadd.f32 %v5620, %v5680
    %v5685 = vadd.f32 %v5621, %v5681
    %s5686 = scalar_lea.vmem [#allocation8], 166
    %v5687 = vld [vmem:[%s5686] ss:$8 sm:$0x3]
    %v5689 = vlaneseq
    %v5690 = vshrl.u32 %v5689, 7
    %v5691 = vsub.s32 0, %v5690
    %v5692 = vrot.slane %v5687, %v5691
    %v5693 = vlaneseq
    %v5694 = vshrl.u32 %v5693, 7
    %v5695 = vsub.s32 1, %v5694
    %v5696 = vrot.slane %v5687, %v5695
    %5697 = vrot.lane.b32.xlu0 %v3429, 97
    %v5698 = vpop.permute.xlu0 %5697
    %5699 = vrot.lane.b32.xlu0 %v3431, 97
    %v5700 = vpop.permute.xlu0 %5699
    %v5701 = vrot.slane %v5698, 1
    %v5702 = vrot.slane %v5700, 1
    %v5703 = vrot.slane %v5698, 2
    %v5704 = vrot.slane %v5700, 2
    %v5705 = vsel %vm1082, %v5701, %v5703
    %v5706 = vsel %vm1082, %v5702, %v5704
    %v5709 = vcombine.low %v5692, %v5696
    %v5711 = vunpack.c.l.s4 1966171168
    %v5712 = vunpack.c.0.s8 %v5711
    %v5713 = vlaneseq
    %v5714 = vshrl.u32 %v5713, 7
    %v5715 = vsub.s32 %v5712, %v5714
    %v5716 = vrot.slane %v5709, %v5715
    %v5717 = vcombine.high %v5716, %v5716
    %v5719 = vunpack.c.l.s4 1966171168
    %v5720 = vunpack.c.0.s8 %v5719
    %v5721 = vlaneseq
    %v5722 = vshrl.u32 %v5721, 7
    %v5723 = vsub.s32 %v5720, %v5722
    %v5724 = vrot.slane %v5716, %v5723
    %v5726 = vunpack.c.l.s4 1966171168
    %v5727 = vunpack.c.0.s8 %v5726
    %v5728 = vlaneseq
    %v5729 = vshrl.u32 %v5728, 7
    %v5730 = vsub.s32 %v5727, %v5729
    %v5731 = vrot.slane %v5717, %v5730
    %v5734 = vmul.f32 %v5705, %v5724
    %v5735 = vmul.f32 %v5706, %v5731
    %5738 = vrot.lane.b32.xlu0 %v5734, 77
    %v5739 = vpop.permute.xlu0 %5738
    %5740 = vrot.lane.b32.xlu0 %v5735, 77
    %v5741 = vpop.permute.xlu0 %5740
    %v5742 = vrot.slane %v5739, 7
    %v5743 = vrot.slane %v5741, 7
    %v5744 = vsel %vm413, %v5742, %v5739
    %v5745 = vsel %vm413, %v5743, %v5741
    %v5748 = vadd.f32 %v5684, %v5744
    %v5749 = vadd.f32 %v5685, %v5745
    %s5750 = scalar_lea.vmem [#allocation8], 167
    %v5751 = vld [vmem:[%s5750] ss:$8 sm:$0x3]
    %v5753 = vlaneseq
    %v5754 = vshrl.u32 %v5753, 7
    %v5755 = vsub.s32 0, %v5754
    %v5756 = vrot.slane %v5751, %v5755
    %v5757 = vlaneseq
    %v5758 = vshrl.u32 %v5757, 7
    %v5759 = vsub.s32 1, %v5758
    %v5760 = vrot.slane %v5751, %v5759
    %5761 = vrot.lane.b32.xlu0 %v3429, 96
    %v5762 = vpop.permute.xlu0 %5761
    %5763 = vrot.lane.b32.xlu0 %v3431, 96
    %v5764 = vpop.permute.xlu0 %5763
    %v5765 = vrot.slane %v5762, 1
    %v5766 = vrot.slane %v5764, 1
    %v5767 = vrot.slane %v5762, 2
    %v5768 = vrot.slane %v5764, 2
    %v5769 = vsel %vm1020, %v5765, %v5767
    %v5770 = vsel %vm1020, %v5766, %v5768
    %v5773 = vcombine.low %v5756, %v5760
    %v5775 = vunpack.c.l.s4 1966171168
    %v5776 = vunpack.c.0.s8 %v5775
    %v5777 = vlaneseq
    %v5778 = vshrl.u32 %v5777, 7
    %v5779 = vsub.s32 %v5776, %v5778
    %v5780 = vrot.slane %v5773, %v5779
    %v5781 = vcombine.high %v5780, %v5780
    %v5783 = vunpack.c.l.s4 1966171168
    %v5784 = vunpack.c.0.s8 %v5783
    %v5785 = vlaneseq
    %v5786 = vshrl.u32 %v5785, 7
    %v5787 = vsub.s32 %v5784, %v5786
    %v5788 = vrot.slane %v5780, %v5787
    %v5790 = vunpack.c.l.s4 1966171168
    %v5791 = vunpack.c.0.s8 %v5790
    %v5792 = vlaneseq
    %v5793 = vshrl.u32 %v5792, 7
    %v5794 = vsub.s32 %v5791, %v5793
    %v5795 = vrot.slane %v5781, %v5794
    %v5798 = vmul.f32 %v5769, %v5788
    %v5799 = vmul.f32 %v5770, %v5795
    %5802 = vrot.lane.b32.xlu0 %v5798, 77
    %v5803 = vpop.permute.xlu0 %5802
    %5804 = vrot.lane.b32.xlu0 %v5799, 77
    %v5805 = vpop.permute.xlu0 %5804
    %v5806 = vrot.slane %v5803, 7
    %v5807 = vrot.slane %v5805, 7
    %v5808 = vsel %vm413, %v5806, %v5803
    %v5809 = vsel %vm413, %v5807, %v5805
    %v5812 = vadd.f32 %v5748, %v5808
    %v5813 = vadd.f32 %v5749, %v5809
    %s5814 = scalar_lea.vmem [#allocation8], 176
    %v5815 = vld [vmem:[%s5814] ss:$8 sm:$0x3]
    %v5817 = vlaneseq
    %v5818 = vshrl.u32 %v5817, 7
    %v5819 = vsub.s32 0, %v5818
    %v5820 = vrot.slane %v5815, %v5819
    %v5821 = vlaneseq
    %v5822 = vshrl.u32 %v5821, 7
    %v5823 = vsub.s32 1, %v5822
    %v5824 = vrot.slane %v5815, %v5823
    %5825 = vrot.lane.b32.xlu0 %v3429, 95
    %v5826 = vpop.permute.xlu0 %5825
    %5827 = vrot.lane.b32.xlu0 %v3431, 95
    %v5828 = vpop.permute.xlu0 %5827
    %v5829 = vrot.slane %v5826, 1
    %v5830 = vrot.slane %v5828, 1
    %v5831 = vrot.slane %v5826, 2
    %v5832 = vrot.slane %v5828, 2
    %v5833 = vsel %vm958, %v5829, %v5831
    %v5834 = vsel %vm958, %v5830, %v5832
    %v5837 = vcombine.low %v5820, %v5824
    %v5839 = vunpack.c.l.s4 1966171168
    %v5840 = vunpack.c.0.s8 %v5839
    %v5841 = vlaneseq
    %v5842 = vshrl.u32 %v5841, 7
    %v5843 = vsub.s32 %v5840, %v5842
    %v5844 = vrot.slane %v5837, %v5843
    %v5845 = vcombine.high %v5844, %v5844
    %v5847 = vunpack.c.l.s4 1966171168
    %v5848 = vunpack.c.0.s8 %v5847
    %v5849 = vlaneseq
    %v5850 = vshrl.u32 %v5849, 7
    %v5851 = vsub.s32 %v5848, %v5850
    %v5852 = vrot.slane %v5844, %v5851
    %v5854 = vunpack.c.l.s4 1966171168
    %v5855 = vunpack.c.0.s8 %v5854
    %v5856 = vlaneseq
    %v5857 = vshrl.u32 %v5856, 7
    %v5858 = vsub.s32 %v5855, %v5857
    %v5859 = vrot.slane %v5845, %v5858
    %v5862 = vmul.f32 %v5833, %v5852
    %v5863 = vmul.f32 %v5834, %v5859
    %5866 = vrot.lane.b32.xlu0 %v5862, 77
    %v5867 = vpop.permute.xlu0 %5866
    %5868 = vrot.lane.b32.xlu0 %v5863, 77
    %v5869 = vpop.permute.xlu0 %5868
    %v5870 = vrot.slane %v5867, 7
    %v5871 = vrot.slane %v5869, 7
    %v5872 = vsel %vm413, %v5870, %v5867
    %v5873 = vsel %vm413, %v5871, %v5869
    %v5876 = vadd.f32 %v5812, %v5872
    %v5877 = vadd.f32 %v5813, %v5873
    %s5878 = scalar_lea.vmem [#allocation8], 177
    %v5879 = vld [vmem:[%s5878] ss:$8 sm:$0x3]
    %v5881 = vlaneseq
    %v5882 = vshrl.u32 %v5881, 7
    %v5883 = vsub.s32 0, %v5882
    %v5884 = vrot.slane %v5879, %v5883
    %v5885 = vlaneseq
    %v5886 = vshrl.u32 %v5885, 7
    %v5887 = vsub.s32 1, %v5886
    %v5888 = vrot.slane %v5879, %v5887
    %5889 = vrot.lane.b32.xlu0 %v3429, 94
    %v5890 = vpop.permute.xlu0 %5889
    %5891 = vrot.lane.b32.xlu0 %v3431, 94
    %v5892 = vpop.permute.xlu0 %5891
    %v5893 = vrot.slane %v5890, 1
    %v5894 = vrot.slane %v5892, 1
    %v5895 = vrot.slane %v5890, 2
    %v5896 = vrot.slane %v5892, 2
    %v5897 = vsel %vm896, %v5893, %v5895
    %v5898 = vsel %vm896, %v5894, %v5896
    %v5901 = vcombine.low %v5884, %v5888
    %v5903 = vunpack.c.l.s4 1966171168
    %v5904 = vunpack.c.0.s8 %v5903
    %v5905 = vlaneseq
    %v5906 = vshrl.u32 %v5905, 7
    %v5907 = vsub.s32 %v5904, %v5906
    %v5908 = vrot.slane %v5901, %v5907
    %v5909 = vcombine.high %v5908, %v5908
    %v5911 = vunpack.c.l.s4 1966171168
    %v5912 = vunpack.c.0.s8 %v5911
    %v5913 = vlaneseq
    %v5914 = vshrl.u32 %v5913, 7
    %v5915 = vsub.s32 %v5912, %v5914
    %v5916 = vrot.slane %v5908, %v5915
    %v5918 = vunpack.c.l.s4 1966171168
    %v5919 = vunpack.c.0.s8 %v5918
    %v5920 = vlaneseq
    %v5921 = vshrl.u32 %v5920, 7
    %v5922 = vsub.s32 %v5919, %v5921
    %v5923 = vrot.slane %v5909, %v5922
    %v5926 = vmul.f32 %v5897, %v5916
    %v5927 = vmul.f32 %v5898, %v5923
    %5930 = vrot.lane.b32.xlu0 %v5926, 77
    %v5931 = vpop.permute.xlu0 %5930
    %5932 = vrot.lane.b32.xlu0 %v5927, 77
    %v5933 = vpop.permute.xlu0 %5932
    %v5934 = vrot.slane %v5931, 7
    %v5935 = vrot.slane %v5933, 7
    %v5936 = vsel %vm413, %v5934, %v5931
    %v5937 = vsel %vm413, %v5935, %v5933
    %v5940 = vadd.f32 %v5876, %v5936
    %v5941 = vadd.f32 %v5877, %v5937
    %s5942 = scalar_lea.vmem [#allocation8], 178
    %v5943 = vld [vmem:[%s5942] ss:$8 sm:$0x3]
    %v5945 = vlaneseq
    %v5946 = vshrl.u32 %v5945, 7
    %v5947 = vsub.s32 0, %v5946
    %v5948 = vrot.slane %v5943, %v5947
    %v5949 = vlaneseq
    %v5950 = vshrl.u32 %v5949, 7
    %v5951 = vsub.s32 1, %v5950
    %v5952 = vrot.slane %v5943, %v5951
    %5953 = vrot.lane.b32.xlu0 %v3429, 93
    %v5954 = vpop.permute.xlu0 %5953
    %5955 = vrot.lane.b32.xlu0 %v3431, 93
    %v5956 = vpop.permute.xlu0 %5955
    %v5957 = vrot.slane %v5954, 1
    %v5958 = vrot.slane %v5956, 1
    %v5959 = vrot.slane %v5954, 2
    %v5960 = vrot.slane %v5956, 2
    %v5961 = vsel %vm834, %v5957, %v5959
    %v5962 = vsel %vm834, %v5958, %v5960
    %v5965 = vcombine.low %v5948, %v5952
    %v5967 = vunpack.c.l.s4 1966171168
    %v5968 = vunpack.c.0.s8 %v5967
    %v5969 = vlaneseq
    %v5970 = vshrl.u32 %v5969, 7
    %v5971 = vsub.s32 %v5968, %v5970
    %v5972 = vrot.slane %v5965, %v5971
    %v5973 = vcombine.high %v5972, %v5972
    %v5975 = vunpack.c.l.s4 1966171168
    %v5976 = vunpack.c.0.s8 %v5975
    %v5977 = vlaneseq
    %v5978 = vshrl.u32 %v5977, 7
    %v5979 = vsub.s32 %v5976, %v5978
    %v5980 = vrot.slane %v5972, %v5979
    %v5982 = vunpack.c.l.s4 1966171168
    %v5983 = vunpack.c.0.s8 %v5982
    %v5984 = vlaneseq
    %v5985 = vshrl.u32 %v5984, 7
    %v5986 = vsub.s32 %v5983, %v5985
    %v5987 = vrot.slane %v5973, %v5986
    %v5990 = vmul.f32 %v5961, %v5980
    %v5991 = vmul.f32 %v5962, %v5987
    %5994 = vrot.lane.b32.xlu0 %v5990, 77
    %v5995 = vpop.permute.xlu0 %5994
    %5996 = vrot.lane.b32.xlu0 %v5991, 77
    %v5997 = vpop.permute.xlu0 %5996
    %v5998 = vrot.slane %v5995, 7
    %v5999 = vrot.slane %v5997, 7
    %v6000 = vsel %vm413, %v5998, %v5995
    %v6001 = vsel %vm413, %v5999, %v5997
    %v6004 = vadd.f32 %v5940, %v6000
    %v6005 = vadd.f32 %v5941, %v6001
    %s6006 = scalar_lea.vmem [#allocation8], 179
    %v6007 = vld [vmem:[%s6006] ss:$8 sm:$0x3]
    %v6009 = vlaneseq
    %v6010 = vshrl.u32 %v6009, 7
    %v6011 = vsub.s32 0, %v6010
    %v6012 = vrot.slane %v6007, %v6011
    %v6013 = vlaneseq
    %v6014 = vshrl.u32 %v6013, 7
    %v6015 = vsub.s32 1, %v6014
    %v6016 = vrot.slane %v6007, %v6015
    %6017 = vrot.lane.b32.xlu0 %v3429, 83
    %v6018 = vpop.permute.xlu0 %6017
    %6019 = vrot.lane.b32.xlu0 %v3431, 83
    %v6020 = vpop.permute.xlu0 %6019
    %v6021 = vrot.slane %v6018, 1
    %v6022 = vrot.slane %v6020, 1
    %v6023 = vrot.slane %v6018, 2
    %v6024 = vrot.slane %v6020, 2
    %v6025 = vsel %vm772, %v6021, %v6023
    %v6026 = vsel %vm772, %v6022, %v6024
    %v6029 = vcombine.low %v6012, %v6016
    %v6031 = vunpack.c.l.s4 1966171168
    %v6032 = vunpack.c.0.s8 %v6031
    %v6033 = vlaneseq
    %v6034 = vshrl.u32 %v6033, 7
    %v6035 = vsub.s32 %v6032, %v6034
    %v6036 = vrot.slane %v6029, %v6035
    %v6037 = vcombine.high %v6036, %v6036
    %v6039 = vunpack.c.l.s4 1966171168
    %v6040 = vunpack.c.0.s8 %v6039
    %v6041 = vlaneseq
    %v6042 = vshrl.u32 %v6041, 7
    %v6043 = vsub.s32 %v6040, %v6042
    %v6044 = vrot.slane %v6036, %v6043
    %v6046 = vunpack.c.l.s4 1966171168
    %v6047 = vunpack.c.0.s8 %v6046
    %v6048 = vlaneseq
    %v6049 = vshrl.u32 %v6048, 7
    %v6050 = vsub.s32 %v6047, %v6049
    %v6051 = vrot.slane %v6037, %v6050
    %v6054 = vmul.f32 %v6025, %v6044
    %v6055 = vmul.f32 %v6026, %v6051
    %6058 = vrot.lane.b32.xlu0 %v6054, 77
    %v6059 = vpop.permute.xlu0 %6058
    %6060 = vrot.lane.b32.xlu0 %v6055, 77
    %v6061 = vpop.permute.xlu0 %6060
    %v6062 = vrot.slane %v6059, 7
    %v6063 = vrot.slane %v6061, 7
    %v6064 = vsel %vm413, %v6062, %v6059
    %v6065 = vsel %vm413, %v6063, %v6061
    %v6068 = vadd.f32 %v6004, %v6064
    %v6069 = vadd.f32 %v6005, %v6065
    %s6070 = scalar_lea.vmem [#allocation8], 180
    %v6071 = vld [vmem:[%s6070] ss:$8 sm:$0x3]
    %v6073 = vlaneseq
    %v6074 = vshrl.u32 %v6073, 7
    %v6075 = vsub.s32 0, %v6074
    %v6076 = vrot.slane %v6071, %v6075
    %v6077 = vlaneseq
    %v6078 = vshrl.u32 %v6077, 7
    %v6079 = vsub.s32 1, %v6078
    %v6080 = vrot.slane %v6071, %v6079
    %6081 = vrot.lane.b32.xlu0 %v3429, 82
    %v6082 = vpop.permute.xlu0 %6081
    %6083 = vrot.lane.b32.xlu0 %v3431, 82
    %v6084 = vpop.permute.xlu0 %6083
    %v6085 = vrot.slane %v6082, 1
    %v6086 = vrot.slane %v6084, 1
    %v6087 = vrot.slane %v6082, 2
    %v6088 = vrot.slane %v6084, 2
    %v6089 = vsel %vm710, %v6085, %v6087
    %v6090 = vsel %vm710, %v6086, %v6088
    %v6093 = vcombine.low %v6076, %v6080
    %v6095 = vunpack.c.l.s4 1966171168
    %v6096 = vunpack.c.0.s8 %v6095
    %v6097 = vlaneseq
    %v6098 = vshrl.u32 %v6097, 7
    %v6099 = vsub.s32 %v6096, %v6098
    %v6100 = vrot.slane %v6093, %v6099
    %v6101 = vcombine.high %v6100, %v6100
    %v6103 = vunpack.c.l.s4 1966171168
    %v6104 = vunpack.c.0.s8 %v6103
    %v6105 = vlaneseq
    %v6106 = vshrl.u32 %v6105, 7
    %v6107 = vsub.s32 %v6104, %v6106
    %v6108 = vrot.slane %v6100, %v6107
    %v6110 = vunpack.c.l.s4 1966171168
    %v6111 = vunpack.c.0.s8 %v6110
    %v6112 = vlaneseq
    %v6113 = vshrl.u32 %v6112, 7
    %v6114 = vsub.s32 %v6111, %v6113
    %v6115 = vrot.slane %v6101, %v6114
    %v6118 = vmul.f32 %v6089, %v6108
    %v6119 = vmul.f32 %v6090, %v6115
    %6122 = vrot.lane.b32.xlu0 %v6118, 77
    %v6123 = vpop.permute.xlu0 %6122
    %6124 = vrot.lane.b32.xlu0 %v6119, 77
    %v6125 = vpop.permute.xlu0 %6124
    %v6126 = vrot.slane %v6123, 7
    %v6127 = vrot.slane %v6125, 7
    %v6128 = vsel %vm413, %v6126, %v6123
    %v6129 = vsel %vm413, %v6127, %v6125
    %v6132 = vadd.f32 %v6068, %v6128
    %v6133 = vadd.f32 %v6069, %v6129
    %s6134 = scalar_lea.vmem [#allocation8], 181
    %v6135 = vld [vmem:[%s6134] ss:$8 sm:$0x3]
    %v6137 = vlaneseq
    %v6138 = vshrl.u32 %v6137, 7
    %v6139 = vsub.s32 0, %v6138
    %v6140 = vrot.slane %v6135, %v6139
    %v6141 = vlaneseq
    %v6142 = vshrl.u32 %v6141, 7
    %v6143 = vsub.s32 1, %v6142
    %v6144 = vrot.slane %v6135, %v6143
    %6145 = vrot.lane.b32.xlu0 %v3429, 81
    %v6146 = vpop.permute.xlu0 %6145
    %6147 = vrot.lane.b32.xlu0 %v3431, 81
    %v6148 = vpop.permute.xlu0 %6147
    %v6149 = vrot.slane %v6146, 1
    %v6150 = vrot.slane %v6148, 1
    %v6151 = vrot.slane %v6146, 2
    %v6152 = vrot.slane %v6148, 2
    %v6153 = vsel %vm648, %v6149, %v6151
    %v6154 = vsel %vm648, %v6150, %v6152
    %v6157 = vcombine.low %v6140, %v6144
    %v6159 = vunpack.c.l.s4 1966171168
    %v6160 = vunpack.c.0.s8 %v6159
    %v6161 = vlaneseq
    %v6162 = vshrl.u32 %v6161, 7
    %v6163 = vsub.s32 %v6160, %v6162
    %v6164 = vrot.slane %v6157, %v6163
    %v6165 = vcombine.high %v6164, %v6164
    %v6167 = vunpack.c.l.s4 1966171168
    %v6168 = vunpack.c.0.s8 %v6167
    %v6169 = vlaneseq
    %v6170 = vshrl.u32 %v6169, 7
    %v6171 = vsub.s32 %v6168, %v6170
    %v6172 = vrot.slane %v6164, %v6171
    %v6174 = vunpack.c.l.s4 1966171168
    %v6175 = vunpack.c.0.s8 %v6174
    %v6176 = vlaneseq
    %v6177 = vshrl.u32 %v6176, 7
    %v6178 = vsub.s32 %v6175, %v6177
    %v6179 = vrot.slane %v6165, %v6178
    %v6182 = vmul.f32 %v6153, %v6172
    %v6183 = vmul.f32 %v6154, %v6179
    %6186 = vrot.lane.b32.xlu0 %v6182, 77
    %v6187 = vpop.permute.xlu0 %6186
    %6188 = vrot.lane.b32.xlu0 %v6183, 77
    %v6189 = vpop.permute.xlu0 %6188
    %v6190 = vrot.slane %v6187, 7
    %v6191 = vrot.slane %v6189, 7
    %v6192 = vsel %vm413, %v6190, %v6187
    %v6193 = vsel %vm413, %v6191, %v6189
    %v6196 = vadd.f32 %v6132, %v6192
    %v6197 = vadd.f32 %v6133, %v6193
    %s6198 = scalar_lea.vmem [#allocation8], 182
    %v6199 = vld [vmem:[%s6198] ss:$8 sm:$0x3]
    %v6201 = vlaneseq
    %v6202 = vshrl.u32 %v6201, 7
    %v6203 = vsub.s32 0, %v6202
    %v6204 = vrot.slane %v6199, %v6203
    %v6205 = vlaneseq
    %v6206 = vshrl.u32 %v6205, 7
    %v6207 = vsub.s32 1, %v6206
    %v6208 = vrot.slane %v6199, %v6207
    %6209 = vrot.lane.b32.xlu0 %v3429, 80
    %v6210 = vpop.permute.xlu0 %6209
    %6211 = vrot.lane.b32.xlu0 %v3431, 80
    %v6212 = vpop.permute.xlu0 %6211
    %v6213 = vrot.slane %v6210, 1
    %v6214 = vrot.slane %v6212, 1
    %v6215 = vrot.slane %v6210, 2
    %v6216 = vrot.slane %v6212, 2
    %v6217 = vsel %vm586, %v6213, %v6215
    %v6218 = vsel %vm586, %v6214, %v6216
    %v6221 = vcombine.low %v6204, %v6208
    %v6223 = vunpack.c.l.s4 1966171168
    %v6224 = vunpack.c.0.s8 %v6223
    %v6225 = vlaneseq
    %v6226 = vshrl.u32 %v6225, 7
    %v6227 = vsub.s32 %v6224, %v6226
    %v6228 = vrot.slane %v6221, %v6227
    %v6229 = vcombine.high %v6228, %v6228
    %v6231 = vunpack.c.l.s4 1966171168
    %v6232 = vunpack.c.0.s8 %v6231
    %v6233 = vlaneseq
    %v6234 = vshrl.u32 %v6233, 7
    %v6235 = vsub.s32 %v6232, %v6234
    %v6236 = vrot.slane %v6228, %v6235
    %v6238 = vunpack.c.l.s4 1966171168
    %v6239 = vunpack.c.0.s8 %v6238
    %v6240 = vlaneseq
    %v6241 = vshrl.u32 %v6240, 7
    %v6242 = vsub.s32 %v6239, %v6241
    %v6243 = vrot.slane %v6229, %v6242
    %v6246 = vmul.f32 %v6217, %v6236
    %v6247 = vmul.f32 %v6218, %v6243
    %6250 = vrot.lane.b32.xlu0 %v6246, 77
    %v6251 = vpop.permute.xlu0 %6250
    %6252 = vrot.lane.b32.xlu0 %v6247, 77
    %v6253 = vpop.permute.xlu0 %6252
    %v6254 = vrot.slane %v6251, 7
    %v6255 = vrot.slane %v6253, 7
    %v6256 = vsel %vm413, %v6254, %v6251
    %v6257 = vsel %vm413, %v6255, %v6253
    %v6260 = vadd.f32 %v6196, %v6256
    %v6261 = vadd.f32 %v6197, %v6257
    %s6262 = scalar_lea.vmem [#allocation8], 183
    %v6263 = vld [vmem:[%s6262] ss:$8 sm:$0x3]
    %v6265 = vlaneseq
    %v6266 = vshrl.u32 %v6265, 7
    %v6267 = vsub.s32 0, %v6266
    %v6268 = vrot.slane %v6263, %v6267
    %v6269 = vlaneseq
    %v6270 = vshrl.u32 %v6269, 7
    %v6271 = vsub.s32 1, %v6270
    %v6272 = vrot.slane %v6263, %v6271
    %6273 = vrot.lane.b32.xlu0 %v3429, 79
    %v6274 = vpop.permute.xlu0 %6273
    %6275 = vrot.lane.b32.xlu0 %v3431, 79
    %v6276 = vpop.permute.xlu0 %6275
    %v6277 = vrot.slane %v6274, 1
    %v6278 = vrot.slane %v6276, 1
    %v6279 = vrot.slane %v6274, 2
    %v6280 = vrot.slane %v6276, 2
    %v6281 = vsel %vm524, %v6277, %v6279
    %v6282 = vsel %vm524, %v6278, %v6280
    %v6285 = vcombine.low %v6268, %v6272
    %v6287 = vunpack.c.l.s4 1966171168
    %v6288 = vunpack.c.0.s8 %v6287
    %v6289 = vlaneseq
    %v6290 = vshrl.u32 %v6289, 7
    %v6291 = vsub.s32 %v6288, %v6290
    %v6292 = vrot.slane %v6285, %v6291
    %v6293 = vcombine.high %v6292, %v6292
    %v6295 = vunpack.c.l.s4 1966171168
    %v6296 = vunpack.c.0.s8 %v6295
    %v6297 = vlaneseq
    %v6298 = vshrl.u32 %v6297, 7
    %v6299 = vsub.s32 %v6296, %v6298
    %v6300 = vrot.slane %v6292, %v6299
    %v6302 = vunpack.c.l.s4 1966171168
    %v6303 = vunpack.c.0.s8 %v6302
    %v6304 = vlaneseq
    %v6305 = vshrl.u32 %v6304, 7
    %v6306 = vsub.s32 %v6303, %v6305
    %v6307 = vrot.slane %v6293, %v6306
    %v6310 = vmul.f32 %v6281, %v6300
    %v6311 = vmul.f32 %v6282, %v6307
    %6314 = vrot.lane.b32.xlu0 %v6310, 77
    %v6315 = vpop.permute.xlu0 %6314
    %6316 = vrot.lane.b32.xlu0 %v6311, 77
    %v6317 = vpop.permute.xlu0 %6316
    %v6318 = vrot.slane %v6315, 7
    %v6319 = vrot.slane %v6317, 7
    %v6320 = vsel %vm413, %v6318, %v6315
    %v6321 = vsel %vm413, %v6319, %v6317
    %v6324 = vadd.f32 %v6260, %v6320
    %v6325 = vadd.f32 %v6261, %v6321
    %s6326 = scalar_lea.vmem [#allocation8], 192
    %v6327 = vld [vmem:[%s6326] ss:$8 sm:$0x3]
    %v6329 = vlaneseq
    %v6330 = vshrl.u32 %v6329, 7
    %v6331 = vsub.s32 0, %v6330
    %v6332 = vrot.slane %v6327, %v6331
    %v6333 = vlaneseq
    %v6334 = vshrl.u32 %v6333, 7
    %v6335 = vsub.s32 1, %v6334
    %v6336 = vrot.slane %v6327, %v6335
    %6337 = vrot.lane.b32.xlu0 %v3429, 78
    %v6338 = vpop.permute.xlu0 %6337
    %6339 = vrot.lane.b32.xlu0 %v3431, 78
    %v6340 = vpop.permute.xlu0 %6339
    %v6341 = vrot.slane %v6338, 1
    %v6342 = vrot.slane %v6340, 1
    %v6343 = vrot.slane %v6338, 2
    %v6344 = vrot.slane %v6340, 2
    %v6345 = vsel %vm462, %v6341, %v6343
    %v6346 = vsel %vm462, %v6342, %v6344
    %v6349 = vcombine.low %v6332, %v6336
    %v6351 = vunpack.c.l.s4 1966171168
    %v6352 = vunpack.c.0.s8 %v6351
    %v6353 = vlaneseq
    %v6354 = vshrl.u32 %v6353, 7
    %v6355 = vsub.s32 %v6352, %v6354
    %v6356 = vrot.slane %v6349, %v6355
    %v6357 = vcombine.high %v6356, %v6356
    %v6359 = vunpack.c.l.s4 1966171168
    %v6360 = vunpack.c.0.s8 %v6359
    %v6361 = vlaneseq
    %v6362 = vshrl.u32 %v6361, 7
    %v6363 = vsub.s32 %v6360, %v6362
    %v6364 = vrot.slane %v6356, %v6363
    %v6366 = vunpack.c.l.s4 1966171168
    %v6367 = vunpack.c.0.s8 %v6366
    %v6368 = vlaneseq
    %v6369 = vshrl.u32 %v6368, 7
    %v6370 = vsub.s32 %v6367, %v6369
    %v6371 = vrot.slane %v6357, %v6370
    %v6374 = vmul.f32 %v6345, %v6364
    %v6375 = vmul.f32 %v6346, %v6371
    %6378 = vrot.lane.b32.xlu0 %v6374, 77
    %v6379 = vpop.permute.xlu0 %6378
    %6380 = vrot.lane.b32.xlu0 %v6375, 77
    %v6381 = vpop.permute.xlu0 %6380
    %v6382 = vrot.slane %v6379, 7
    %v6383 = vrot.slane %v6381, 7
    %v6384 = vsel %vm413, %v6382, %v6379
    %v6385 = vsel %vm413, %v6383, %v6381
    %v6388 = vadd.f32 %v6324, %v6384
    %v6389 = vadd.f32 %v6325, %v6385
    %s6390 = scalar_lea.vmem [#allocation8], 193
    %v6391 = vld [vmem:[%s6390] ss:$8 sm:$0x3]
    %v6393 = vlaneseq
    %v6394 = vshrl.u32 %v6393, 7
    %v6395 = vsub.s32 0, %v6394
    %v6396 = vrot.slane %v6391, %v6395
    %v6397 = vlaneseq
    %v6398 = vshrl.u32 %v6397, 7
    %v6399 = vsub.s32 1, %v6398
    %v6400 = vrot.slane %v6391, %v6399
    %6401 = vrot.lane.b32.xlu0 %v3429, 77
    %v6402 = vpop.permute.xlu0 %6401
    %6403 = vrot.lane.b32.xlu0 %v3431, 77
    %v6404 = vpop.permute.xlu0 %6403
    %v6405 = vrot.slane %v6402, 1
    %v6406 = vrot.slane %v6404, 1
    %v6407 = vrot.slane %v6402, 2
    %v6408 = vrot.slane %v6404, 2
    %v6409 = vsel %vm413, %v6405, %v6407
    %v6410 = vsel %vm413, %v6406, %v6408
    %v6413 = vcombine.low %v6396, %v6400
    %v6415 = vunpack.c.l.s4 1966171168
    %v6416 = vunpack.c.0.s8 %v6415
    %v6417 = vlaneseq
    %v6418 = vshrl.u32 %v6417, 7
    %v6419 = vsub.s32 %v6416, %v6418
    %v6420 = vrot.slane %v6413, %v6419
    %v6421 = vcombine.high %v6420, %v6420
    %v6423 = vunpack.c.l.s4 1966171168
    %v6424 = vunpack.c.0.s8 %v6423
    %v6425 = vlaneseq
    %v6426 = vshrl.u32 %v6425, 7
    %v6427 = vsub.s32 %v6424, %v6426
    %v6428 = vrot.slane %v6420, %v6427
    %v6430 = vunpack.c.l.s4 1966171168
    %v6431 = vunpack.c.0.s8 %v6430
    %v6432 = vlaneseq
    %v6433 = vshrl.u32 %v6432, 7
    %v6434 = vsub.s32 %v6431, %v6433
    %v6435 = vrot.slane %v6421, %v6434
    %v6438 = vmul.f32 %v6409, %v6428
    %v6439 = vmul.f32 %v6410, %v6435
    %6442 = vrot.lane.b32.xlu0 %v6438, 77
    %v6443 = vpop.permute.xlu0 %6442
    %6444 = vrot.lane.b32.xlu0 %v6439, 77
    %v6445 = vpop.permute.xlu0 %6444
    %v6446 = vrot.slane %v6443, 7
    %v6447 = vrot.slane %v6445, 7
    %v6448 = vsel %vm413, %v6446, %v6443
    %v6449 = vsel %vm413, %v6447, %v6445
    %v6452 = vadd.f32 %v6388, %v6448
    %v6453 = vadd.f32 %v6389, %v6449
    %v6454 = vxor.u32 %v6452, 2147483648
    %v6455 = vxor.u32 %v6453, 2147483648
    %v6456 = vmul.f32 %v6454, 1.442695
    %v6457 = vpow.pop %v6456
    %v6458 = vmul.f32 %v6455, 1.442695
    %v6459 = vpow.pop %v6458
    %v6460 = vadd.f32 %v6457, 1.0
    %v6461 = vadd.f32 %v6459, 1.0
    %v6462 = vrcp.pop %v6460
    %v6463 = vmul.f32 1.0, %v6462
    %v6464 = vrcp.pop %v6461
    %v6465 = vmul.f32 1.0, %v6464
    %v6468 = vlaneseq
    %v6469 = vshrl.u32 %v6468, 7
    %v6470 = vsub.s32 0, %v6469
    %v6471 = vrot.slane %v6463, %v6470
    %v6472 = vlaneseq
    %v6473 = vshrl.u32 %v6472, 7
    %v6474 = vsub.s32 1, %v6473
    %v6475 = vrot.slane %v6463, %v6474
    %v6476 = vlaneseq
    %v6477 = vshrl.u32 %v6476, 7
    %v6478 = vsub.s32 2, %v6477
    %v6479 = vrot.slane %v6463, %v6478
    %v6480 = vlaneseq
    %v6481 = vshrl.u32 %v6480, 7
    %v6482 = vsub.s32 0, %v6481
    %v6483 = vrot.slane %v6465, %v6482
    %v6484 = vlaneseq
    %v6485 = vshrl.u32 %v6484, 7
    %v6486 = vsub.s32 1, %v6485
    %v6487 = vrot.slane %v6465, %v6486
    %v6488 = vlaneseq
    %v6489 = vshrl.u32 %v6488, 7
    %v6490 = vsub.s32 2, %v6489
    %v6491 = vrot.slane %v6465, %v6490
    %v6492 = vcombine.low %v6471, %v6475
    %v6493 = vcombine.low %v6483, %v6487
    %6494 = vrot.lane.b32.xlu0 %v6492, 51
    %v6495 = vpop.permute.xlu0 %6494
    %6496 = vrot.lane.b32.xlu0 %v6479, 51
    %v6497 = vpop.permute.xlu0 %6496
    %6498 = vrot.lane.b32.xlu0 %v6493, 51
    %v6499 = vpop.permute.xlu0 %6498
    %6500 = vrot.lane.b32.xlu0 %v6491, 51
    %v6501 = vpop.permute.xlu0 %6500
    %v6502 = vrot.slane %v6495, 4
    %v6503 = vrot.slane %v6497, 4
    %v6504 = vrot.slane %v6499, 4
    %v6505 = vrot.slane %v6501, 4
    %v6506 = vsel %vm65, %v6502, %v6503
    %vm6507 = vcmask 416768
    %v6508 = vsel %vm6507, %v6495, %v6506
    %v6509 = vsel %vm65, %v6504, %v6505
    %v6510 = vsel %vm6507, %v6499, %v6509
    %v6513 = vmul.f32 %v214, %v6508
    %v6514 = vmul.f32 %v215, %v6510
    %6515 = vst [vmem:[#allocation9] sm:$0xff] %v6513
    %6516 = vst [vmem:[#allocation9 + $0x8] sm:$0xff] %v6514
    // Predicated region
    $region30: #{tpu_custom_call.1} parent=1 // pred_check
      _
    $region31: #{tpu_custom_call.1} parent=1 // pred_check_branch
      %6518 = sbr.rel (0) target = $region33
    $region32: #{tpu_custom_call.1} parent=1 // pred_region
      %s6520 = ssub.s32 256, 256
      %6521 = vsyncadd [#allocation5], %s6520
      %s6522 = sshll.u32 [#allocation9], 4
      %s6523 = int_to_ptr.vmem [resolvable:$true] %s6522
      %6528 = dma.vmem_to_hbm [thread:$0]  %s6523, 256, %s4, [#allocation5], 128, 128, 8
    $region33: #{tpu_custom_call.1} parent=1 // pred_fallthru
      _
    // Predicated region
    $region34: #{tpu_custom_call.1} parent=1 // pred_check
      _
    $region35: #{tpu_custom_call.1} parent=1 // pred_check_branch
      %6530 = sbr.rel (0) target = $region37
    $region36: #{tpu_custom_call.1} parent=1 // pred_region
      %6531 = dma.done [#allocation5], 256
    $region37: #{tpu_custom_call.1} parent=1 // pred_fallthru
      _
    %6532 = vsyncpa [#allocation4], 1
    %6533 = vsyncpa [#allocation7], 1
    %6534 = vsyncpa [#allocation5], 1

</llo_original>
